<compile_context>
chip_gen: v6e
topology: v6e:2x2x1
jax: 0.10.0
libtpu: 0.0.40
codegen_flags: <defaults>
</compile_context>

<pallas_src>
import functools

import jax
import jax.numpy as jnp
from jax import lax
from jax.experimental import pallas as pl
from jax.experimental.pallas import tpu as pltpu

EPS = 1e-5
EXPANSION = 4
LANES = 128          # lane-dense channel padding
MAX_TILE_M = 512     # double-buffered tiles stay well under 32 MiB VMEM on v5e/v6e/v7x


# ---------------------------------------------------------------------------
# small helpers
# ---------------------------------------------------------------------------
def _round_up(x, m):
    return ((x + m - 1) // m) * m


def _pad1d(v, c):
    return jnp.pad(v.astype(jnp.float32), (0, c - v.shape[0]))


def _pad2d(w, r, c):
    return jnp.pad(w.astype(jnp.float32),
                   ((0, r - w.shape[0]), (0, c - w.shape[1])))


def _fold_bn(s1, s2, m, gamma_p, beta_p):
    """Fold batch stats (sum, sumsq over m rows) + gamma/beta into y*scale+shift."""
    mean = s1 / m
    var = jnp.maximum(s2 / m - mean * mean, 0.0)   # biased variance (PyTorch BN train)
    scale = gamma_p * lax.rsqrt(var + EPS)
    shift = beta_p - mean * scale
    return scale, shift


# ---------------------------------------------------------------------------
# Pallas kernels
# ---------------------------------------------------------------------------
def _matmul_stats_kernel(x_ref, w_ref, scale_ref, shift_ref, y_ref, stats_ref, *,
                         apply_affine, apply_relu, mask_rows, m_true, tile_m):
    """y = [relu](x*scale+shift) @ w (bf16 in, f32 accumulate) plus per-tile
    channel sum / sum-of-squares of y.  Rows >= m_true are zeroed so they do
    not pollute the batch statistics."""
    x = x_ref[...]
    if apply_affine or apply_relu or mask_rows:
        xf = x.astype(jnp.float32)               # elementwise math in f32 (v5e-safe)
        if apply_affine:
            xf = xf * scale_ref[...] + shift_ref[...]
        if apply_relu:
            xf = jnp.maximum(xf, 0.0)
        if mask_rows:
            row = (pl.program_id(0) * tile_m
                   + lax.broadcasted_iota(jnp.int32, (tile_m, 1), 0))
            xf = jnp.where(row < m_true, xf, 0.0)
        x = xf.astype(jnp.bfloat16)
    y = jnp.dot(x, w_ref[...], preferred_element_type=jnp.float32)
    y_ref[...] = y.astype(y_ref.dtype)
    s1 = jnp.sum(y, axis=0, keepdims=True)
    s2 = jnp.sum(y * y, axis=0, keepdims=True)
    pad = jnp.zeros((6, y.shape[1]), jnp.float32)
    stats_ref[...] = jnp.concatenate([s1, s2, pad], axis=0)[None]


def _bn_add_relu_kernel(y_ref, s_ref, sy_ref, hy_ref, ss_ref, hs_ref, o_ref):
    """out = relu(bn3(y) + bn_s(s)) with BN folded into per-channel scale/shift."""
    r = y_ref[...].astype(jnp.float32) * sy_ref[...] + hy_ref[...]
    s = s_ref[...].astype(jnp.float32) * ss_ref[...] + hs_ref[...]
    o_ref[...] = jnp.maximum(r + s, 0.0)


# ---------------------------------------------------------------------------
# pallas_call wrappers
# ---------------------------------------------------------------------------
def _pick_tile(m):
    return MAX_TILE_M if m >= MAX_TILE_M else max(8, _round_up(m, 8))


def matmul_stats(x2d, w2d, scale, shift, *, apply_affine, apply_relu, m_valid=None):
    """x2d:(M,K) bf16, w2d:(K,Cp) bf16, scale/shift:(K,) f32.
    Returns y_raw:(M_pad,Cp) bf16 and channel (sum, sumsq) over first m_valid rows."""
    m, k = x2d.shape
    cp = w2d.shape[1]
    m_true = m if m_valid is None else m_valid
    tile_m = _pick_tile(m)
    m_pad = _round_up(m, tile_m)
    if m_pad != m:
        x2d = jnp.pad(x2d, ((0, m_pad - m), (0, 0)))
    n_tiles = m_pad // tile_m

    kernel = functools.partial(
        _matmul_stats_kernel,
        apply_affine=apply_affine, apply_relu=apply_relu,
        mask_rows=(m_pad != m_true), m_true=m_true, tile_m=tile_m)

    y_raw, partial = pl.pallas_call(
        kernel,
        grid=(n_tiles,),
        in_specs=[
            pl.BlockSpec((tile_m, k), lambda i: (i, 0)),
            pl.BlockSpec((k, cp), lambda i: (0, 0)),
            pl.BlockSpec((1, k), lambda i: (0, 0)),
            pl.BlockSpec((1, k), lambda i: (0, 0)),
        ],
        out_specs=(
            pl.BlockSpec((tile_m, cp), lambda i: (i, 0)),
            pl.BlockSpec((1, 8, cp), lambda i: (i, 0, 0)),
        ),
        out_shape=(
            jax.ShapeDtypeStruct((m_pad, cp), jnp.bfloat16),
            jax.ShapeDtypeStruct((n_tiles, 8, cp), jnp.float32),
        ),
        compiler_params=pltpu.CompilerParams(
            dimension_semantics=("parallel",),
            vmem_limit_bytes=32 * 1024 * 1024),
    )(x2d, w2d,
      scale.reshape(1, k).astype(jnp.float32),
      shift.reshape(1, k).astype(jnp.float32))

    s1 = jnp.sum(partial[:, 0, :], axis=0)
    s2 = jnp.sum(partial[:, 1, :], axis=0)
    return y_raw, s1, s2


def bn_add_relu(y_raw, s_raw, scale_y, shift_y, scale_s, shift_s):
    """Fused BN3 + shortcut-BN + residual add + final ReLU, tiled over rows."""
    m, cp = y_raw.shape
    tile_m = _pick_tile(m)
    m_pad = _round_up(m, tile_m)
    if m_pad != m:
        y_raw = jnp.pad(y_raw, ((0, m_pad - m), (0, 0)))
        s_raw = jnp.pad(s_raw, ((0, m_pad - m), (0, 0)))
    n_tiles = m_pad // tile_m

    return pl.pallas_call(
        _bn_add_relu_kernel,
        grid=(n_tiles,),
        in_specs=[
            pl.BlockSpec((tile_m, cp), lambda i: (i, 0)),
            pl.BlockSpec((tile_m, cp), lambda i: (i, 0)),
            pl.BlockSpec((1, cp), lambda i: (0, 0)),
            pl.BlockSpec((1, cp), lambda i: (0, 0)),
            pl.BlockSpec((1, cp), lambda i: (0, 0)),
            pl.BlockSpec((1, cp), lambda i: (0, 0)),
        ],
        out_specs=pl.BlockSpec((tile_m, cp), lambda i: (i, 0)),
        out_shape=jax.ShapeDtypeStruct((m_pad, cp), jnp.float32),
        compiler_params=pltpu.CompilerParams(
            dimension_semantics=("parallel",),
            vmem_limit_bytes=32 * 1024 * 1024),
    )(y_raw, s_raw,
      scale_y.reshape(1, cp), shift_y.reshape(1, cp),
      scale_s.reshape(1, cp), shift_s.reshape(1, cp))


# ---------------------------------------------------------------------------
# plain-JAX glue (layout plumbing only)
# ---------------------------------------------------------------------------
def _build_taps(z, stride):
    """z:(N,H,W,C) -> taps:(N*Ho*Wo, 9*C) in (kh,kw,C) order, pad=1, given stride."""
    zp = jnp.pad(z, ((0, 0), (1, 1), (1, 1), (0, 0)))
    n, hp, wp, c = zp.shape
    ho = (hp - 3) // stride + 1
    wo = (wp - 3) // stride + 1
    taps = []
    for i in range(3):
        for j in range(3):
            taps.append(zp[:, i:i + stride * (ho - 1) + 1:stride,
                              j:j + stride * (wo - 1) + 1:stride, :])
    cols = jnp.concatenate(taps, axis=-1)           # (N, Ho, Wo, 9*C)
    return cols.reshape(n * ho * wo, 9 * c), ho, wo


def init_bottleneck_params(key, in_channels, out_channels, stride):
    """Deterministic parameter init matching the PyTorch module's shapes."""
    cmid = out_channels
    cout = out_channels * EXPANSION
    ks = jax.random.split(key, 12)

    def w(k, shape, fan_in):
        return jax.random.normal(k, shape, jnp.float32) * (1.0 / jnp.sqrt(fan_in))

    params = {
        "w1": w(ks[0], (in_channels, cmid), in_channels),           # 1x1 conv
        "g1": 1.0 + 0.1 * jax.random.normal(ks[1], (cmid,), jnp.float32),
        "b1": 0.1 * jax.random.normal(ks[2], (cmid,), jnp.float32),
        "w3": w(ks[3], (3, 3, cmid, cmid), 9 * cmid),               # 3x3 conv (kh,kw,Cin,Cout)
        "g2": 1.0 + 0.1 * jax.random.normal(ks[4], (cmid,), jnp.float32),
        "b2": 0.1 * jax.random.normal(ks[5], (cmid,), jnp.float32),
        "w2": w(ks[6], (cmid, cout), cmid),                         # 1x1 expand conv
        "g3": 1.0 + 0.1 * jax.random.normal(ks[7], (cout,), jnp.float32),
        "b3": 0.1 * jax.random.normal(ks[8], (cout,), jnp.float32),
    }
    if stride != 1 or in_channels != cout:
        params["ws"] = w(ks[9], (in_channels, cout), in_channels)   # shortcut 1x1 conv
        params["gs"] = 1.0 + 0.1 * jax.random.normal(ks[10], (cout,), jnp.float32)
        params["bs"] = 0.1 * jax.random.normal(ks[11], (cout,), jnp.float32)
    return params


def bottleneck_forward(x_nchw, params, stride):
    """Forward of the BottleNeck block.  Input/output are NCHW (PyTorch convention)."""
    x = jnp.transpose(x_nchw, (0, 2, 3, 1)).astype(jnp.float32)     # -> NHWC
    n, h, w_, cin = x.shape
    cmid = params["w1"].shape[1]
    cout = params["w2"].shape[1]
    cin_p = _round_up(cin, LANES)
    cmid_p = _round_up(cmid, LANES)
    cout_p = _round_up(cout, LANES)

    # lane-dense (128-padded) bf16 weights; f32 BN params (padded gamma/beta = 0)
    w1 = _pad2d(params["w1"], cin_p, cmid_p).astype(jnp.bfloat16)
    w3 = jnp.pad(params["w3"],
                 ((0, 0), (0, 0), (0, cmid_p - cmid), (0, cmid_p - cmid))
                 ).reshape(9 * cmid_p, cmid_p).astype(jnp.bfloat16)
    w2 = _pad2d(params["w2"], cmid_p, cout_p).astype(jnp.bfloat16)
    g1, b1 = _pad1d(params["g1"], cmid_p), _pad1d(params["b1"], cmid_p)
    g2, b2 = _pad1d(params["g2"], cmid_p), _pad1d(params["b2"], cmid_p)
    g3, b3 = _pad1d(params["g3"], cout_p), _pad1d(params["b3"], cout_p)

    ones_cin = jnp.ones((cin_p,), jnp.float32)
    zeros_cin = jnp.zeros((cin_p,), jnp.float32)

    m1 = n * h * w_
    x2d = jnp.pad(x, ((0, 0), (0, 0), (0, 0), (0, cin_p - cin))
                  ).reshape(m1, cin_p).astype(jnp.bfloat16)

    # ---- conv1 (1x1) + BN1 stats -------------------------------------------
    y1_raw, s1a, s1b = matmul_stats(x2d, w1, ones_cin, zeros_cin,
                                    apply_affine=False, apply_relu=False)
    scale1, shift1 = _fold_bn(s1a, s1b, m1, g1, b1)

    # ---- conv2 (3x3, stride, pad=1) on relu(bn1(y1)) -------------------------
    # bn1+relu is applied before the zero-pad so padded pixels contribute 0.
    # TODO(synk): the 9-tap gather still materializes a (M2, 9*Cmid) bf16 tensor
    # in HBM; full elimination needs in-kernel shifted/strided loads.
    z1 = jnp.maximum(y1_raw[:m1].astype(jnp.float32) * scale1 + shift1, 0.0)
    z1 = z1.astype(jnp.bfloat16).reshape(n, h, w_, cmid_p)
    cols, ho, wo = _build_taps(z1, stride)                 # (M2, 9*cmid_p) bf16
    m2 = n * ho * wo
    ones_9c = jnp.ones((9 * cmid_p,), jnp.float32)
    zeros_9c = jnp.zeros((9 * cmid_p,), jnp.float32)
    y2_raw, s2a, s2b = matmul_stats(cols, w3, ones_9c, zeros_9c,
                                    apply_affine=False, apply_relu=False)
    scale2, shift2 = _fold_bn(s2a, s2b, m2, g2, b2)

    # ---- conv3 (1x1 expansion); BN2+ReLU fused as the input affine -----------
    y3_raw, s3a, s3b = matmul_stats(y2_raw, w2, scale2, shift2,
                                    apply_affine=True, apply_relu=True,
                                    m_valid=m2)
    scale3, shift3 = _fold_bn(s3a, s3b, m2, g3, b3)

    # ---- shortcut branch ------------------------------------------------------
    if "ws" in params:
        ws = _pad2d(params["ws"], cin_p, cout_p).astype(jnp.bfloat16)
        gs, bs = _pad1d(params["gs"], cout_p), _pad1d(params["bs"], cout_p)
        xs = x[:, ::stride, ::stride, :]
        xs2d = jnp.pad(xs, ((0, 0), (0, 0), (0, 0), (0, cin_p - cin))
                       ).reshape(m2, cin_p).astype(jnp.bfloat16)
        s_raw, ssa, ssb = matmul_stats(xs2d, ws, ones_cin, zeros_cin,
                                       apply_affine=False, apply_relu=False)
        scale_s, shift_s = _fold_bn(ssa, ssb, m2, gs, bs)
    else:
        # identity shortcut (only when stride == 1 and cin == cout)
        s_raw = jnp.pad(x2d, ((0, y3_raw.shape[0] - m1), (0, cout_p - cin_p)))
        scale_s = jnp.ones((cout_p,), jnp.float32)
        shift_s = jnp.zeros((cout_p,), jnp.float32)

    # make both branches the same padded row count before the fused kernel
    mp = max(y3_raw.shape[0], s_raw.shape[0])
    if y3_raw.shape[0] != mp:
        y3_raw = jnp.pad(y3_raw, ((0, mp - y3_raw.shape[0]), (0, 0)))
    if s_raw.shape[0] != mp:
        s_raw = jnp.pad(s_raw, ((0, mp - s_raw.shape[0]), (0, 0)))

    # ---- BN3 + shortcut-BN + residual add + final ReLU (single fused kernel) --
    out_full = bn_add_relu(y3_raw, s_raw, scale3, shift3, scale_s, shift_s)
    out = out_full[:m2, :cout].reshape(n, ho, wo, cout)
    return jnp.transpose(out, (0, 3, 1, 2))                # -> NCHW


if __name__ == "__main__":
    # Small, deterministic example: batch=2, in_channels=4, out_channels=4,
    # stride=2, spatial=16  ->  output (2, 16, 8, 8) in NCHW.
    key = jax.random.PRNGKey(0)
    k_x, k_p = jax.random.split(key)

    N, C_IN, H, W = 2, 4, 16, 16
    OUT_CHANNELS, STRIDE = 4, 2

    x = jax.random.normal(k_x, (N, C_IN, H, W), jnp.float32)
    params = init_bottleneck_params(k_p, C_IN, OUT_CHANNELS, STRIDE)

    fwd = jax.jit(bottleneck_forward, static_argnums=2)
    out = jax.block_until_ready(fwd(x, params, STRIDE))

    expected_shape = (N, OUT_CHANNELS * EXPANSION, H // STRIDE, W // STRIDE)
    assert out.shape == expected_shape, (out.shape, expected_shape)
    assert bool(jnp.all(out >= 0.0)), "final ReLU violated"
    print("KERNEL_OK")
</pallas_src>

<mosaic_0001>
module attributes {stable_mosaic.version = 11 : i64} {
  func.func @_matmul_stats_kernel(%arg0: i32, %arg1: memref<512x128xbf16, #tpu.memory_space<vmem>>, %arg2: memref<128x128xbf16, #tpu.memory_space<vmem>>, %arg3: memref<1x128xf32, #tpu.memory_space<vmem>>, %arg4: memref<1x128xf32, #tpu.memory_space<vmem>>, %arg5: memref<512x128xbf16, #tpu.memory_space<vmem>>, %arg6: memref<1x8x128xf32, #tpu.memory_space<vmem>>) attributes {dimension_semantics = [#tpu.dimension_semantics<parallel>], iteration_bounds = array<i64: 1>, scalar_prefetch = 0 : i64, scratch_operands = 0 : i64, tpu.core_type = #tpu.core_type<tc>, window_params = [{transform_indices = @transform_0, window_bounds = array<i64: 512, 128>}, {pipeline_mode = #tpu.pipeline_mode<synchronous>, transform_indices = @transform_1, window_bounds = array<i64: 128, 128>}, {pipeline_mode = #tpu.pipeline_mode<synchronous>, transform_indices = @transform_2, window_bounds = array<i64: 1, 128>}, {pipeline_mode = #tpu.pipeline_mode<synchronous>, transform_indices = @transform_3, window_bounds = array<i64: 1, 128>}, {transform_indices = @transform_4, window_bounds = array<i64: 512, 128>}, {transform_indices = @transform_5, window_bounds = array<i64: 1, 8, 128>}]} {
    %c0 = arith.constant 0 : index
    %c0_0 = arith.constant 0 : index
    %0 = vector.load %arg1[%c0, %c0_0] : memref<512x128xbf16, #tpu.memory_space<vmem>>, vector<512x128xbf16>
    %c0_1 = arith.constant 0 : index
    %c0_2 = arith.constant 0 : index
    %1 = vector.load %arg2[%c0_1, %c0_2] : memref<128x128xbf16, #tpu.memory_space<vmem>>, vector<128x128xbf16>
    %cst = arith.constant dense<0.000000e+00> : vector<512x128xf32>
    %2 = tpu.matmul %0, %1, %cst {dimension_numbers = #tpu.dot_dimension_numbers<[1], [0], [0], [1], [0, 0, 1, 1], [], []>} : vector<512x128xbf16>, vector<128x128xbf16>, vector<512x128xf32> -> vector<512x128xf32>
    %3 = arith.truncf %2 : vector<512x128xf32> to vector<512x128xbf16>
    %c0_3 = arith.constant 0 : index
    %c0_4 = arith.constant 0 : index
    %4 = vector.load %arg5[%c0_3, %c0_4] : memref<512x128xbf16, #tpu.memory_space<vmem>>, vector<512x128xbf16>
    tpu.vector_store %arg5[%c0_3, %c0_4], %3 {strides = array<i32>} : memref<512x128xbf16, #tpu.memory_space<vmem>>, vector<512x128xbf16>,
    %cst_5 = arith.constant dense<0.000000e+00> : vector<128xf32>
    %5 = vector.multi_reduction <add>, %2, %cst_5 [0] : vector<512x128xf32> to vector<128xf32>
    %6 = vector.shape_cast %5 : vector<128xf32> to vector<1x128xf32>
    %7 = arith.mulf %2, %2 : vector<512x128xf32>
    %cst_6 = arith.constant dense<0.000000e+00> : vector<128xf32>
    %8 = vector.multi_reduction <add>, %7, %cst_6 [0] : vector<512x128xf32> to vector<128xf32>
    %9 = vector.shape_cast %8 : vector<128xf32> to vector<1x128xf32>
    %cst_7 = arith.constant 0.000000e+00 : f32
    %10 = vector.broadcast %cst_7 : f32 to vector<6x128xf32>
    %11 = tpu.concatenate %6, %9, %10 in 0 : vector<1x128xf32>, vector<1x128xf32>, vector<6x128xf32> -> vector<8x128xf32>
    %12 = vector.shape_cast %11 : vector<8x128xf32> to vector<1x8x128xf32>
    %c0_8 = arith.constant 0 : index
    %c0_9 = arith.constant 0 : index
    %c0_10 = arith.constant 0 : index
    %13 = vector.load %arg6[%c0_8, %c0_9, %c0_10] : memref<1x8x128xf32, #tpu.memory_space<vmem>>, vector<1x8x128xf32>
    tpu.vector_store %arg6[%c0_8, %c0_9, %c0_10], %12 {strides = array<i32>} : memref<1x8x128xf32, #tpu.memory_space<vmem>>, vector<1x8x128xf32>,
    return
  }
  func.func @transform_0(%arg0: i32) -> (i32, i32) {
    %c0_i32 = arith.constant 0 : i32
    %c0_i32_0 = arith.constant 0 : i32
    return %arg0, %c0_i32 : i32, i32
  }
  func.func @transform_1(%arg0: i32) -> (i32, i32) {
    %c0_i32 = arith.constant 0 : i32
    %c0_i32_0 = arith.constant 0 : i32
    %c0_i32_1 = arith.constant 0 : i32
    return %c0_i32, %c0_i32_0 : i32, i32
  }
  func.func @transform_2(%arg0: i32) -> (i32, i32) {
    %c0_i32 = arith.constant 0 : i32
    %c0_i32_0 = arith.constant 0 : i32
    %c0_i32_1 = arith.constant 0 : i32
    return %c0_i32, %c0_i32_0 : i32, i32
  }
  func.func @transform_3(%arg0: i32) -> (i32, i32) {
    %c0_i32 = arith.constant 0 : i32
    %c0_i32_0 = arith.constant 0 : i32
    %c0_i32_1 = arith.constant 0 : i32
    return %c0_i32, %c0_i32_0 : i32, i32
  }
  func.func @transform_4(%arg0: i32) -> (i32, i32) {
    %c0_i32 = arith.constant 0 : i32
    %c0_i32_0 = arith.constant 0 : i32
    return %arg0, %c0_i32 : i32, i32
  }
  func.func @transform_5(%arg0: i32) -> (i32, i32, i32) {
    %c0_i32 = arith.constant 0 : i32
    %c0_i32_0 = arith.constant 0 : i32
    %c0_i32_1 = arith.constant 0 : i32
    return %arg0, %c0_i32, %c0_i32_0 : i32, i32, i32
  }
}

module attributes {stable_mosaic.version = 11 : i64} {
  func.func @_matmul_stats_kernel(%arg0: i32, %arg1: memref<128x1152xbf16, #tpu.memory_space<vmem>>, %arg2: memref<1152x128xbf16, #tpu.memory_space<vmem>>, %arg3: memref<1x1152xf32, #tpu.memory_space<vmem>>, %arg4: memref<1x1152xf32, #tpu.memory_space<vmem>>, %arg5: memref<128x128xbf16, #tpu.memory_space<vmem>>, %arg6: memref<1x8x128xf32, #tpu.memory_space<vmem>>) attributes {dimension_semantics = [#tpu.dimension_semantics<parallel>], iteration_bounds = array<i64: 1>, scalar_prefetch = 0 : i64, scratch_operands = 0 : i64, tpu.core_type = #tpu.core_type<tc>, window_params = [{transform_indices = @transform_0, window_bounds = array<i64: 128, 1152>}, {pipeline_mode = #tpu.pipeline_mode<synchronous>, transform_indices = @transform_1, window_bounds = array<i64: 1152, 128>}, {pipeline_mode = #tpu.pipeline_mode<synchronous>, transform_indices = @transform_2, window_bounds = array<i64: 1, 1152>}, {pipeline_mode = #tpu.pipeline_mode<synchronous>, transform_indices = @transform_3, window_bounds = array<i64: 1, 1152>}, {transform_indices = @transform_4, window_bounds = array<i64: 128, 128>}, {transform_indices = @transform_5, window_bounds = array<i64: 1, 8, 128>}]} {
    %c0 = arith.constant 0 : index
    %c0_0 = arith.constant 0 : index
    %0 = vector.load %arg1[%c0, %c0_0] : memref<128x1152xbf16, #tpu.memory_space<vmem>>, vector<128x1152xbf16>
    %c0_1 = arith.constant 0 : index
    %c0_2 = arith.constant 0 : index
    %1 = vector.load %arg2[%c0_1, %c0_2] : memref<1152x128xbf16, #tpu.memory_space<vmem>>, vector<1152x128xbf16>
    %cst = arith.constant dense<0.000000e+00> : vector<128x128xf32>
    %2 = tpu.matmul %0, %1, %cst {dimension_numbers = #tpu.dot_dimension_numbers<[1], [0], [0], [1], [0, 0, 1, 1], [], []>} : vector<128x1152xbf16>, vector<1152x128xbf16>, vector<128x128xf32> -> vector<128x128xf32>
    %3 = arith.truncf %2 : vector<128x128xf32> to vector<128x128xbf16>
    %c0_3 = arith.constant 0 : index
    %c0_4 = arith.constant 0 : index
    %4 = vector.load %arg5[%c0_3, %c0_4] : memref<128x128xbf16, #tpu.memory_space<vmem>>, vector<128x128xbf16>
    tpu.vector_store %arg5[%c0_3, %c0_4], %3 {strides = array<i32>} : memref<128x128xbf16, #tpu.memory_space<vmem>>, vector<128x128xbf16>,
    %cst_5 = arith.constant dense<0.000000e+00> : vector<128xf32>
    %5 = vector.multi_reduction <add>, %2, %cst_5 [0] : vector<128x128xf32> to vector<128xf32>
    %6 = vector.shape_cast %5 : vector<128xf32> to vector<1x128xf32>
    %7 = arith.mulf %2, %2 : vector<128x128xf32>
    %cst_6 = arith.constant dense<0.000000e+00> : vector<128xf32>
    %8 = vector.multi_reduction <add>, %7, %cst_6 [0] : vector<128x128xf32> to vector<128xf32>
    %9 = vector.shape_cast %8 : vector<128xf32> to vector<1x128xf32>
    %cst_7 = arith.constant 0.000000e+00 : f32
    %10 = vector.broadcast %cst_7 : f32 to vector<6x128xf32>
    %11 = tpu.concatenate %6, %9, %10 in 0 : vector<1x128xf32>, vector<1x128xf32>, vector<6x128xf32> -> vector<8x128xf32>
    %12 = vector.shape_cast %11 : vector<8x128xf32> to vector<1x8x128xf32>
    %c0_8 = arith.constant 0 : index
    %c0_9 = arith.constant 0 : index
    %c0_10 = arith.constant 0 : index
    %13 = vector.load %arg6[%c0_8, %c0_9, %c0_10] : memref<1x8x128xf32, #tpu.memory_space<vmem>>, vector<1x8x128xf32>
    tpu.vector_store %arg6[%c0_8, %c0_9, %c0_10], %12 {strides = array<i32>} : memref<1x8x128xf32, #tpu.memory_space<vmem>>, vector<1x8x128xf32>,
    return
  }
  func.func @transform_0(%arg0: i32) -> (i32, i32) {
    %c0_i32 = arith.constant 0 : i32
    %c0_i32_0 = arith.constant 0 : i32
    return %arg0, %c0_i32 : i32, i32
  }
  func.func @transform_1(%arg0: i32) -> (i32, i32) {
    %c0_i32 = arith.constant 0 : i32
    %c0_i32_0 = arith.constant 0 : i32
    %c0_i32_1 = arith.constant 0 : i32
    return %c0_i32, %c0_i32_0 : i32, i32
  }
  func.func @transform_2(%arg0: i32) -> (i32, i32) {
    %c0_i32 = arith.constant 0 : i32
    %c0_i32_0 = arith.constant 0 : i32
    %c0_i32_1 = arith.constant 0 : i32
    return %c0_i32, %c0_i32_0 : i32, i32
  }
  func.func @transform_3(%arg0: i32) -> (i32, i32) {
    %c0_i32 = arith.constant 0 : i32
    %c0_i32_0 = arith.constant 0 : i32
    %c0_i32_1 = arith.constant 0 : i32
    return %c0_i32, %c0_i32_0 : i32, i32
  }
  func.func @transform_4(%arg0: i32) -> (i32, i32) {
    %c0_i32 = arith.constant 0 : i32
    %c0_i32_0 = arith.constant 0 : i32
    return %arg0, %c0_i32 : i32, i32
  }
  func.func @transform_5(%arg0: i32) -> (i32, i32, i32) {
    %c0_i32 = arith.constant 0 : i32
    %c0_i32_0 = arith.constant 0 : i32
    %c0_i32_1 = arith.constant 0 : i32
    return %arg0, %c0_i32, %c0_i32_0 : i32, i32, i32
  }
}

module attributes {stable_mosaic.version = 11 : i64} {
  func.func @_matmul_stats_kernel(%arg0: i32, %arg1: memref<128x128xbf16, #tpu.memory_space<vmem>>, %arg2: memref<128x128xbf16, #tpu.memory_space<vmem>>, %arg3: memref<1x128xf32, #tpu.memory_space<vmem>>, %arg4: memref<1x128xf32, #tpu.memory_space<vmem>>, %arg5: memref<128x128xbf16, #tpu.memory_space<vmem>>, %arg6: memref<1x8x128xf32, #tpu.memory_space<vmem>>) attributes {dimension_semantics = [#tpu.dimension_semantics<parallel>], iteration_bounds = array<i64: 1>, scalar_prefetch = 0 : i64, scratch_operands = 0 : i64, tpu.core_type = #tpu.core_type<tc>, window_params = [{transform_indices = @transform_0, window_bounds = array<i64: 128, 128>}, {pipeline_mode = #tpu.pipeline_mode<synchronous>, transform_indices = @transform_1, window_bounds = array<i64: 128, 128>}, {pipeline_mode = #tpu.pipeline_mode<synchronous>, transform_indices = @transform_2, window_bounds = array<i64: 1, 128>}, {pipeline_mode = #tpu.pipeline_mode<synchronous>, transform_indices = @transform_3, window_bounds = array<i64: 1, 128>}, {transform_indices = @transform_4, window_bounds = array<i64: 128, 128>}, {transform_indices = @transform_5, window_bounds = array<i64: 1, 8, 128>}]} {
    %c0 = arith.constant 0 : index
    %c0_0 = arith.constant 0 : index
    %0 = vector.load %arg1[%c0, %c0_0] : memref<128x128xbf16, #tpu.memory_space<vmem>>, vector<128x128xbf16>
    %1 = arith.extf %0 : vector<128x128xbf16> to vector<128x128xf32>
    %c0_1 = arith.constant 0 : index
    %c0_2 = arith.constant 0 : index
    %2 = vector.load %arg3[%c0_1, %c0_2] : memref<1x128xf32, #tpu.memory_space<vmem>>, vector<1x128xf32>
    %3 = vector.broadcast %2 : vector<1x128xf32> to vector<128x128xf32>
    %4 = arith.mulf %1, %3 : vector<128x128xf32>
    %c0_3 = arith.constant 0 : index
    %c0_4 = arith.constant 0 : index
    %5 = vector.load %arg4[%c0_3, %c0_4] : memref<1x128xf32, #tpu.memory_space<vmem>>, vector<1x128xf32>
    %6 = vector.broadcast %5 : vector<1x128xf32> to vector<128x128xf32>
    %7 = arith.addf %4, %6 : vector<128x128xf32>
    %cst = arith.constant 0.000000e+00 : f32
    %8 = vector.broadcast %cst : f32 to vector<128x128xf32>
    %9 = arith.maximumf %7, %8 : vector<128x128xf32>
    %10 = arith.truncf %9 : vector<128x128xf32> to vector<128x128xbf16>
    %c0_5 = arith.constant 0 : index
    %c0_6 = arith.constant 0 : index
    %11 = vector.load %arg2[%c0_5, %c0_6] : memref<128x128xbf16, #tpu.memory_space<vmem>>, vector<128x128xbf16>
    %cst_7 = arith.constant dense<0.000000e+00> : vector<128x128xf32>
    %12 = tpu.matmul %10, %11, %cst_7 {dimension_numbers = #tpu.dot_dimension_numbers<[1], [0], [0], [1], [0, 0, 1, 1], [], []>} : vector<128x128xbf16>, vector<128x128xbf16>, vector<128x128xf32> -> vector<128x128xf32>
    %13 = arith.truncf %12 : vector<128x128xf32> to vector<128x128xbf16>
    %c0_8 = arith.constant 0 : index
    %c0_9 = arith.constant 0 : index
    %14 = vector.load %arg5[%c0_8, %c0_9] : memref<128x128xbf16, #tpu.memory_space<vmem>>, vector<128x128xbf16>
    tpu.vector_store %arg5[%c0_8, %c0_9], %13 {strides = array<i32>} : memref<128x128xbf16, #tpu.memory_space<vmem>>, vector<128x128xbf16>,
    %cst_10 = arith.constant dense<0.000000e+00> : vector<128xf32>
    %15 = vector.multi_reduction <add>, %12, %cst_10 [0] : vector<128x128xf32> to vector<128xf32>
    %16 = vector.shape_cast %15 : vector<128xf32> to vector<1x128xf32>
    %17 = arith.mulf %12, %12 : vector<128x128xf32>
    %cst_11 = arith.constant dense<0.000000e+00> : vector<128xf32>
    %18 = vector.multi_reduction <add>, %17, %cst_11 [0] : vector<128x128xf32> to vector<128xf32>
    %19 = vector.shape_cast %18 : vector<128xf32> to vector<1x128xf32>
    %cst_12 = arith.constant 0.000000e+00 : f32
    %20 = vector.broadcast %cst_12 : f32 to vector<6x128xf32>
    %21 = tpu.concatenate %16, %19, %20 in 0 : vector<1x128xf32>, vector<1x128xf32>, vector<6x128xf32> -> vector<8x128xf32>
    %22 = vector.shape_cast %21 : vector<8x128xf32> to vector<1x8x128xf32>
    %c0_13 = arith.constant 0 : index
    %c0_14 = arith.constant 0 : index
    %c0_15 = arith.constant 0 : index
    %23 = vector.load %arg6[%c0_13, %c0_14, %c0_15] : memref<1x8x128xf32, #tpu.memory_space<vmem>>, vector<1x8x128xf32>
    tpu.vector_store %arg6[%c0_13, %c0_14, %c0_15], %22 {strides = array<i32>} : memref<1x8x128xf32, #tpu.memory_space<vmem>>, vector<1x8x128xf32>,
    return
  }
  func.func @transform_0(%arg0: i32) -> (i32, i32) {
    %c0_i32 = arith.constant 0 : i32
    %c0_i32_0 = arith.constant 0 : i32
    return %arg0, %c0_i32 : i32, i32
  }
  func.func @transform_1(%arg0: i32) -> (i32, i32) {
    %c0_i32 = arith.constant 0 : i32
    %c0_i32_0 = arith.constant 0 : i32
    %c0_i32_1 = arith.constant 0 : i32
    return %c0_i32, %c0_i32_0 : i32, i32
  }
  func.func @transform_2(%arg0: i32) -> (i32, i32) {
    %c0_i32 = arith.constant 0 : i32
    %c0_i32_0 = arith.constant 0 : i32
    %c0_i32_1 = arith.constant 0 : i32
    return %c0_i32, %c0_i32_0 : i32, i32
  }
  func.func @transform_3(%arg0: i32) -> (i32, i32) {
    %c0_i32 = arith.constant 0 : i32
    %c0_i32_0 = arith.constant 0 : i32
    %c0_i32_1 = arith.constant 0 : i32
    return %c0_i32, %c0_i32_0 : i32, i32
  }
  func.func @transform_4(%arg0: i32) -> (i32, i32) {
    %c0_i32 = arith.constant 0 : i32
    %c0_i32_0 = arith.constant 0 : i32
    return %arg0, %c0_i32 : i32, i32
  }
  func.func @transform_5(%arg0: i32) -> (i32, i32, i32) {
    %c0_i32 = arith.constant 0 : i32
    %c0_i32_0 = arith.constant 0 : i32
    %c0_i32_1 = arith.constant 0 : i32
    return %arg0, %c0_i32, %c0_i32_0 : i32, i32, i32
  }
}

module attributes {stable_mosaic.version = 11 : i64} {
  func.func @_matmul_stats_kernel(%arg0: i32, %arg1: memref<128x128xbf16, #tpu.memory_space<vmem>>, %arg2: memref<128x128xbf16, #tpu.memory_space<vmem>>, %arg3: memref<1x128xf32, #tpu.memory_space<vmem>>, %arg4: memref<1x128xf32, #tpu.memory_space<vmem>>, %arg5: memref<128x128xbf16, #tpu.memory_space<vmem>>, %arg6: memref<1x8x128xf32, #tpu.memory_space<vmem>>) attributes {dimension_semantics = [#tpu.dimension_semantics<parallel>], iteration_bounds = array<i64: 1>, scalar_prefetch = 0 : i64, scratch_operands = 0 : i64, tpu.core_type = #tpu.core_type<tc>, window_params = [{transform_indices = @transform_0, window_bounds = array<i64: 128, 128>}, {pipeline_mode = #tpu.pipeline_mode<synchronous>, transform_indices = @transform_1, window_bounds = array<i64: 128, 128>}, {pipeline_mode = #tpu.pipeline_mode<synchronous>, transform_indices = @transform_2, window_bounds = array<i64: 1, 128>}, {pipeline_mode = #tpu.pipeline_mode<synchronous>, transform_indices = @transform_3, window_bounds = array<i64: 1, 128>}, {transform_indices = @transform_4, window_bounds = array<i64: 128, 128>}, {transform_indices = @transform_5, window_bounds = array<i64: 1, 8, 128>}]} {
    %c0 = arith.constant 0 : index
    %c0_0 = arith.constant 0 : index
    %0 = vector.load %arg1[%c0, %c0_0] : memref<128x128xbf16, #tpu.memory_space<vmem>>, vector<128x128xbf16>
    %c0_1 = arith.constant 0 : index
    %c0_2 = arith.constant 0 : index
    %1 = vector.load %arg2[%c0_1, %c0_2] : memref<128x128xbf16, #tpu.memory_space<vmem>>, vector<128x128xbf16>
    %cst = arith.constant dense<0.000000e+00> : vector<128x128xf32>
    %2 = tpu.matmul %0, %1, %cst {dimension_numbers = #tpu.dot_dimension_numbers<[1], [0], [0], [1], [0, 0, 1, 1], [], []>} : vector<128x128xbf16>, vector<128x128xbf16>, vector<128x128xf32> -> vector<128x128xf32>
    %3 = arith.truncf %2 : vector<128x128xf32> to vector<128x128xbf16>
    %c0_3 = arith.constant 0 : index
    %c0_4 = arith.constant 0 : index
    %4 = vector.load %arg5[%c0_3, %c0_4] : memref<128x128xbf16, #tpu.memory_space<vmem>>, vector<128x128xbf16>
    tpu.vector_store %arg5[%c0_3, %c0_4], %3 {strides = array<i32>} : memref<128x128xbf16, #tpu.memory_space<vmem>>, vector<128x128xbf16>,
    %cst_5 = arith.constant dense<0.000000e+00> : vector<128xf32>
    %5 = vector.multi_reduction <add>, %2, %cst_5 [0] : vector<128x128xf32> to vector<128xf32>
    %6 = vector.shape_cast %5 : vector<128xf32> to vector<1x128xf32>
    %7 = arith.mulf %2, %2 : vector<128x128xf32>
    %cst_6 = arith.constant dense<0.000000e+00> : vector<128xf32>
    %8 = vector.multi_reduction <add>, %7, %cst_6 [0] : vector<128x128xf32> to vector<128xf32>
    %9 = vector.shape_cast %8 : vector<128xf32> to vector<1x128xf32>
    %cst_7 = arith.constant 0.000000e+00 : f32
    %10 = vector.broadcast %cst_7 : f32 to vector<6x128xf32>
    %11 = tpu.concatenate %6, %9, %10 in 0 : vector<1x128xf32>, vector<1x128xf32>, vector<6x128xf32> -> vector<8x128xf32>
    %12 = vector.shape_cast %11 : vector<8x128xf32> to vector<1x8x128xf32>
    %c0_8 = arith.constant 0 : index
    %c0_9 = arith.constant 0 : index
    %c0_10 = arith.constant 0 : index
    %13 = vector.load %arg6[%c0_8, %c0_9, %c0_10] : memref<1x8x128xf32, #tpu.memory_space<vmem>>, vector<1x8x128xf32>
    tpu.vector_store %arg6[%c0_8, %c0_9, %c0_10], %12 {strides = array<i32>} : memref<1x8x128xf32, #tpu.memory_space<vmem>>, vector<1x8x128xf32>,
    return
  }
  func.func @transform_0(%arg0: i32) -> (i32, i32) {
    %c0_i32 = arith.constant 0 : i32
    %c0_i32_0 = arith.constant 0 : i32
    return %arg0, %c0_i32 : i32, i32
  }
  func.func @transform_1(%arg0: i32) -> (i32, i32) {
    %c0_i32 = arith.constant 0 : i32
    %c0_i32_0 = arith.constant 0 : i32
    %c0_i32_1 = arith.constant 0 : i32
    return %c0_i32, %c0_i32_0 : i32, i32
  }
  func.func @transform_2(%arg0: i32) -> (i32, i32) {
    %c0_i32 = arith.constant 0 : i32
    %c0_i32_0 = arith.constant 0 : i32
    %c0_i32_1 = arith.constant 0 : i32
    return %c0_i32, %c0_i32_0 : i32, i32
  }
  func.func @transform_3(%arg0: i32) -> (i32, i32) {
    %c0_i32 = arith.constant 0 : i32
    %c0_i32_0 = arith.constant 0 : i32
    %c0_i32_1 = arith.constant 0 : i32
    return %c0_i32, %c0_i32_0 : i32, i32
  }
  func.func @transform_4(%arg0: i32) -> (i32, i32) {
    %c0_i32 = arith.constant 0 : i32
    %c0_i32_0 = arith.constant 0 : i32
    return %arg0, %c0_i32 : i32, i32
  }
  func.func @transform_5(%arg0: i32) -> (i32, i32, i32) {
    %c0_i32 = arith.constant 0 : i32
    %c0_i32_0 = arith.constant 0 : i32
    %c0_i32_1 = arith.constant 0 : i32
    return %arg0, %c0_i32, %c0_i32_0 : i32, i32, i32
  }
}

module attributes {stable_mosaic.version = 11 : i64} {
  func.func @_bn_add_relu_kernel(%arg0: i32, %arg1: memref<128x128xbf16, #tpu.memory_space<vmem>>, %arg2: memref<128x128xbf16, #tpu.memory_space<vmem>>, %arg3: memref<1x128xf32, #tpu.memory_space<vmem>>, %arg4: memref<1x128xf32, #tpu.memory_space<vmem>>, %arg5: memref<1x128xf32, #tpu.memory_space<vmem>>, %arg6: memref<1x128xf32, #tpu.memory_space<vmem>>, %arg7: memref<128x128xf32, #tpu.memory_space<vmem>>) attributes {dimension_semantics = [#tpu.dimension_semantics<parallel>], iteration_bounds = array<i64: 1>, scalar_prefetch = 0 : i64, scratch_operands = 0 : i64, tpu.core_type = #tpu.core_type<tc>, window_params = [{transform_indices = @transform_0, window_bounds = array<i64: 128, 128>}, {transform_indices = @transform_1, window_bounds = array<i64: 128, 128>}, {pipeline_mode = #tpu.pipeline_mode<synchronous>, transform_indices = @transform_2, window_bounds = array<i64: 1, 128>}, {pipeline_mode = #tpu.pipeline_mode<synchronous>, transform_indices = @transform_3, window_bounds = array<i64: 1, 128>}, {pipeline_mode = #tpu.pipeline_mode<synchronous>, transform_indices = @transform_4, window_bounds = array<i64: 1, 128>}, {pipeline_mode = #tpu.pipeline_mode<synchronous>, transform_indices = @transform_5, window_bounds = array<i64: 1, 128>}, {transform_indices = @transform_6, window_bounds = array<i64: 128, 128>}]} {
    %c0 = arith.constant 0 : index
    %c0_0 = arith.constant 0 : index
    %0 = vector.load %arg1[%c0, %c0_0] : memref<128x128xbf16, #tpu.memory_space<vmem>>, vector<128x128xbf16>
    %1 = arith.extf %0 : vector<128x128xbf16> to vector<128x128xf32>
    %c0_1 = arith.constant 0 : index
    %c0_2 = arith.constant 0 : index
    %2 = vector.load %arg3[%c0_1, %c0_2] : memref<1x128xf32, #tpu.memory_space<vmem>>, vector<1x128xf32>
    %3 = vector.broadcast %2 : vector<1x128xf32> to vector<128x128xf32>
    %4 = arith.mulf %1, %3 : vector<128x128xf32>
    %c0_3 = arith.constant 0 : index
    %c0_4 = arith.constant 0 : index
    %5 = vector.load %arg4[%c0_3, %c0_4] : memref<1x128xf32, #tpu.memory_space<vmem>>, vector<1x128xf32>
    %6 = vector.broadcast %5 : vector<1x128xf32> to vector<128x128xf32>
    %7 = arith.addf %4, %6 : vector<128x128xf32>
    %c0_5 = arith.constant 0 : index
    %c0_6 = arith.constant 0 : index
    %8 = vector.load %arg2[%c0_5, %c0_6] : memref<128x128xbf16, #tpu.memory_space<vmem>>, vector<128x128xbf16>
    %9 = arith.extf %8 : vector<128x128xbf16> to vector<128x128xf32>
    %c0_7 = arith.constant 0 : index
    %c0_8 = arith.constant 0 : index
    %10 = vector.load %arg5[%c0_7, %c0_8] : memref<1x128xf32, #tpu.memory_space<vmem>>, vector<1x128xf32>
    %11 = vector.broadcast %10 : vector<1x128xf32> to vector<128x128xf32>
    %12 = arith.mulf %9, %11 : vector<128x128xf32>
    %c0_9 = arith.constant 0 : index
    %c0_10 = arith.constant 0 : index
    %13 = vector.load %arg6[%c0_9, %c0_10] : memref<1x128xf32, #tpu.memory_space<vmem>>, vector<1x128xf32>
    %14 = vector.broadcast %13 : vector<1x128xf32> to vector<128x128xf32>
    %15 = arith.addf %12, %14 : vector<128x128xf32>
    %16 = arith.addf %7, %15 : vector<128x128xf32>
    %cst = arith.constant 0.000000e+00 : f32
    %17 = vector.broadcast %cst : f32 to vector<128x128xf32>
    %18 = arith.maximumf %16, %17 : vector<128x128xf32>
    %c0_11 = arith.constant 0 : index
    %c0_12 = arith.constant 0 : index
    %19 = vector.load %arg7[%c0_11, %c0_12] : memref<128x128xf32, #tpu.memory_space<vmem>>, vector<128x128xf32>
    tpu.vector_store %arg7[%c0_11, %c0_12], %18 {strides = array<i32>} : memref<128x128xf32, #tpu.memory_space<vmem>>, vector<128x128xf32>,
    return
  }
  func.func @transform_0(%arg0: i32) -> (i32, i32) {
    %c0_i32 = arith.constant 0 : i32
    %c0_i32_0 = arith.constant 0 : i32
    return %arg0, %c0_i32 : i32, i32
  }
  func.func @transform_1(%arg0: i32) -> (i32, i32) {
    %c0_i32 = arith.constant 0 : i32
    %c0_i32_0 = arith.constant 0 : i32
    return %arg0, %c0_i32 : i32, i32
  }
  func.func @transform_2(%arg0: i32) -> (i32, i32) {
    %c0_i32 = arith.constant 0 : i32
    %c0_i32_0 = arith.constant 0 : i32
    %c0_i32_1 = arith.constant 0 : i32
    return %c0_i32, %c0_i32_0 : i32, i32
  }
  func.func @transform_3(%arg0: i32) -> (i32, i32) {
    %c0_i32 = arith.constant 0 : i32
    %c0_i32_0 = arith.constant 0 : i32
    %c0_i32_1 = arith.constant 0 : i32
    return %c0_i32, %c0_i32_0 : i32, i32
  }
  func.func @transform_4(%arg0: i32) -> (i32, i32) {
    %c0_i32 = arith.constant 0 : i32
    %c0_i32_0 = arith.constant 0 : i32
    %c0_i32_1 = arith.constant 0 : i32
    return %c0_i32, %c0_i32_0 : i32, i32
  }
  func.func @transform_5(%arg0: i32) -> (i32, i32) {
    %c0_i32 = arith.constant 0 : i32
    %c0_i32_0 = arith.constant 0 : i32
    %c0_i32_1 = arith.constant 0 : i32
    return %c0_i32, %c0_i32_0 : i32, i32
  }
  func.func @transform_6(%arg0: i32) -> (i32, i32) {
    %c0_i32 = arith.constant 0 : i32
    %c0_i32_0 = arith.constant 0 : i32
    return %arg0, %c0_i32 : i32, i32
  }
}

</mosaic_0001>

<llo_original>
// kernel: bottleneck_forward.5
$region0: #{bottleneck_forward.5}
  #allocation0 [shape = 'u32[]', space=smem, size = 0x4, offset = 0x4, fixed_abs, tag = 'smem constant byte address 0x4 - core index']
  #allocation1 [shape = 'u32[144,128]{1,0:T(1,128)}', space=vmem, size = 0x12000, scoped, tag = 'internal scratch']
  %s0 = inlined_call_operand.vmem [shape: bf16[512,128], index: 0, kind: input, shape index: {}]
  %s1 = inlined_call_operand.vmem [shape: bf16[128,128], index: 1, kind: input, shape index: {}]
  %s2 = inlined_call_operand.vmem [shape: f32[1,128], index: 2, kind: input, shape index: {}]
  %s3 = inlined_call_operand.vmem [shape: f32[1,128], index: 3, kind: input, shape index: {}]
  %s4 = inlined_call_operand.vmem [shape: bf16[512,128], index: 4, kind: output, shape index: {0}]
  %s5 = inlined_call_operand.vmem [shape: f32[1,8,128], index: 5, kind: output, shape index: {1}]
  %6 = xla_tuple %s4, %s5
  %s7 = sld [smem:[#allocation0]]
  $region34: #{bottleneck_forward.5} parent=0
    _
  %s9 = ssub.s32 1, %s7
  %s10 = scalar_select 0, %s9, %s7
  // Predicated region
  $region2: #{bottleneck_forward.5} parent=0 // pred_check
    _
  $region3: #{bottleneck_forward.5} parent=0 // pred_check_branch
    %12 = sbr.rel (0) target = $region5
  $region4: #{bottleneck_forward.5} parent=0 // pred_region
    _
  $region5: #{bottleneck_forward.5} parent=0 // pred_fallthru
    _
  // Predicated region
  $region6: #{bottleneck_forward.5} parent=0 // pred_check
    _
  $region7: #{bottleneck_forward.5} parent=0 // pred_check_branch
    %14 = sbr.rel (0) target = $region9
  $region8: #{bottleneck_forward.5} parent=0 // pred_region
    _
  $region9: #{bottleneck_forward.5} parent=0 // pred_fallthru
    _
  // Predicated region
  $region10: #{bottleneck_forward.5} parent=0 // pred_check
    _
  $region11: #{bottleneck_forward.5} parent=0 // pred_check_branch
    %16 = sbr.rel (0) target = $region13
  $region12: #{bottleneck_forward.5} parent=0 // pred_region
    _
  $region13: #{bottleneck_forward.5} parent=0 // pred_fallthru
    _
  // Predicated region
  $region14: #{bottleneck_forward.5} parent=0 // pred_check
    _
  $region15: #{bottleneck_forward.5} parent=0 // pred_check_branch
    %18 = sbr.rel (0) target = $region17
  $region16: #{bottleneck_forward.5} parent=0 // pred_region
    _
  $region17: #{bottleneck_forward.5} parent=0 // pred_fallthru
    _
  %v20 = vld [vmem:[%s0] sm:$0xf]
  %v21 = vld [vmem:[%s0 + $0x4] sm:$0xf]
  %v22 = vld [vmem:[%s0 + $0x8] sm:$0xf]
  %v23 = vld [vmem:[%s0 + $0xc] sm:$0xf]
  %v24 = vld [vmem:[%s0 + $0x10] sm:$0xf]
  %v25 = vld [vmem:[%s0 + $0x14] sm:$0xf]
  %v26 = vld [vmem:[%s0 + $0x18] sm:$0xf]
  %v27 = vld [vmem:[%s0 + $0x1c] sm:$0xf]
  %v28 = vld [vmem:[%s0 + $0x20] sm:$0xf]
  %v29 = vld [vmem:[%s0 + $0x24] sm:$0xf]
  %v30 = vld [vmem:[%s0 + $0x28] sm:$0xf]
  %v31 = vld [vmem:[%s0 + $0x2c] sm:$0xf]
  %v32 = vld [vmem:[%s0 + $0x30] sm:$0xf]
  %v33 = vld [vmem:[%s0 + $0x34] sm:$0xf]
  %v34 = vld [vmem:[%s0 + $0x38] sm:$0xf]
  %v35 = vld [vmem:[%s0 + $0x3c] sm:$0xf]
  %v36 = vld [vmem:[%s0 + $0x40] sm:$0xf]
  %v37 = vld [vmem:[%s0 + $0x44] sm:$0xf]
  %v38 = vld [vmem:[%s0 + $0x48] sm:$0xf]
  %v39 = vld [vmem:[%s0 + $0x4c] sm:$0xf]
  %v40 = vld [vmem:[%s0 + $0x50] sm:$0xf]
  %v41 = vld [vmem:[%s0 + $0x54] sm:$0xf]
  %v42 = vld [vmem:[%s0 + $0x58] sm:$0xf]
  %v43 = vld [vmem:[%s0 + $0x5c] sm:$0xf]
  %v44 = vld [vmem:[%s0 + $0x60] sm:$0xf]
  %v45 = vld [vmem:[%s0 + $0x64] sm:$0xf]
  %v46 = vld [vmem:[%s0 + $0x68] sm:$0xf]
  %v47 = vld [vmem:[%s0 + $0x6c] sm:$0xf]
  %v48 = vld [vmem:[%s0 + $0x70] sm:$0xf]
  %v49 = vld [vmem:[%s0 + $0x74] sm:$0xf]
  %v50 = vld [vmem:[%s0 + $0x78] sm:$0xf]
  %v51 = vld [vmem:[%s0 + $0x7c] sm:$0xf]
  %v52 = vld [vmem:[%s0 + $0x80] sm:$0xf]
  %v53 = vld [vmem:[%s0 + $0x84] sm:$0xf]
  %v54 = vld [vmem:[%s0 + $0x88] sm:$0xf]
  %v55 = vld [vmem:[%s0 + $0x8c] sm:$0xf]
  %v56 = vld [vmem:[%s0 + $0x90] sm:$0xf]
  %v57 = vld [vmem:[%s0 + $0x94] sm:$0xf]
  %v58 = vld [vmem:[%s0 + $0x98] sm:$0xf]
  %v59 = vld [vmem:[%s0 + $0x9c] sm:$0xf]
  %v60 = vld [vmem:[%s0 + $0xa0] sm:$0xf]
  %v61 = vld [vmem:[%s0 + $0xa4] sm:$0xf]
  %v62 = vld [vmem:[%s0 + $0xa8] sm:$0xf]
  %v63 = vld [vmem:[%s0 + $0xac] sm:$0xf]
  %v64 = vld [vmem:[%s0 + $0xb0] sm:$0xf]
  %v65 = vld [vmem:[%s0 + $0xb4] sm:$0xf]
  %v66 = vld [vmem:[%s0 + $0xb8] sm:$0xf]
  %v67 = vld [vmem:[%s0 + $0xbc] sm:$0xf]
  %v68 = vld [vmem:[%s0 + $0xc0] sm:$0xf]
  %v69 = vld [vmem:[%s0 + $0xc4] sm:$0xf]
  %v70 = vld [vmem:[%s0 + $0xc8] sm:$0xf]
  %v71 = vld [vmem:[%s0 + $0xcc] sm:$0xf]
  %v72 = vld [vmem:[%s0 + $0xd0] sm:$0xf]
  %v73 = vld [vmem:[%s0 + $0xd4] sm:$0xf]
  %v74 = vld [vmem:[%s0 + $0xd8] sm:$0xf]
  %v75 = vld [vmem:[%s0 + $0xdc] sm:$0xf]
  %v76 = vld [vmem:[%s0 + $0xe0] sm:$0xf]
  %v77 = vld [vmem:[%s0 + $0xe4] sm:$0xf]
  %v78 = vld [vmem:[%s0 + $0xe8] sm:$0xf]
  %v79 = vld [vmem:[%s0 + $0xec] sm:$0xf]
  %v80 = vld [vmem:[%s0 + $0xf0] sm:$0xf]
  %v81 = vld [vmem:[%s0 + $0xf4] sm:$0xf]
  %v82 = vld [vmem:[%s0 + $0xf8] sm:$0xf]
  %v83 = vld [vmem:[%s0 + $0xfc] sm:$0xf]
  %v84 = vld [vmem:[%s1] sm:$0xf]
  %v85 = vld [vmem:[%s1 + $0x4] sm:$0xf]
  %v86 = vld [vmem:[%s1 + $0x8] sm:$0xf]
  %v87 = vld [vmem:[%s1 + $0xc] sm:$0xf]
  %v88 = vld [vmem:[%s1 + $0x10] sm:$0xf]
  %v89 = vld [vmem:[%s1 + $0x14] sm:$0xf]
  %v90 = vld [vmem:[%s1 + $0x18] sm:$0xf]
  %v91 = vld [vmem:[%s1 + $0x1c] sm:$0xf]
  %v92 = vld [vmem:[%s1 + $0x20] sm:$0xf]
  %v93 = vld [vmem:[%s1 + $0x24] sm:$0xf]
  %v94 = vld [vmem:[%s1 + $0x28] sm:$0xf]
  %v95 = vld [vmem:[%s1 + $0x2c] sm:$0xf]
  %v96 = vld [vmem:[%s1 + $0x30] sm:$0xf]
  %v97 = vld [vmem:[%s1 + $0x34] sm:$0xf]
  %v98 = vld [vmem:[%s1 + $0x38] sm:$0xf]
  %v99 = vld [vmem:[%s1 + $0x3c] sm:$0xf]
  %v164 = vunpack.c.l.b16 %v20
  %v165 = vunpack.c.l.b16 %v21
  %v166 = vunpack.c.l.b16 %v22
  %v167 = vunpack.c.l.b16 %v23
  %v168 = vunpack.c.l.b16 %v24
  %v169 = vunpack.c.l.b16 %v25
  %v170 = vunpack.c.l.b16 %v26
  %v171 = vunpack.c.l.b16 %v27
  %v172 = vunpack.c.l.b16 %v28
  %v173 = vunpack.c.l.b16 %v29
  %v174 = vunpack.c.l.b16 %v30
  %v175 = vunpack.c.l.b16 %v31
  %v176 = vunpack.c.l.b16 %v32
  %v177 = vunpack.c.l.b16 %v33
  %v178 = vunpack.c.l.b16 %v34
  %v179 = vunpack.c.l.b16 %v35
  %v180 = vunpack.c.l.b16 %v36
  %v181 = vunpack.c.l.b16 %v37
  %v182 = vunpack.c.l.b16 %v38
  %v183 = vunpack.c.l.b16 %v39
  %v184 = vunpack.c.l.b16 %v40
  %v185 = vunpack.c.l.b16 %v41
  %v186 = vunpack.c.l.b16 %v42
  %v187 = vunpack.c.l.b16 %v43
  %v188 = vunpack.c.l.b16 %v44
  %v189 = vunpack.c.l.b16 %v45
  %v190 = vunpack.c.l.b16 %v46
  %v191 = vunpack.c.l.b16 %v47
  %v192 = vunpack.c.l.b16 %v48
  %v193 = vunpack.c.l.b16 %v49
  %v194 = vunpack.c.l.b16 %v50
  %v195 = vunpack.c.l.b16 %v51
  %v196 = vunpack.c.l.b16 %v52
  %v197 = vunpack.c.l.b16 %v53
  %v198 = vunpack.c.l.b16 %v54
  %v199 = vunpack.c.l.b16 %v55
  %v200 = vunpack.c.l.b16 %v56
  %v201 = vunpack.c.l.b16 %v57
  %v202 = vunpack.c.l.b16 %v58
  %v203 = vunpack.c.l.b16 %v59
  %v204 = vunpack.c.l.b16 %v60
  %v205 = vunpack.c.l.b16 %v61
  %v206 = vunpack.c.l.b16 %v62
  %v207 = vunpack.c.l.b16 %v63
  %v208 = vunpack.c.l.b16 %v64
  %v209 = vunpack.c.l.b16 %v65
  %v210 = vunpack.c.l.b16 %v66
  %v211 = vunpack.c.l.b16 %v67
  %v212 = vunpack.c.l.b16 %v68
  %v213 = vunpack.c.l.b16 %v69
  %v214 = vunpack.c.l.b16 %v70
  %v215 = vunpack.c.l.b16 %v71
  %v216 = vunpack.c.l.b16 %v72
  %v217 = vunpack.c.l.b16 %v73
  %v218 = vunpack.c.l.b16 %v74
  %v219 = vunpack.c.l.b16 %v75
  %v220 = vunpack.c.l.b16 %v76
  %v221 = vunpack.c.l.b16 %v77
  %v222 = vunpack.c.l.b16 %v78
  %v223 = vunpack.c.l.b16 %v79
  %v224 = vunpack.c.l.b16 %v80
  %v225 = vunpack.c.l.b16 %v81
  %v226 = vunpack.c.l.b16 %v82
  %v227 = vunpack.c.l.b16 %v83
  %v228 = vpack.c.b16 %v165, %v164
  %v229 = vpack.c.b16 %v167, %v166
  %v230 = vpack.c.b16 %v169, %v168
  %v231 = vpack.c.b16 %v171, %v170
  %v232 = vpack.c.b16 %v173, %v172
  %v233 = vpack.c.b16 %v175, %v174
  %v234 = vpack.c.b16 %v177, %v176
  %v235 = vpack.c.b16 %v179, %v178
  %v236 = vpack.c.b16 %v181, %v180
  %v237 = vpack.c.b16 %v183, %v182
  %v238 = vpack.c.b16 %v185, %v184
  %v239 = vpack.c.b16 %v187, %v186
  %v240 = vpack.c.b16 %v189, %v188
  %v241 = vpack.c.b16 %v191, %v190
  %v242 = vpack.c.b16 %v193, %v192
  %v243 = vpack.c.b16 %v195, %v194
  %v244 = vpack.c.b16 %v197, %v196
  %v245 = vpack.c.b16 %v199, %v198
  %v246 = vpack.c.b16 %v201, %v200
  %v247 = vpack.c.b16 %v203, %v202
  %v248 = vpack.c.b16 %v205, %v204
  %v249 = vpack.c.b16 %v207, %v206
  %v250 = vpack.c.b16 %v209, %v208
  %v251 = vpack.c.b16 %v211, %v210
  %v252 = vpack.c.b16 %v213, %v212
  %v253 = vpack.c.b16 %v215, %v214
  %v254 = vpack.c.b16 %v217, %v216
  %v255 = vpack.c.b16 %v219, %v218
  %v256 = vpack.c.b16 %v221, %v220
  %v257 = vpack.c.b16 %v223, %v222
  %v258 = vpack.c.b16 %v225, %v224
  %v259 = vpack.c.b16 %v227, %v226
  %v308 = vunpack.c.l.b16 %v84
  %v309 = vunpack.c.l.b16 %v85
  %v310 = vunpack.c.l.b16 %v86
  %v311 = vunpack.c.l.b16 %v87
  %v312 = vunpack.c.l.b16 %v88
  %v313 = vunpack.c.l.b16 %v89
  %v314 = vunpack.c.l.b16 %v90
  %v315 = vunpack.c.l.b16 %v91
  %v316 = vunpack.c.l.b16 %v92
  %v317 = vunpack.c.l.b16 %v93
  %v318 = vunpack.c.l.b16 %v94
  %v319 = vunpack.c.l.b16 %v95
  %v320 = vunpack.c.l.b16 %v96
  %v321 = vunpack.c.l.b16 %v97
  %v322 = vunpack.c.l.b16 %v98
  %v323 = vunpack.c.l.b16 %v99
  %v324 = vpack.c.b16 %v309, %v308
  %v325 = vpack.c.b16 %v311, %v310
  %v326 = vpack.c.b16 %v313, %v312
  %v327 = vpack.c.b16 %v315, %v314
  %v328 = vpack.c.b16 %v317, %v316
  %v329 = vpack.c.b16 %v319, %v318
  %v330 = vpack.c.b16 %v321, %v320
  %v331 = vpack.c.b16 %v323, %v322
  %340 = vmatprep.subr.bf16.mxu0 0
  %341 = vmatpush1.bf16.msra.mxu0 %v331
  %342 = vmatprep.subr.bf16.mxu0 0
  %343 = vmatpush1.bf16.msra.mxu0 %v330
  %344 = vmatprep.subr.bf16.mxu0 0
  %345 = vmatpush1.bf16.msra.mxu0 %v329
  %346 = vmatprep.subr.bf16.mxu0 0
  %347 = vmatpush1.bf16.msra.mxu0 %v328
  %348 = vmatprep.subr.bf16.mxu0 0
  %349 = vmatpush1.bf16.msra.mxu0 %v327
  %350 = vmatprep.subr.bf16.mxu0 0
  %351 = vmatpush1.bf16.msra.mxu0 %v326
  %352 = vmatprep.subr.bf16.mxu0 0
  %353 = vmatpush1.bf16.msra.mxu0 %v325
  %354 = vmatprep.subr.bf16.mxu0 0
  %355 = vmatpush1.bf16.msra.mxu0 %v324
  %356 = vmatprep.subr.bf16.mxu0 0
  %357 = vmatpush2.bf16.msra.mxu0 0
  %358 = vmatprep.subr.bf16.mxu0 0
  %359 = vmatpush2.bf16.msra.mxu0 0
  %360 = vmatprep.subr.bf16.mxu0 0
  %361 = vmatpush2.bf16.msra.mxu0 0
  %362 = vmatprep.subr.bf16.mxu0 0
  %363 = vmatpush2.bf16.msra.mxu0 0
  %364 = vmatprep.subr.bf16.mxu0 0
  %365 = vmatpush2.bf16.msra.mxu0 0
  %366 = vmatprep.subr.bf16.mxu0 0
  %367 = vmatpush2.bf16.msra.mxu0 0
  %368 = vmatprep.subr.bf16.mxu0 0
  %369 = vmatpush2.bf16.msra.mxu0 0
  %370 = vmatprep.subr.bf16.mxu0 0
  %371 = vmatpush2.bf16.msra.mxu0 0
  %372 = vmatprep.mubr.bf16.mxu0 0
  %373 = vmatmul.mubr.bf16.gmra.mxu0 %v228
  %v374 = vpop.f32.mrf.mxu0
  %v375 = vadd.f32 0.0, %v374
  %v376 = vpop.f32.mrf.mxu0
  %v377 = vpop.f32.mrf.mxu0
  %v378 = vadd.f32 0.0, %v377
  %v379 = vpop.f32.mrf.mxu0
  %380 = vmatprep.mubr.bf16.mxu0 0
  %381 = vmatmul.mubr.bf16.gmra.mxu0 %v229
  %v382 = vpop.f32.mrf.mxu0
  %v383 = vadd.f32 0.0, %v382
  %v384 = vpop.f32.mrf.mxu0
  %v385 = vpop.f32.mrf.mxu0
  %v386 = vadd.f32 0.0, %v385
  %v387 = vpop.f32.mrf.mxu0
  %388 = vmatprep.mubr.bf16.mxu0 0
  %389 = vmatmul.mubr.bf16.gmra.mxu0 %v230
  %v390 = vpop.f32.mrf.mxu0
  %v391 = vadd.f32 0.0, %v390
  %v392 = vpop.f32.mrf.mxu0
  %v393 = vpop.f32.mrf.mxu0
  %v394 = vadd.f32 0.0, %v393
  %v395 = vpop.f32.mrf.mxu0
  %396 = vmatprep.mubr.bf16.mxu0 0
  %397 = vmatmul.mubr.bf16.gmra.mxu0 %v231
  %v398 = vpop.f32.mrf.mxu0
  %v399 = vadd.f32 0.0, %v398
  %v400 = vpop.f32.mrf.mxu0
  %v401 = vpop.f32.mrf.mxu0
  %v402 = vadd.f32 0.0, %v401
  %v403 = vpop.f32.mrf.mxu0
  %404 = vmatprep.mubr.bf16.mxu0 0
  %405 = vmatmul.mubr.bf16.gmra.mxu0 %v232
  %v406 = vpop.f32.mrf.mxu0
  %v407 = vadd.f32 0.0, %v406
  %v408 = vpop.f32.mrf.mxu0
  %v409 = vpop.f32.mrf.mxu0
  %v410 = vadd.f32 0.0, %v409
  %v411 = vpop.f32.mrf.mxu0
  %412 = vmatprep.mubr.bf16.mxu0 0
  %413 = vmatmul.mubr.bf16.gmra.mxu0 %v233
  %v414 = vpop.f32.mrf.mxu0
  %v415 = vadd.f32 0.0, %v414
  %v416 = vpop.f32.mrf.mxu0
  %v417 = vpop.f32.mrf.mxu0
  %v418 = vadd.f32 0.0, %v417
  %v419 = vpop.f32.mrf.mxu0
  %420 = vmatprep.mubr.bf16.mxu0 0
  %421 = vmatmul.mubr.bf16.gmra.mxu0 %v234
  %v422 = vpop.f32.mrf.mxu0
  %v423 = vadd.f32 0.0, %v422
  %v424 = vpop.f32.mrf.mxu0
  %v425 = vpop.f32.mrf.mxu0
  %v426 = vadd.f32 0.0, %v425
  %v427 = vpop.f32.mrf.mxu0
  %428 = vmatprep.mubr.bf16.mxu0 0
  %429 = vmatmul.mubr.bf16.gmra.mxu0 %v235
  %v430 = vpop.f32.mrf.mxu0
  %v431 = vadd.f32 0.0, %v430
  %v432 = vpop.f32.mrf.mxu0
  %v433 = vpop.f32.mrf.mxu0
  %v434 = vadd.f32 0.0, %v433
  %v435 = vpop.f32.mrf.mxu0
  %436 = vmatprep.mubr.bf16.mxu0 0
  %437 = vmatmul.mubr.bf16.gmra.mxu0 %v236
  %v438 = vpop.f32.mrf.mxu0
  %v439 = vadd.f32 0.0, %v438
  %v440 = vpop.f32.mrf.mxu0
  %v441 = vpop.f32.mrf.mxu0
  %v442 = vadd.f32 0.0, %v441
  %v443 = vpop.f32.mrf.mxu0
  %444 = vmatprep.mubr.bf16.mxu0 0
  %445 = vmatmul.mubr.bf16.gmra.mxu0 %v237
  %v446 = vpop.f32.mrf.mxu0
  %v447 = vadd.f32 0.0, %v446
  %v448 = vpop.f32.mrf.mxu0
  %v449 = vpop.f32.mrf.mxu0
  %v450 = vadd.f32 0.0, %v449
  %v451 = vpop.f32.mrf.mxu0
  %452 = vmatprep.mubr.bf16.mxu0 0
  %453 = vmatmul.mubr.bf16.gmra.mxu0 %v238
  %v454 = vpop.f32.mrf.mxu0
  %v455 = vadd.f32 0.0, %v454
  %v456 = vpop.f32.mrf.mxu0
  %v457 = vpop.f32.mrf.mxu0
  %v458 = vadd.f32 0.0, %v457
  %v459 = vpop.f32.mrf.mxu0
  %460 = vmatprep.mubr.bf16.mxu0 0
  %461 = vmatmul.mubr.bf16.gmra.mxu0 %v239
  %v462 = vpop.f32.mrf.mxu0
  %v463 = vadd.f32 0.0, %v462
  %v464 = vpop.f32.mrf.mxu0
  %v465 = vpop.f32.mrf.mxu0
  %v466 = vadd.f32 0.0, %v465
  %v467 = vpop.f32.mrf.mxu0
  %468 = vmatprep.mubr.bf16.mxu0 0
  %469 = vmatmul.mubr.bf16.gmra.mxu0 %v240
  %v470 = vpop.f32.mrf.mxu0
  %v471 = vadd.f32 0.0, %v470
  %v472 = vpop.f32.mrf.mxu0
  %v473 = vpop.f32.mrf.mxu0
  %v474 = vadd.f32 0.0, %v473
  %v475 = vpop.f32.mrf.mxu0
  %476 = vmatprep.mubr.bf16.mxu0 0
  %477 = vmatmul.mubr.bf16.gmra.mxu0 %v241
  %v478 = vpop.f32.mrf.mxu0
  %v479 = vadd.f32 0.0, %v478
  %v480 = vpop.f32.mrf.mxu0
  %v481 = vpop.f32.mrf.mxu0
  %v482 = vadd.f32 0.0, %v481
  %v483 = vpop.f32.mrf.mxu0
  %484 = vmatprep.mubr.bf16.mxu0 0
  %485 = vmatmul.mubr.bf16.gmra.mxu0 %v242
  %v486 = vpop.f32.mrf.mxu0
  %v487 = vadd.f32 0.0, %v486
  %v488 = vpop.f32.mrf.mxu0
  %v489 = vpop.f32.mrf.mxu0
  %v490 = vadd.f32 0.0, %v489
  %v491 = vpop.f32.mrf.mxu0
  %492 = vmatprep.mubr.bf16.mxu0 0
  %493 = vmatmul.mubr.bf16.gmra.mxu0 %v243
  %v494 = vpop.f32.mrf.mxu0
  %v495 = vadd.f32 0.0, %v494
  %v496 = vpop.f32.mrf.mxu0
  %v497 = vpop.f32.mrf.mxu0
  %v498 = vadd.f32 0.0, %v497
  %v499 = vpop.f32.mrf.mxu0
  %500 = vmatprep.mubr.bf16.mxu0 0
  %501 = vmatmul.mubr.bf16.gmra.mxu0 %v244
  %v502 = vpop.f32.mrf.mxu0
  %v503 = vadd.f32 0.0, %v502
  %v504 = vpop.f32.mrf.mxu0
  %v505 = vpop.f32.mrf.mxu0
  %v506 = vadd.f32 0.0, %v505
  %v507 = vpop.f32.mrf.mxu0
  %508 = vmatprep.mubr.bf16.mxu0 0
  %509 = vmatmul.mubr.bf16.gmra.mxu0 %v245
  %v510 = vpop.f32.mrf.mxu0
  %v511 = vadd.f32 0.0, %v510
  %v512 = vpop.f32.mrf.mxu0
  %v513 = vpop.f32.mrf.mxu0
  %v514 = vadd.f32 0.0, %v513
  %v515 = vpop.f32.mrf.mxu0
  %516 = vmatprep.mubr.bf16.mxu0 0
  %517 = vmatmul.mubr.bf16.gmra.mxu0 %v246
  %v518 = vpop.f32.mrf.mxu0
  %v519 = vadd.f32 0.0, %v518
  %v520 = vpop.f32.mrf.mxu0
  %v521 = vpop.f32.mrf.mxu0
  %v522 = vadd.f32 0.0, %v521
  %v523 = vpop.f32.mrf.mxu0
  %524 = vmatprep.mubr.bf16.mxu0 0
  %525 = vmatmul.mubr.bf16.gmra.mxu0 %v247
  %v526 = vpop.f32.mrf.mxu0
  %v527 = vadd.f32 0.0, %v526
  %v528 = vpop.f32.mrf.mxu0
  %v529 = vpop.f32.mrf.mxu0
  %v530 = vadd.f32 0.0, %v529
  %v531 = vpop.f32.mrf.mxu0
  %532 = vmatprep.mubr.bf16.mxu0 0
  %533 = vmatmul.mubr.bf16.gmra.mxu0 %v248
  %v534 = vpop.f32.mrf.mxu0
  %v535 = vadd.f32 0.0, %v534
  %v536 = vpop.f32.mrf.mxu0
  %v537 = vpop.f32.mrf.mxu0
  %v538 = vadd.f32 0.0, %v537
  %v539 = vpop.f32.mrf.mxu0
  %540 = vmatprep.mubr.bf16.mxu0 0
  %541 = vmatmul.mubr.bf16.gmra.mxu0 %v249
  %v542 = vpop.f32.mrf.mxu0
  %v543 = vadd.f32 0.0, %v542
  %v544 = vpop.f32.mrf.mxu0
  %v545 = vpop.f32.mrf.mxu0
  %v546 = vadd.f32 0.0, %v545
  %v547 = vpop.f32.mrf.mxu0
  %548 = vmatprep.mubr.bf16.mxu0 0
  %549 = vmatmul.mubr.bf16.gmra.mxu0 %v250
  %v550 = vpop.f32.mrf.mxu0
  %v551 = vadd.f32 0.0, %v550
  %v552 = vpop.f32.mrf.mxu0
  %v553 = vpop.f32.mrf.mxu0
  %v554 = vadd.f32 0.0, %v553
  %v555 = vpop.f32.mrf.mxu0
  %556 = vmatprep.mubr.bf16.mxu0 0
  %557 = vmatmul.mubr.bf16.gmra.mxu0 %v251
  %v558 = vpop.f32.mrf.mxu0
  %v559 = vadd.f32 0.0, %v558
  %v560 = vpop.f32.mrf.mxu0
  %v561 = vpop.f32.mrf.mxu0
  %v562 = vadd.f32 0.0, %v561
  %v563 = vpop.f32.mrf.mxu0
  %564 = vmatprep.mubr.bf16.mxu0 0
  %565 = vmatmul.mubr.bf16.gmra.mxu0 %v252
  %v566 = vpop.f32.mrf.mxu0
  %v567 = vadd.f32 0.0, %v566
  %v568 = vpop.f32.mrf.mxu0
  %v569 = vpop.f32.mrf.mxu0
  %v570 = vadd.f32 0.0, %v569
  %v571 = vpop.f32.mrf.mxu0
  %572 = vmatprep.mubr.bf16.mxu0 0
  %573 = vmatmul.mubr.bf16.gmra.mxu0 %v253
  %v574 = vpop.f32.mrf.mxu0
  %v575 = vadd.f32 0.0, %v574
  %v576 = vpop.f32.mrf.mxu0
  %v577 = vpop.f32.mrf.mxu0
  %v578 = vadd.f32 0.0, %v577
  %v579 = vpop.f32.mrf.mxu0
  %580 = vmatprep.mubr.bf16.mxu0 0
  %581 = vmatmul.mubr.bf16.gmra.mxu0 %v254
  %v582 = vpop.f32.mrf.mxu0
  %v583 = vadd.f32 0.0, %v582
  %v584 = vpop.f32.mrf.mxu0
  %v585 = vpop.f32.mrf.mxu0
  %v586 = vadd.f32 0.0, %v585
  %v587 = vpop.f32.mrf.mxu0
  %588 = vmatprep.mubr.bf16.mxu0 0
  %589 = vmatmul.mubr.bf16.gmra.mxu0 %v255
  %v590 = vpop.f32.mrf.mxu0
  %v591 = vadd.f32 0.0, %v590
  %v592 = vpop.f32.mrf.mxu0
  %v593 = vpop.f32.mrf.mxu0
  %v594 = vadd.f32 0.0, %v593
  %v595 = vpop.f32.mrf.mxu0
  %596 = vmatprep.mubr.bf16.mxu0 0
  %597 = vmatmul.mubr.bf16.gmra.mxu0 %v256
  %v598 = vpop.f32.mrf.mxu0
  %v599 = vadd.f32 0.0, %v598
  %v600 = vpop.f32.mrf.mxu0
  %v601 = vpop.f32.mrf.mxu0
  %v602 = vadd.f32 0.0, %v601
  %v603 = vpop.f32.mrf.mxu0
  %604 = vmatprep.mubr.bf16.mxu0 0
  %605 = vmatmul.mubr.bf16.gmra.mxu0 %v257
  %v606 = vpop.f32.mrf.mxu0
  %v607 = vadd.f32 0.0, %v606
  %v608 = vpop.f32.mrf.mxu0
  %v609 = vpop.f32.mrf.mxu0
  %v610 = vadd.f32 0.0, %v609
  %v611 = vpop.f32.mrf.mxu0
  %612 = vmatprep.mubr.bf16.mxu0 0
  %613 = vmatmul.mubr.bf16.gmra.mxu0 %v258
  %v614 = vpop.f32.mrf.mxu0
  %v615 = vadd.f32 0.0, %v614
  %v616 = vpop.f32.mrf.mxu0
  %v617 = vpop.f32.mrf.mxu0
  %v618 = vadd.f32 0.0, %v617
  %v619 = vpop.f32.mrf.mxu0
  %620 = vmatprep.mubr.bf16.mxu0 0
  %621 = vmatmul.mubr.bf16.gmra.mxu0 %v259
  %v622 = vpop.f32.mrf.mxu0
  %v623 = vadd.f32 0.0, %v622
  %v624 = vpop.f32.mrf.mxu0
  %v625 = vpop.f32.mrf.mxu0
  %v626 = vadd.f32 0.0, %v625
  %v627 = vpop.f32.mrf.mxu0
  %628 = vdwg.mxu0
  %v629 = vpack.c.bf16 %v378, %v375
  %v630 = vpack.c.bf16 %v386, %v383
  %v631 = vpack.c.bf16 %v394, %v391
  %v632 = vpack.c.bf16 %v402, %v399
  %v633 = vpack.c.bf16 %v410, %v407
  %v634 = vpack.c.bf16 %v418, %v415
  %v635 = vpack.c.bf16 %v426, %v423
  %v636 = vpack.c.bf16 %v434, %v431
  %v637 = vpack.c.bf16 %v442, %v439
  %v638 = vpack.c.bf16 %v450, %v447
  %v639 = vpack.c.bf16 %v458, %v455
  %v640 = vpack.c.bf16 %v466, %v463
  %v641 = vpack.c.bf16 %v474, %v471
  %v642 = vpack.c.bf16 %v482, %v479
  %v643 = vpack.c.bf16 %v490, %v487
  %v644 = vpack.c.bf16 %v498, %v495
  %v645 = vpack.c.bf16 %v506, %v503
  %v646 = vpack.c.bf16 %v514, %v511
  %v647 = vpack.c.bf16 %v522, %v519
  %v648 = vpack.c.bf16 %v530, %v527
  %v649 = vpack.c.bf16 %v538, %v535
  %v650 = vpack.c.bf16 %v546, %v543
  %v651 = vpack.c.bf16 %v554, %v551
  %v652 = vpack.c.bf16 %v562, %v559
  %v653 = vpack.c.bf16 %v570, %v567
  %v654 = vpack.c.bf16 %v578, %v575
  %v655 = vpack.c.bf16 %v586, %v583
  %v656 = vpack.c.bf16 %v594, %v591
  %v657 = vpack.c.bf16 %v602, %v599
  %v658 = vpack.c.bf16 %v610, %v607
  %v659 = vpack.c.bf16 %v618, %v615
  %v660 = vpack.c.bf16 %v626, %v623
  %v693 = vunpack.c.l.b16 %v629
  %v694 = vunpack.c.h.b16 %v629
  %v695 = vunpack.c.l.b16 %v630
  %v696 = vunpack.c.h.b16 %v630
  %v697 = vunpack.c.l.b16 %v631
  %v698 = vunpack.c.h.b16 %v631
  %v699 = vunpack.c.l.b16 %v632
  %v700 = vunpack.c.h.b16 %v632
  %v701 = vunpack.c.l.b16 %v633
  %v702 = vunpack.c.h.b16 %v633
  %v703 = vunpack.c.l.b16 %v634
  %v704 = vunpack.c.h.b16 %v634
  %v705 = vunpack.c.l.b16 %v635
  %v706 = vunpack.c.h.b16 %v635
  %v707 = vunpack.c.l.b16 %v636
  %v708 = vunpack.c.h.b16 %v636
  %v709 = vunpack.c.l.b16 %v637
  %v710 = vunpack.c.h.b16 %v637
  %v711 = vunpack.c.l.b16 %v638
  %v712 = vunpack.c.h.b16 %v638
  %v713 = vunpack.c.l.b16 %v639
  %v714 = vunpack.c.h.b16 %v639
  %v715 = vunpack.c.l.b16 %v640
  %v716 = vunpack.c.h.b16 %v640
  %v717 = vunpack.c.l.b16 %v641
  %v718 = vunpack.c.h.b16 %v641
  %v719 = vunpack.c.l.b16 %v642
  %v720 = vunpack.c.h.b16 %v642
  %v721 = vunpack.c.l.b16 %v643
  %v722 = vunpack.c.h.b16 %v643
  %v723 = vunpack.c.l.b16 %v644
  %v724 = vunpack.c.h.b16 %v644
  %v725 = vunpack.c.l.b16 %v645
  %v726 = vunpack.c.h.b16 %v645
  %v727 = vunpack.c.l.b16 %v646
  %v728 = vunpack.c.h.b16 %v646
  %v729 = vunpack.c.l.b16 %v647
  %v730 = vunpack.c.h.b16 %v647
  %v731 = vunpack.c.l.b16 %v648
  %v732 = vunpack.c.h.b16 %v648
  %v733 = vunpack.c.l.b16 %v649
  %v734 = vunpack.c.h.b16 %v649
  %v735 = vunpack.c.l.b16 %v650
  %v736 = vunpack.c.h.b16 %v650
  %v737 = vunpack.c.l.b16 %v651
  %v738 = vunpack.c.h.b16 %v651
  %v739 = vunpack.c.l.b16 %v652
  %v740 = vunpack.c.h.b16 %v652
  %v741 = vunpack.c.l.b16 %v653
  %v742 = vunpack.c.h.b16 %v653
  %v743 = vunpack.c.l.b16 %v654
  %v744 = vunpack.c.h.b16 %v654
  %v745 = vunpack.c.l.b16 %v655
  %v746 = vunpack.c.h.b16 %v655
  %v747 = vunpack.c.l.b16 %v656
  %v748 = vunpack.c.h.b16 %v656
  %v749 = vunpack.c.l.b16 %v657
  %v750 = vunpack.c.h.b16 %v657
  %v751 = vunpack.c.l.b16 %v658
  %v752 = vunpack.c.h.b16 %v658
  %v753 = vunpack.c.l.b16 %v659
  %v754 = vunpack.c.h.b16 %v659
  %v755 = vunpack.c.l.b16 %v660
  %v756 = vunpack.c.h.b16 %v660
  %v757 = vpack.c.b16 %v693, %v693
  %v758 = vpack.c.b16 %v694, %v694
  %v759 = vpack.c.b16 %v695, %v695
  %v760 = vpack.c.b16 %v696, %v696
  %v761 = vpack.c.b16 %v697, %v697
  %v762 = vpack.c.b16 %v698, %v698
  %v763 = vpack.c.b16 %v699, %v699
  %v764 = vpack.c.b16 %v700, %v700
  %v765 = vpack.c.b16 %v701, %v701
  %v766 = vpack.c.b16 %v702, %v702
  %v767 = vpack.c.b16 %v703, %v703
  %v768 = vpack.c.b16 %v704, %v704
  %v769 = vpack.c.b16 %v705, %v705
  %v770 = vpack.c.b16 %v706, %v706
  %v771 = vpack.c.b16 %v707, %v707
  %v772 = vpack.c.b16 %v708, %v708
  %v773 = vpack.c.b16 %v709, %v709
  %v774 = vpack.c.b16 %v710, %v710
  %v775 = vpack.c.b16 %v711, %v711
  %v776 = vpack.c.b16 %v712, %v712
  %v777 = vpack.c.b16 %v713, %v713
  %v778 = vpack.c.b16 %v714, %v714
  %v779 = vpack.c.b16 %v715, %v715
  %v780 = vpack.c.b16 %v716, %v716
  %v781 = vpack.c.b16 %v717, %v717
  %v782 = vpack.c.b16 %v718, %v718
  %v783 = vpack.c.b16 %v719, %v719
  %v784 = vpack.c.b16 %v720, %v720
  %v785 = vpack.c.b16 %v721, %v721
  %v786 = vpack.c.b16 %v722, %v722
  %v787 = vpack.c.b16 %v723, %v723
  %v788 = vpack.c.b16 %v724, %v724
  %v789 = vpack.c.b16 %v725, %v725
  %v790 = vpack.c.b16 %v726, %v726
  %v791 = vpack.c.b16 %v727, %v727
  %v792 = vpack.c.b16 %v728, %v728
  %v793 = vpack.c.b16 %v729, %v729
  %v794 = vpack.c.b16 %v730, %v730
  %v795 = vpack.c.b16 %v731, %v731
  %v796 = vpack.c.b16 %v732, %v732
  %v797 = vpack.c.b16 %v733, %v733
  %v798 = vpack.c.b16 %v734, %v734
  %v799 = vpack.c.b16 %v735, %v735
  %v800 = vpack.c.b16 %v736, %v736
  %v801 = vpack.c.b16 %v737, %v737
  %v802 = vpack.c.b16 %v738, %v738
  %v803 = vpack.c.b16 %v739, %v739
  %v804 = vpack.c.b16 %v740, %v740
  %v805 = vpack.c.b16 %v741, %v741
  %v806 = vpack.c.b16 %v742, %v742
  %v807 = vpack.c.b16 %v743, %v743
  %v808 = vpack.c.b16 %v744, %v744
  %v809 = vpack.c.b16 %v745, %v745
  %v810 = vpack.c.b16 %v746, %v746
  %v811 = vpack.c.b16 %v747, %v747
  %v812 = vpack.c.b16 %v748, %v748
  %v813 = vpack.c.b16 %v749, %v749
  %v814 = vpack.c.b16 %v750, %v750
  %v815 = vpack.c.b16 %v751, %v751
  %v816 = vpack.c.b16 %v752, %v752
  %v817 = vpack.c.b16 %v753, %v753
  %v818 = vpack.c.b16 %v754, %v754
  %v819 = vpack.c.b16 %v755, %v755
  %v820 = vpack.c.b16 %v756, %v756
  %885 = vst [vmem:[%s4] sm:$0xf] %v757
  %886 = vst [vmem:[%s4 + $0x4] sm:$0xf] %v758
  %887 = vst [vmem:[%s4 + $0x8] sm:$0xf] %v759
  %888 = vst [vmem:[%s4 + $0xc] sm:$0xf] %v760
  %889 = vst [vmem:[%s4 + $0x10] sm:$0xf] %v761
  %890 = vst [vmem:[%s4 + $0x14] sm:$0xf] %v762
  %891 = vst [vmem:[%s4 + $0x18] sm:$0xf] %v763
  %892 = vst [vmem:[%s4 + $0x1c] sm:$0xf] %v764
  %893 = vst [vmem:[%s4 + $0x20] sm:$0xf] %v765
  %894 = vst [vmem:[%s4 + $0x24] sm:$0xf] %v766
  %895 = vst [vmem:[%s4 + $0x28] sm:$0xf] %v767
  %896 = vst [vmem:[%s4 + $0x2c] sm:$0xf] %v768
  %897 = vst [vmem:[%s4 + $0x30] sm:$0xf] %v769
  %898 = vst [vmem:[%s4 + $0x34] sm:$0xf] %v770
  %899 = vst [vmem:[%s4 + $0x38] sm:$0xf] %v771
  %900 = vst [vmem:[%s4 + $0x3c] sm:$0xf] %v772
  %901 = vst [vmem:[%s4 + $0x40] sm:$0xf] %v773
  %902 = vst [vmem:[%s4 + $0x44] sm:$0xf] %v774
  %903 = vst [vmem:[%s4 + $0x48] sm:$0xf] %v775
  %904 = vst [vmem:[%s4 + $0x4c] sm:$0xf] %v776
  %905 = vst [vmem:[%s4 + $0x50] sm:$0xf] %v777
  %906 = vst [vmem:[%s4 + $0x54] sm:$0xf] %v778
  %907 = vst [vmem:[%s4 + $0x58] sm:$0xf] %v779
  %908 = vst [vmem:[%s4 + $0x5c] sm:$0xf] %v780
  %909 = vst [vmem:[%s4 + $0x60] sm:$0xf] %v781
  %910 = vst [vmem:[%s4 + $0x64] sm:$0xf] %v782
  %911 = vst [vmem:[%s4 + $0x68] sm:$0xf] %v783
  %912 = vst [vmem:[%s4 + $0x6c] sm:$0xf] %v784
  %913 = vst [vmem:[%s4 + $0x70] sm:$0xf] %v785
  %914 = vst [vmem:[%s4 + $0x74] sm:$0xf] %v786
  %915 = vst [vmem:[%s4 + $0x78] sm:$0xf] %v787
  %916 = vst [vmem:[%s4 + $0x7c] sm:$0xf] %v788
  %917 = vst [vmem:[%s4 + $0x80] sm:$0xf] %v789
  %918 = vst [vmem:[%s4 + $0x84] sm:$0xf] %v790
  %919 = vst [vmem:[%s4 + $0x88] sm:$0xf] %v791
  %920 = vst [vmem:[%s4 + $0x8c] sm:$0xf] %v792
  %921 = vst [vmem:[%s4 + $0x90] sm:$0xf] %v793
  %922 = vst [vmem:[%s4 + $0x94] sm:$0xf] %v794
  %923 = vst [vmem:[%s4 + $0x98] sm:$0xf] %v795
  %924 = vst [vmem:[%s4 + $0x9c] sm:$0xf] %v796
  %925 = vst [vmem:[%s4 + $0xa0] sm:$0xf] %v797
  %926 = vst [vmem:[%s4 + $0xa4] sm:$0xf] %v798
  %927 = vst [vmem:[%s4 + $0xa8] sm:$0xf] %v799
  %928 = vst [vmem:[%s4 + $0xac] sm:$0xf] %v800
  %929 = vst [vmem:[%s4 + $0xb0] sm:$0xf] %v801
  %930 = vst [vmem:[%s4 + $0xb4] sm:$0xf] %v802
  %931 = vst [vmem:[%s4 + $0xb8] sm:$0xf] %v803
  %932 = vst [vmem:[%s4 + $0xbc] sm:$0xf] %v804
  %933 = vst [vmem:[%s4 + $0xc0] sm:$0xf] %v805
  %934 = vst [vmem:[%s4 + $0xc4] sm:$0xf] %v806
  %935 = vst [vmem:[%s4 + $0xc8] sm:$0xf] %v807
  %936 = vst [vmem:[%s4 + $0xcc] sm:$0xf] %v808
  %937 = vst [vmem:[%s4 + $0xd0] sm:$0xf] %v809
  %938 = vst [vmem:[%s4 + $0xd4] sm:$0xf] %v810
  %939 = vst [vmem:[%s4 + $0xd8] sm:$0xf] %v811
  %940 = vst [vmem:[%s4 + $0xdc] sm:$0xf] %v812
  %941 = vst [vmem:[%s4 + $0xe0] sm:$0xf] %v813
  %942 = vst [vmem:[%s4 + $0xe4] sm:$0xf] %v814
  %943 = vst [vmem:[%s4 + $0xe8] sm:$0xf] %v815
  %944 = vst [vmem:[%s4 + $0xec] sm:$0xf] %v816
  %945 = vst [vmem:[%s4 + $0xf0] sm:$0xf] %v817
  %946 = vst [vmem:[%s4 + $0xf4] sm:$0xf] %v818
  %947 = vst [vmem:[%s4 + $0xf8] sm:$0xf] %v819
  %948 = vst [vmem:[%s4 + $0xfc] sm:$0xf] %v820
  %v949 = vadd.f32 %v375, %v378
  %v950 = vadd.f32 %v949, %v383
  %v951 = vadd.f32 %v950, %v386
  %v952 = vadd.f32 %v951, %v391
  %v953 = vadd.f32 %v952, %v394
  %v954 = vadd.f32 %v953, %v399
  %v955 = vadd.f32 %v954, %v402
  %v956 = vadd.f32 %v955, %v407
  %v957 = vadd.f32 %v956, %v410
  %v958 = vadd.f32 %v957, %v415
  %v959 = vadd.f32 %v958, %v418
  %v960 = vadd.f32 %v959, %v423
  %v961 = vadd.f32 %v960, %v426
  %v962 = vadd.f32 %v961, %v431
  %v963 = vadd.f32 %v962, %v434
  %v964 = vadd.f32 %v963, %v439
  %v965 = vadd.f32 %v964, %v442
  %v966 = vadd.f32 %v965, %v447
  %v967 = vadd.f32 %v966, %v450
  %v968 = vadd.f32 %v967, %v455
  %v969 = vadd.f32 %v968, %v458
  %v970 = vadd.f32 %v969, %v463
  %v971 = vadd.f32 %v970, %v466
  %v972 = vadd.f32 %v971, %v471
  %v973 = vadd.f32 %v972, %v474
  %v974 = vadd.f32 %v973, %v479
  %v975 = vadd.f32 %v974, %v482
  %v976 = vadd.f32 %v975, %v487
  %v977 = vadd.f32 %v976, %v490
  %v978 = vadd.f32 %v977, %v495
  %v979 = vadd.f32 %v978, %v498
  %v980 = vadd.f32 %v979, %v503
  %v981 = vadd.f32 %v980, %v506
  %v982 = vadd.f32 %v981, %v511
  %v983 = vadd.f32 %v982, %v514
  %v984 = vadd.f32 %v983, %v519
  %v985 = vadd.f32 %v984, %v522
  %v986 = vadd.f32 %v985, %v527
  %v987 = vadd.f32 %v986, %v530
  %v988 = vadd.f32 %v987, %v535
  %v989 = vadd.f32 %v988, %v538
  %v990 = vadd.f32 %v989, %v543
  %v991 = vadd.f32 %v990, %v546
  %v992 = vadd.f32 %v991, %v551
  %v993 = vadd.f32 %v992, %v554
  %v994 = vadd.f32 %v993, %v559
  %v995 = vadd.f32 %v994, %v562
  %v996 = vadd.f32 %v995, %v567
  %v997 = vadd.f32 %v996, %v570
  %v998 = vadd.f32 %v997, %v575
  %v999 = vadd.f32 %v998, %v578
  %v1000 = vadd.f32 %v999, %v583
  %v1001 = vadd.f32 %v1000, %v586
  %v1002 = vadd.f32 %v1001, %v591
  %v1003 = vadd.f32 %v1002, %v594
  %v1004 = vadd.f32 %v1003, %v599
  %v1005 = vadd.f32 %v1004, %v602
  %v1006 = vadd.f32 %v1005, %v607
  %v1007 = vadd.f32 %v1006, %v610
  %v1008 = vadd.f32 %v1007, %v615
  %v1009 = vadd.f32 %v1008, %v618
  %v1010 = vadd.f32 %v1009, %v623
  %v1011 = vadd.f32 %v1010, %v626
  %v1012 = vrot.slane %v1011, 4
  %v1013 = vadd.f32 %v1011, %v1012
  %v1014 = vrot.slane %v1013, 2
  %v1015 = vadd.f32 %v1013, %v1014
  %v1016 = vrot.slane %v1015, 1
  %v1017 = vadd.f32 %v1015, %v1016
  %v1018 = vmul.f32 %v375, %v375
  %v1019 = vmul.f32 %v378, %v378
  %v1020 = vmul.f32 %v383, %v383
  %v1021 = vmul.f32 %v386, %v386
  %v1022 = vmul.f32 %v391, %v391
  %v1023 = vmul.f32 %v394, %v394
  %v1024 = vmul.f32 %v399, %v399
  %v1025 = vmul.f32 %v402, %v402
  %v1026 = vmul.f32 %v407, %v407
  %v1027 = vmul.f32 %v410, %v410
  %v1028 = vmul.f32 %v415, %v415
  %v1029 = vmul.f32 %v418, %v418
  %v1030 = vmul.f32 %v423, %v423
  %v1031 = vmul.f32 %v426, %v426
  %v1032 = vmul.f32 %v431, %v431
  %v1033 = vmul.f32 %v434, %v434
  %v1034 = vmul.f32 %v439, %v439
  %v1035 = vmul.f32 %v442, %v442
  %v1036 = vmul.f32 %v447, %v447
  %v1037 = vmul.f32 %v450, %v450
  %v1038 = vmul.f32 %v455, %v455
  %v1039 = vmul.f32 %v458, %v458
  %v1040 = vmul.f32 %v463, %v463
  %v1041 = vmul.f32 %v466, %v466
  %v1042 = vmul.f32 %v471, %v471
  %v1043 = vmul.f32 %v474, %v474
  %v1044 = vmul.f32 %v479, %v479
  %v1045 = vmul.f32 %v482, %v482
  %v1046 = vmul.f32 %v487, %v487
  %v1047 = vmul.f32 %v490, %v490
  %v1048 = vmul.f32 %v495, %v495
  %v1049 = vmul.f32 %v498, %v498
  %v1050 = vmul.f32 %v503, %v503
  %v1051 = vmul.f32 %v506, %v506
  %v1052 = vmul.f32 %v511, %v511
  %v1053 = vmul.f32 %v514, %v514
  %v1054 = vmul.f32 %v519, %v519
  %v1055 = vmul.f32 %v522, %v522
  %v1056 = vmul.f32 %v527, %v527
  %v1057 = vmul.f32 %v530, %v530
  %v1058 = vmul.f32 %v535, %v535
  %v1059 = vmul.f32 %v538, %v538
  %v1060 = vmul.f32 %v543, %v543
  %v1061 = vmul.f32 %v546, %v546
  %v1062 = vmul.f32 %v551, %v551
  %v1063 = vmul.f32 %v554, %v554
  %v1064 = vmul.f32 %v559, %v559
  %v1065 = vmul.f32 %v562, %v562
  %v1066 = vmul.f32 %v567, %v567
  %v1067 = vmul.f32 %v570, %v570
  %v1068 = vmul.f32 %v575, %v575
  %v1069 = vmul.f32 %v578, %v578
  %v1070 = vmul.f32 %v583, %v583
  %v1071 = vmul.f32 %v586, %v586
  %v1072 = vmul.f32 %v591, %v591
  %v1073 = vmul.f32 %v594, %v594
  %v1074 = vmul.f32 %v599, %v599
  %v1075 = vmul.f32 %v602, %v602
  %v1076 = vmul.f32 %v607, %v607
  %v1077 = vmul.f32 %v610, %v610
  %v1078 = vmul.f32 %v615, %v615
  %v1079 = vmul.f32 %v618, %v618
  %v1080 = vmul.f32 %v623, %v623
  %v1081 = vmul.f32 %v626, %v626
  %v1082 = vadd.f32 %v1018, %v1019
  %v1083 = vadd.f32 %v1082, %v1020
  %v1084 = vadd.f32 %v1083, %v1021
  %v1085 = vadd.f32 %v1084, %v1022
  %v1086 = vadd.f32 %v1085, %v1023
  %v1087 = vadd.f32 %v1086, %v1024
  %v1088 = vadd.f32 %v1087, %v1025
  %v1089 = vadd.f32 %v1088, %v1026
  %v1090 = vadd.f32 %v1089, %v1027
  %v1091 = vadd.f32 %v1090, %v1028
  %v1092 = vadd.f32 %v1091, %v1029
  %v1093 = vadd.f32 %v1092, %v1030
  %v1094 = vadd.f32 %v1093, %v1031
  %v1095 = vadd.f32 %v1094, %v1032
  %v1096 = vadd.f32 %v1095, %v1033
  %v1097 = vadd.f32 %v1096, %v1034
  %v1098 = vadd.f32 %v1097, %v1035
  %v1099 = vadd.f32 %v1098, %v1036
  %v1100 = vadd.f32 %v1099, %v1037
  %v1101 = vadd.f32 %v1100, %v1038
  %v1102 = vadd.f32 %v1101, %v1039
  %v1103 = vadd.f32 %v1102, %v1040
  %v1104 = vadd.f32 %v1103, %v1041
  %v1105 = vadd.f32 %v1104, %v1042
  %v1106 = vadd.f32 %v1105, %v1043
  %v1107 = vadd.f32 %v1106, %v1044
  %v1108 = vadd.f32 %v1107, %v1045
  %v1109 = vadd.f32 %v1108, %v1046
  %v1110 = vadd.f32 %v1109, %v1047
  %v1111 = vadd.f32 %v1110, %v1048
  %v1112 = vadd.f32 %v1111, %v1049
  %v1113 = vadd.f32 %v1112, %v1050
  %v1114 = vadd.f32 %v1113, %v1051
  %v1115 = vadd.f32 %v1114, %v1052
  %v1116 = vadd.f32 %v1115, %v1053
  %v1117 = vadd.f32 %v1116, %v1054
  %v1118 = vadd.f32 %v1117, %v1055
  %v1119 = vadd.f32 %v1118, %v1056
  %v1120 = vadd.f32 %v1119, %v1057
  %v1121 = vadd.f32 %v1120, %v1058
  %v1122 = vadd.f32 %v1121, %v1059
  %v1123 = vadd.f32 %v1122, %v1060
  %v1124 = vadd.f32 %v1123, %v1061
  %v1125 = vadd.f32 %v1124, %v1062
  %v1126 = vadd.f32 %v1125, %v1063
  %v1127 = vadd.f32 %v1126, %v1064
  %v1128 = vadd.f32 %v1127, %v1065
  %v1129 = vadd.f32 %v1128, %v1066
  %v1130 = vadd.f32 %v1129, %v1067
  %v1131 = vadd.f32 %v1130, %v1068
  %v1132 = vadd.f32 %v1131, %v1069
  %v1133 = vadd.f32 %v1132, %v1070
  %v1134 = vadd.f32 %v1133, %v1071
  %v1135 = vadd.f32 %v1134, %v1072
  %v1136 = vadd.f32 %v1135, %v1073
  %v1137 = vadd.f32 %v1136, %v1074
  %v1138 = vadd.f32 %v1137, %v1075
  %v1139 = vadd.f32 %v1138, %v1076
  %v1140 = vadd.f32 %v1139, %v1077
  %v1141 = vadd.f32 %v1140, %v1078
  %v1142 = vadd.f32 %v1141, %v1079
  %v1143 = vadd.f32 %v1142, %v1080
  %v1144 = vadd.f32 %v1143, %v1081
  %v1145 = vrot.slane %v1144, 4
  %v1146 = vadd.f32 %v1144, %v1145
  %v1147 = vrot.slane %v1146, 2
  %v1148 = vadd.f32 %v1146, %v1147
  %v1149 = vrot.slane %v1148, 1
  %v1150 = vadd.f32 %v1148, %v1149
  %vm1151 = vcmask 1040384
  %v1152 = vsel %vm1151, %v1017, %v1150
  %vm1153 = vcmask 1041408
  %v1154 = vsel %vm1153, %v1152, 0.0
  %1155 = vst [vmem:[%s5] sm:$0xff] %v1154
  // Predicated region
  $region18: #{bottleneck_forward.5} parent=0 // pred_check
    _
  $region19: #{bottleneck_forward.5} parent=0 // pred_check_branch
    %1157 = sbr.rel (0) target = $region21
  $region20: #{bottleneck_forward.5} parent=0 // pred_region
    _
  $region21: #{bottleneck_forward.5} parent=0 // pred_fallthru
    _
  // Predicated region
  $region22: #{bottleneck_forward.5} parent=0 // pred_check
    _
  $region23: #{bottleneck_forward.5} parent=0 // pred_check_branch
    %1159 = sbr.rel (0) target = $region25
  $region24: #{bottleneck_forward.5} parent=0 // pred_region
    _
  $region25: #{bottleneck_forward.5} parent=0 // pred_fallthru
    _
  // Predicated region
  $region26: #{bottleneck_forward.5} parent=0 // pred_check
    _
  $region27: #{bottleneck_forward.5} parent=0 // pred_check_branch
    %1161 = sbr.rel (0) target = $region29
  $region28: #{bottleneck_forward.5} parent=0 // pred_region
    _
  $region29: #{bottleneck_forward.5} parent=0 // pred_fallthru
    _
  // Predicated region
  $region30: #{bottleneck_forward.5} parent=0 // pred_check
    _
  $region31: #{bottleneck_forward.5} parent=0 // pred_check_branch
    %1163 = sbr.rel (0) target = $region33
  $region32: #{bottleneck_forward.5} parent=0 // pred_region
    _
  $region33: #{bottleneck_forward.5} parent=0 // pred_fallthru
    _

// kernel: bottleneck_forward.7
$region0: #{bottleneck_forward.7}
  #allocation0 [shape = 'u32[]', space=smem, size = 0x4, offset = 0x4, fixed_abs, tag = 'smem constant byte address 0x4 - core index']
  #allocation1 [shape = 'u32[144,128]{1,0:T(1,128)}', space=vmem, size = 0x12000, scoped, tag = 'internal scratch']
  %s0 = inlined_call_operand.vmem [shape: bf16[128,128], index: 0, kind: input, shape index: {}]
  %s1 = inlined_call_operand.vmem [shape: bf16[128,128], index: 1, kind: input, shape index: {}]
  %s2 = inlined_call_operand.vmem [shape: f32[1,128], index: 2, kind: input, shape index: {}]
  %s3 = inlined_call_operand.vmem [shape: f32[1,128], index: 3, kind: input, shape index: {}]
  %s4 = inlined_call_operand.vmem [shape: bf16[128,128], index: 4, kind: output, shape index: {0}]
  %s5 = inlined_call_operand.vmem [shape: f32[1,8,128], index: 5, kind: output, shape index: {1}]
  %6 = xla_tuple %s4, %s5
  %s7 = sld [smem:[#allocation0]]
  $region34: #{bottleneck_forward.7} parent=0
    _
  %s9 = ssub.s32 1, %s7
  %s10 = scalar_select 0, %s9, %s7
  // Predicated region
  $region2: #{bottleneck_forward.7} parent=0 // pred_check
    _
  $region3: #{bottleneck_forward.7} parent=0 // pred_check_branch
    %12 = sbr.rel (0) target = $region5
  $region4: #{bottleneck_forward.7} parent=0 // pred_region
    _
  $region5: #{bottleneck_forward.7} parent=0 // pred_fallthru
    _
  // Predicated region
  $region6: #{bottleneck_forward.7} parent=0 // pred_check
    _
  $region7: #{bottleneck_forward.7} parent=0 // pred_check_branch
    %14 = sbr.rel (0) target = $region9
  $region8: #{bottleneck_forward.7} parent=0 // pred_region
    _
  $region9: #{bottleneck_forward.7} parent=0 // pred_fallthru
    _
  // Predicated region
  $region10: #{bottleneck_forward.7} parent=0 // pred_check
    _
  $region11: #{bottleneck_forward.7} parent=0 // pred_check_branch
    %16 = sbr.rel (0) target = $region13
  $region12: #{bottleneck_forward.7} parent=0 // pred_region
    _
  $region13: #{bottleneck_forward.7} parent=0 // pred_fallthru
    _
  // Predicated region
  $region14: #{bottleneck_forward.7} parent=0 // pred_check
    _
  $region15: #{bottleneck_forward.7} parent=0 // pred_check_branch
    %18 = sbr.rel (0) target = $region17
  $region16: #{bottleneck_forward.7} parent=0 // pred_region
    _
  $region17: #{bottleneck_forward.7} parent=0 // pred_fallthru
    _
  %v20 = vld [vmem:[%s0] sm:$0xf]
  %v21 = vld [vmem:[%s0 + $0x4] sm:$0xf]
  %v22 = vld [vmem:[%s0 + $0x8] sm:$0xf]
  %v23 = vld [vmem:[%s0 + $0xc] sm:$0xf]
  %v24 = vld [vmem:[%s0 + $0x10] sm:$0xf]
  %v25 = vld [vmem:[%s0 + $0x14] sm:$0xf]
  %v26 = vld [vmem:[%s0 + $0x18] sm:$0xf]
  %v27 = vld [vmem:[%s0 + $0x1c] sm:$0xf]
  %v28 = vld [vmem:[%s0 + $0x20] sm:$0xf]
  %v29 = vld [vmem:[%s0 + $0x24] sm:$0xf]
  %v30 = vld [vmem:[%s0 + $0x28] sm:$0xf]
  %v31 = vld [vmem:[%s0 + $0x2c] sm:$0xf]
  %v32 = vld [vmem:[%s0 + $0x30] sm:$0xf]
  %v33 = vld [vmem:[%s0 + $0x34] sm:$0xf]
  %v34 = vld [vmem:[%s0 + $0x38] sm:$0xf]
  %v35 = vld [vmem:[%s0 + $0x3c] sm:$0xf]
  %v36 = vunpack.c.l.bf16 %v20
  %v37 = vunpack.c.l.bf16 %v21
  %v38 = vunpack.c.l.bf16 %v22
  %v39 = vunpack.c.l.bf16 %v23
  %v40 = vunpack.c.l.bf16 %v24
  %v41 = vunpack.c.l.bf16 %v25
  %v42 = vunpack.c.l.bf16 %v26
  %v43 = vunpack.c.l.bf16 %v27
  %v44 = vunpack.c.l.bf16 %v28
  %v45 = vunpack.c.l.bf16 %v29
  %v46 = vunpack.c.l.bf16 %v30
  %v47 = vunpack.c.l.bf16 %v31
  %v48 = vunpack.c.l.bf16 %v32
  %v49 = vunpack.c.l.bf16 %v33
  %v50 = vunpack.c.l.bf16 %v34
  %v51 = vunpack.c.l.bf16 %v35
  %v52 = vld [vmem:[%s2] sm:$0x1]
  %v54 = vlaneseq
  %v55 = vshrl.u32 %v54, 7
  %v56 = vsub.s32 0, %v55
  %v57 = vrot.slane %v52, %v56
  %v59 = vmul.f32 %v36, %v57
  %v60 = vmul.f32 %v37, %v57
  %v61 = vmul.f32 %v38, %v57
  %v62 = vmul.f32 %v39, %v57
  %v63 = vmul.f32 %v40, %v57
  %v64 = vmul.f32 %v41, %v57
  %v65 = vmul.f32 %v42, %v57
  %v66 = vmul.f32 %v43, %v57
  %v67 = vmul.f32 %v44, %v57
  %v68 = vmul.f32 %v45, %v57
  %v69 = vmul.f32 %v46, %v57
  %v70 = vmul.f32 %v47, %v57
  %v71 = vmul.f32 %v48, %v57
  %v72 = vmul.f32 %v49, %v57
  %v73 = vmul.f32 %v50, %v57
  %v74 = vmul.f32 %v51, %v57
  %v75 = vld [vmem:[%s3] sm:$0x1]
  %v77 = vlaneseq
  %v78 = vshrl.u32 %v77, 7
  %v79 = vsub.s32 0, %v78
  %v80 = vrot.slane %v75, %v79
  %v82 = vadd.f32 %v59, %v80
  %v83 = vadd.f32 %v60, %v80
  %v84 = vadd.f32 %v61, %v80
  %v85 = vadd.f32 %v62, %v80
  %v86 = vadd.f32 %v63, %v80
  %v87 = vadd.f32 %v64, %v80
  %v88 = vadd.f32 %v65, %v80
  %v89 = vadd.f32 %v66, %v80
  %v90 = vadd.f32 %v67, %v80
  %v91 = vadd.f32 %v68, %v80
  %v92 = vadd.f32 %v69, %v80
  %v93 = vadd.f32 %v70, %v80
  %v94 = vadd.f32 %v71, %v80
  %v95 = vadd.f32 %v72, %v80
  %v96 = vadd.f32 %v73, %v80
  %v97 = vadd.f32 %v74, %v80
  %v98 = vmax.f32 %v82, 0.0
  %v99 = vmax.f32 %v83, 0.0
  %v100 = vmax.f32 %v84, 0.0
  %v101 = vmax.f32 %v85, 0.0
  %v102 = vmax.f32 %v86, 0.0
  %v103 = vmax.f32 %v87, 0.0
  %v104 = vmax.f32 %v88, 0.0
  %v105 = vmax.f32 %v89, 0.0
  %v106 = vmax.f32 %v90, 0.0
  %v107 = vmax.f32 %v91, 0.0
  %v108 = vmax.f32 %v92, 0.0
  %v109 = vmax.f32 %v93, 0.0
  %v110 = vmax.f32 %v94, 0.0
  %v111 = vmax.f32 %v95, 0.0
  %v112 = vmax.f32 %v96, 0.0
  %v113 = vmax.f32 %v97, 0.0
  %v114 = vpack.c.bf16 %v99, %v98
  %v115 = vpack.c.bf16 %v101, %v100
  %v116 = vpack.c.bf16 %v103, %v102
  %v117 = vpack.c.bf16 %v105, %v104
  %v118 = vpack.c.bf16 %v107, %v106
  %v119 = vpack.c.bf16 %v109, %v108
  %v120 = vpack.c.bf16 %v111, %v110
  %v121 = vpack.c.bf16 %v113, %v112
  %v122 = vld [vmem:[%s1] sm:$0xf]
  %v123 = vld [vmem:[%s1 + $0x4] sm:$0xf]
  %v124 = vld [vmem:[%s1 + $0x8] sm:$0xf]
  %v125 = vld [vmem:[%s1 + $0xc] sm:$0xf]
  %v126 = vld [vmem:[%s1 + $0x10] sm:$0xf]
  %v127 = vld [vmem:[%s1 + $0x14] sm:$0xf]
  %v128 = vld [vmem:[%s1 + $0x18] sm:$0xf]
  %v129 = vld [vmem:[%s1 + $0x1c] sm:$0xf]
  %v130 = vld [vmem:[%s1 + $0x20] sm:$0xf]
  %v131 = vld [vmem:[%s1 + $0x24] sm:$0xf]
  %v132 = vld [vmem:[%s1 + $0x28] sm:$0xf]
  %v133 = vld [vmem:[%s1 + $0x2c] sm:$0xf]
  %v134 = vld [vmem:[%s1 + $0x30] sm:$0xf]
  %v135 = vld [vmem:[%s1 + $0x34] sm:$0xf]
  %v136 = vld [vmem:[%s1 + $0x38] sm:$0xf]
  %v137 = vld [vmem:[%s1 + $0x3c] sm:$0xf]
  %v154 = vunpack.c.l.b16 %v122
  %v155 = vunpack.c.l.b16 %v123
  %v156 = vunpack.c.l.b16 %v124
  %v157 = vunpack.c.l.b16 %v125
  %v158 = vunpack.c.l.b16 %v126
  %v159 = vunpack.c.l.b16 %v127
  %v160 = vunpack.c.l.b16 %v128
  %v161 = vunpack.c.l.b16 %v129
  %v162 = vunpack.c.l.b16 %v130
  %v163 = vunpack.c.l.b16 %v131
  %v164 = vunpack.c.l.b16 %v132
  %v165 = vunpack.c.l.b16 %v133
  %v166 = vunpack.c.l.b16 %v134
  %v167 = vunpack.c.l.b16 %v135
  %v168 = vunpack.c.l.b16 %v136
  %v169 = vunpack.c.l.b16 %v137
  %v170 = vpack.c.b16 %v155, %v154
  %v171 = vpack.c.b16 %v157, %v156
  %v172 = vpack.c.b16 %v159, %v158
  %v173 = vpack.c.b16 %v161, %v160
  %v174 = vpack.c.b16 %v163, %v162
  %v175 = vpack.c.b16 %v165, %v164
  %v176 = vpack.c.b16 %v167, %v166
  %v177 = vpack.c.b16 %v169, %v168
  %186 = vmatprep.subr.bf16.mxu0 0
  %187 = vmatpush1.bf16.msra.mxu0 %v177
  %188 = vmatprep.subr.bf16.mxu0 0
  %189 = vmatpush1.bf16.msra.mxu0 %v176
  %190 = vmatprep.subr.bf16.mxu0 0
  %191 = vmatpush1.bf16.msra.mxu0 %v175
  %192 = vmatprep.subr.bf16.mxu0 0
  %193 = vmatpush1.bf16.msra.mxu0 %v174
  %194 = vmatprep.subr.bf16.mxu0 0
  %195 = vmatpush1.bf16.msra.mxu0 %v173
  %196 = vmatprep.subr.bf16.mxu0 0
  %197 = vmatpush1.bf16.msra.mxu0 %v172
  %198 = vmatprep.subr.bf16.mxu0 0
  %199 = vmatpush1.bf16.msra.mxu0 %v171
  %200 = vmatprep.subr.bf16.mxu0 0
  %201 = vmatpush1.bf16.msra.mxu0 %v170
  %202 = vmatprep.subr.bf16.mxu0 0
  %203 = vmatpush2.bf16.msra.mxu0 0
  %204 = vmatprep.subr.bf16.mxu0 0
  %205 = vmatpush2.bf16.msra.mxu0 0
  %206 = vmatprep.subr.bf16.mxu0 0
  %207 = vmatpush2.bf16.msra.mxu0 0
  %208 = vmatprep.subr.bf16.mxu0 0
  %209 = vmatpush2.bf16.msra.mxu0 0
  %210 = vmatprep.subr.bf16.mxu0 0
  %211 = vmatpush2.bf16.msra.mxu0 0
  %212 = vmatprep.subr.bf16.mxu0 0
  %213 = vmatpush2.bf16.msra.mxu0 0
  %214 = vmatprep.subr.bf16.mxu0 0
  %215 = vmatpush2.bf16.msra.mxu0 0
  %216 = vmatprep.subr.bf16.mxu0 0
  %217 = vmatpush2.bf16.msra.mxu0 0
  %218 = vmatprep.mubr.bf16.mxu0 0
  %219 = vmatmul.mubr.bf16.gmra.mxu0 %v114
  %v220 = vpop.f32.mrf.mxu0
  %v221 = vadd.f32 0.0, %v220
  %v222 = vpop.f32.mrf.mxu0
  %v223 = vpop.f32.mrf.mxu0
  %v224 = vadd.f32 0.0, %v223
  %v225 = vpop.f32.mrf.mxu0
  %226 = vmatprep.mubr.bf16.mxu0 0
  %227 = vmatmul.mubr.bf16.gmra.mxu0 %v115
  %v228 = vpop.f32.mrf.mxu0
  %v229 = vadd.f32 0.0, %v228
  %v230 = vpop.f32.mrf.mxu0
  %v231 = vpop.f32.mrf.mxu0
  %v232 = vadd.f32 0.0, %v231
  %v233 = vpop.f32.mrf.mxu0
  %234 = vmatprep.mubr.bf16.mxu0 0
  %235 = vmatmul.mubr.bf16.gmra.mxu0 %v116
  %v236 = vpop.f32.mrf.mxu0
  %v237 = vadd.f32 0.0, %v236
  %v238 = vpop.f32.mrf.mxu0
  %v239 = vpop.f32.mrf.mxu0
  %v240 = vadd.f32 0.0, %v239
  %v241 = vpop.f32.mrf.mxu0
  %242 = vmatprep.mubr.bf16.mxu0 0
  %243 = vmatmul.mubr.bf16.gmra.mxu0 %v117
  %v244 = vpop.f32.mrf.mxu0
  %v245 = vadd.f32 0.0, %v244
  %v246 = vpop.f32.mrf.mxu0
  %v247 = vpop.f32.mrf.mxu0
  %v248 = vadd.f32 0.0, %v247
  %v249 = vpop.f32.mrf.mxu0
  %250 = vmatprep.mubr.bf16.mxu0 0
  %251 = vmatmul.mubr.bf16.gmra.mxu0 %v118
  %v252 = vpop.f32.mrf.mxu0
  %v253 = vadd.f32 0.0, %v252
  %v254 = vpop.f32.mrf.mxu0
  %v255 = vpop.f32.mrf.mxu0
  %v256 = vadd.f32 0.0, %v255
  %v257 = vpop.f32.mrf.mxu0
  %258 = vmatprep.mubr.bf16.mxu0 0
  %259 = vmatmul.mubr.bf16.gmra.mxu0 %v119
  %v260 = vpop.f32.mrf.mxu0
  %v261 = vadd.f32 0.0, %v260
  %v262 = vpop.f32.mrf.mxu0
  %v263 = vpop.f32.mrf.mxu0
  %v264 = vadd.f32 0.0, %v263
  %v265 = vpop.f32.mrf.mxu0
  %266 = vmatprep.mubr.bf16.mxu0 0
  %267 = vmatmul.mubr.bf16.gmra.mxu0 %v120
  %v268 = vpop.f32.mrf.mxu0
  %v269 = vadd.f32 0.0, %v268
  %v270 = vpop.f32.mrf.mxu0
  %v271 = vpop.f32.mrf.mxu0
  %v272 = vadd.f32 0.0, %v271
  %v273 = vpop.f32.mrf.mxu0
  %274 = vmatprep.mubr.bf16.mxu0 0
  %275 = vmatmul.mubr.bf16.gmra.mxu0 %v121
  %v276 = vpop.f32.mrf.mxu0
  %v277 = vadd.f32 0.0, %v276
  %v278 = vpop.f32.mrf.mxu0
  %v279 = vpop.f32.mrf.mxu0
  %v280 = vadd.f32 0.0, %v279
  %v281 = vpop.f32.mrf.mxu0
  %282 = vdwg.mxu0
  %v283 = vpack.c.bf16 %v224, %v221
  %v284 = vpack.c.bf16 %v232, %v229
  %v285 = vpack.c.bf16 %v240, %v237
  %v286 = vpack.c.bf16 %v248, %v245
  %v287 = vpack.c.bf16 %v256, %v253
  %v288 = vpack.c.bf16 %v264, %v261
  %v289 = vpack.c.bf16 %v272, %v269
  %v290 = vpack.c.bf16 %v280, %v277
  %v299 = vunpack.c.l.b16 %v283
  %v300 = vunpack.c.h.b16 %v283
  %v301 = vunpack.c.l.b16 %v284
  %v302 = vunpack.c.h.b16 %v284
  %v303 = vunpack.c.l.b16 %v285
  %v304 = vunpack.c.h.b16 %v285
  %v305 = vunpack.c.l.b16 %v286
  %v306 = vunpack.c.h.b16 %v286
  %v307 = vunpack.c.l.b16 %v287
  %v308 = vunpack.c.h.b16 %v287
  %v309 = vunpack.c.l.b16 %v288
  %v310 = vunpack.c.h.b16 %v288
  %v311 = vunpack.c.l.b16 %v289
  %v312 = vunpack.c.h.b16 %v289
  %v313 = vunpack.c.l.b16 %v290
  %v314 = vunpack.c.h.b16 %v290
  %v315 = vpack.c.b16 %v299, %v299
  %v316 = vpack.c.b16 %v300, %v300
  %v317 = vpack.c.b16 %v301, %v301
  %v318 = vpack.c.b16 %v302, %v302
  %v319 = vpack.c.b16 %v303, %v303
  %v320 = vpack.c.b16 %v304, %v304
  %v321 = vpack.c.b16 %v305, %v305
  %v322 = vpack.c.b16 %v306, %v306
  %v323 = vpack.c.b16 %v307, %v307
  %v324 = vpack.c.b16 %v308, %v308
  %v325 = vpack.c.b16 %v309, %v309
  %v326 = vpack.c.b16 %v310, %v310
  %v327 = vpack.c.b16 %v311, %v311
  %v328 = vpack.c.b16 %v312, %v312
  %v329 = vpack.c.b16 %v313, %v313
  %v330 = vpack.c.b16 %v314, %v314
  %347 = vst [vmem:[%s4] sm:$0xf] %v315
  %348 = vst [vmem:[%s4 + $0x4] sm:$0xf] %v316
  %349 = vst [vmem:[%s4 + $0x8] sm:$0xf] %v317
  %350 = vst [vmem:[%s4 + $0xc] sm:$0xf] %v318
  %351 = vst [vmem:[%s4 + $0x10] sm:$0xf] %v319
  %352 = vst [vmem:[%s4 + $0x14] sm:$0xf] %v320
  %353 = vst [vmem:[%s4 + $0x18] sm:$0xf] %v321
  %354 = vst [vmem:[%s4 + $0x1c] sm:$0xf] %v322
  %355 = vst [vmem:[%s4 + $0x20] sm:$0xf] %v323
  %356 = vst [vmem:[%s4 + $0x24] sm:$0xf] %v324
  %357 = vst [vmem:[%s4 + $0x28] sm:$0xf] %v325
  %358 = vst [vmem:[%s4 + $0x2c] sm:$0xf] %v326
  %359 = vst [vmem:[%s4 + $0x30] sm:$0xf] %v327
  %360 = vst [vmem:[%s4 + $0x34] sm:$0xf] %v328
  %361 = vst [vmem:[%s4 + $0x38] sm:$0xf] %v329
  %362 = vst [vmem:[%s4 + $0x3c] sm:$0xf] %v330
  %v363 = vadd.f32 %v221, %v224
  %v364 = vadd.f32 %v363, %v229
  %v365 = vadd.f32 %v364, %v232
  %v366 = vadd.f32 %v365, %v237
  %v367 = vadd.f32 %v366, %v240
  %v368 = vadd.f32 %v367, %v245
  %v369 = vadd.f32 %v368, %v248
  %v370 = vadd.f32 %v369, %v253
  %v371 = vadd.f32 %v370, %v256
  %v372 = vadd.f32 %v371, %v261
  %v373 = vadd.f32 %v372, %v264
  %v374 = vadd.f32 %v373, %v269
  %v375 = vadd.f32 %v374, %v272
  %v376 = vadd.f32 %v375, %v277
  %v377 = vadd.f32 %v376, %v280
  %v378 = vrot.slane %v377, 4
  %v379 = vadd.f32 %v377, %v378
  %v380 = vrot.slane %v379, 2
  %v381 = vadd.f32 %v379, %v380
  %v382 = vrot.slane %v381, 1
  %v383 = vadd.f32 %v381, %v382
  %v384 = vmul.f32 %v221, %v221
  %v385 = vmul.f32 %v224, %v224
  %v386 = vmul.f32 %v229, %v229
  %v387 = vmul.f32 %v232, %v232
  %v388 = vmul.f32 %v237, %v237
  %v389 = vmul.f32 %v240, %v240
  %v390 = vmul.f32 %v245, %v245
  %v391 = vmul.f32 %v248, %v248
  %v392 = vmul.f32 %v253, %v253
  %v393 = vmul.f32 %v256, %v256
  %v394 = vmul.f32 %v261, %v261
  %v395 = vmul.f32 %v264, %v264
  %v396 = vmul.f32 %v269, %v269
  %v397 = vmul.f32 %v272, %v272
  %v398 = vmul.f32 %v277, %v277
  %v399 = vmul.f32 %v280, %v280
  %v400 = vadd.f32 %v384, %v385
  %v401 = vadd.f32 %v400, %v386
  %v402 = vadd.f32 %v401, %v387
  %v403 = vadd.f32 %v402, %v388
  %v404 = vadd.f32 %v403, %v389
  %v405 = vadd.f32 %v404, %v390
  %v406 = vadd.f32 %v405, %v391
  %v407 = vadd.f32 %v406, %v392
  %v408 = vadd.f32 %v407, %v393
  %v409 = vadd.f32 %v408, %v394
  %v410 = vadd.f32 %v409, %v395
  %v411 = vadd.f32 %v410, %v396
  %v412 = vadd.f32 %v411, %v397
  %v413 = vadd.f32 %v412, %v398
  %v414 = vadd.f32 %v413, %v399
  %v415 = vrot.slane %v414, 4
  %v416 = vadd.f32 %v414, %v415
  %v417 = vrot.slane %v416, 2
  %v418 = vadd.f32 %v416, %v417
  %v419 = vrot.slane %v418, 1
  %v420 = vadd.f32 %v418, %v419
  %vm421 = vcmask 1040384
  %v422 = vsel %vm421, %v383, %v420
  %vm423 = vcmask 1041408
  %v424 = vsel %vm423, %v422, 0.0
  %425 = vst [vmem:[%s5] sm:$0xff] %v424
  // Predicated region
  $region18: #{bottleneck_forward.7} parent=0 // pred_check
    _
  $region19: #{bottleneck_forward.7} parent=0 // pred_check_branch
    %427 = sbr.rel (0) target = $region21
  $region20: #{bottleneck_forward.7} parent=0 // pred_region
    _
  $region21: #{bottleneck_forward.7} parent=0 // pred_fallthru
    _
  // Predicated region
  $region22: #{bottleneck_forward.7} parent=0 // pred_check
    _
  $region23: #{bottleneck_forward.7} parent=0 // pred_check_branch
    %429 = sbr.rel (0) target = $region25
  $region24: #{bottleneck_forward.7} parent=0 // pred_region
    _
  $region25: #{bottleneck_forward.7} parent=0 // pred_fallthru
    _
  // Predicated region
  $region26: #{bottleneck_forward.7} parent=0 // pred_check
    _
  $region27: #{bottleneck_forward.7} parent=0 // pred_check_branch
    %431 = sbr.rel (0) target = $region29
  $region28: #{bottleneck_forward.7} parent=0 // pred_region
    _
  $region29: #{bottleneck_forward.7} parent=0 // pred_fallthru
    _
  // Predicated region
  $region30: #{bottleneck_forward.7} parent=0 // pred_check
    _
  $region31: #{bottleneck_forward.7} parent=0 // pred_check_branch
    %433 = sbr.rel (0) target = $region33
  $region32: #{bottleneck_forward.7} parent=0 // pred_region
    _
  $region33: #{bottleneck_forward.7} parent=0 // pred_fallthru
    _

// kernel: bottleneck_forward.8
$region0: #{bottleneck_forward.8}
  #allocation0 [shape = 'u32[]', space=smem, size = 0x4, offset = 0x4, fixed_abs, tag = 'smem constant byte address 0x4 - core index']
  #allocation1 [shape = 'u32[144,128]{1,0:T(1,128)}', space=vmem, size = 0x12000, scoped, tag = 'internal scratch']
  %s0 = inlined_call_operand.vmem [shape: bf16[128,128], index: 0, kind: input, shape index: {}]
  %s1 = inlined_call_operand.vmem [shape: bf16[128,128], index: 1, kind: input, shape index: {}]
  %s2 = inlined_call_operand.vmem [shape: f32[1,128], index: 2, kind: input, shape index: {}]
  %s3 = inlined_call_operand.vmem [shape: f32[1,128], index: 3, kind: input, shape index: {}]
  %s4 = inlined_call_operand.vmem [shape: bf16[128,128], index: 4, kind: output, shape index: {0}]
  %s5 = inlined_call_operand.vmem [shape: f32[1,8,128], index: 5, kind: output, shape index: {1}]
  %6 = xla_tuple %s4, %s5
  %s7 = sld [smem:[#allocation0]]
  $region34: #{bottleneck_forward.8} parent=0
    _
  %s9 = ssub.s32 1, %s7
  %s10 = scalar_select 0, %s9, %s7
  // Predicated region
  $region2: #{bottleneck_forward.8} parent=0 // pred_check
    _
  $region3: #{bottleneck_forward.8} parent=0 // pred_check_branch
    %12 = sbr.rel (0) target = $region5
  $region4: #{bottleneck_forward.8} parent=0 // pred_region
    _
  $region5: #{bottleneck_forward.8} parent=0 // pred_fallthru
    _
  // Predicated region
  $region6: #{bottleneck_forward.8} parent=0 // pred_check
    _
  $region7: #{bottleneck_forward.8} parent=0 // pred_check_branch
    %14 = sbr.rel (0) target = $region9
  $region8: #{bottleneck_forward.8} parent=0 // pred_region
    _
  $region9: #{bottleneck_forward.8} parent=0 // pred_fallthru
    _
  // Predicated region
  $region10: #{bottleneck_forward.8} parent=0 // pred_check
    _
  $region11: #{bottleneck_forward.8} parent=0 // pred_check_branch
    %16 = sbr.rel (0) target = $region13
  $region12: #{bottleneck_forward.8} parent=0 // pred_region
    _
  $region13: #{bottleneck_forward.8} parent=0 // pred_fallthru
    _
  // Predicated region
  $region14: #{bottleneck_forward.8} parent=0 // pred_check
    _
  $region15: #{bottleneck_forward.8} parent=0 // pred_check_branch
    %18 = sbr.rel (0) target = $region17
  $region16: #{bottleneck_forward.8} parent=0 // pred_region
    _
  $region17: #{bottleneck_forward.8} parent=0 // pred_fallthru
    _
  %v20 = vld [vmem:[%s0] sm:$0xf]
  %v21 = vld [vmem:[%s0 + $0x4] sm:$0xf]
  %v22 = vld [vmem:[%s0 + $0x8] sm:$0xf]
  %v23 = vld [vmem:[%s0 + $0xc] sm:$0xf]
  %v24 = vld [vmem:[%s0 + $0x10] sm:$0xf]
  %v25 = vld [vmem:[%s0 + $0x14] sm:$0xf]
  %v26 = vld [vmem:[%s0 + $0x18] sm:$0xf]
  %v27 = vld [vmem:[%s0 + $0x1c] sm:$0xf]
  %v28 = vld [vmem:[%s0 + $0x20] sm:$0xf]
  %v29 = vld [vmem:[%s0 + $0x24] sm:$0xf]
  %v30 = vld [vmem:[%s0 + $0x28] sm:$0xf]
  %v31 = vld [vmem:[%s0 + $0x2c] sm:$0xf]
  %v32 = vld [vmem:[%s0 + $0x30] sm:$0xf]
  %v33 = vld [vmem:[%s0 + $0x34] sm:$0xf]
  %v34 = vld [vmem:[%s0 + $0x38] sm:$0xf]
  %v35 = vld [vmem:[%s0 + $0x3c] sm:$0xf]
  %v36 = vld [vmem:[%s1] sm:$0xf]
  %v37 = vld [vmem:[%s1 + $0x4] sm:$0xf]
  %v38 = vld [vmem:[%s1 + $0x8] sm:$0xf]
  %v39 = vld [vmem:[%s1 + $0xc] sm:$0xf]
  %v40 = vld [vmem:[%s1 + $0x10] sm:$0xf]
  %v41 = vld [vmem:[%s1 + $0x14] sm:$0xf]
  %v42 = vld [vmem:[%s1 + $0x18] sm:$0xf]
  %v43 = vld [vmem:[%s1 + $0x1c] sm:$0xf]
  %v44 = vld [vmem:[%s1 + $0x20] sm:$0xf]
  %v45 = vld [vmem:[%s1 + $0x24] sm:$0xf]
  %v46 = vld [vmem:[%s1 + $0x28] sm:$0xf]
  %v47 = vld [vmem:[%s1 + $0x2c] sm:$0xf]
  %v48 = vld [vmem:[%s1 + $0x30] sm:$0xf]
  %v49 = vld [vmem:[%s1 + $0x34] sm:$0xf]
  %v50 = vld [vmem:[%s1 + $0x38] sm:$0xf]
  %v51 = vld [vmem:[%s1 + $0x3c] sm:$0xf]
  %v68 = vunpack.c.l.b16 %v20
  %v69 = vunpack.c.l.b16 %v21
  %v70 = vunpack.c.l.b16 %v22
  %v71 = vunpack.c.l.b16 %v23
  %v72 = vunpack.c.l.b16 %v24
  %v73 = vunpack.c.l.b16 %v25
  %v74 = vunpack.c.l.b16 %v26
  %v75 = vunpack.c.l.b16 %v27
  %v76 = vunpack.c.l.b16 %v28
  %v77 = vunpack.c.l.b16 %v29
  %v78 = vunpack.c.l.b16 %v30
  %v79 = vunpack.c.l.b16 %v31
  %v80 = vunpack.c.l.b16 %v32
  %v81 = vunpack.c.l.b16 %v33
  %v82 = vunpack.c.l.b16 %v34
  %v83 = vunpack.c.l.b16 %v35
  %v84 = vpack.c.b16 %v69, %v68
  %v85 = vpack.c.b16 %v71, %v70
  %v86 = vpack.c.b16 %v73, %v72
  %v87 = vpack.c.b16 %v75, %v74
  %v88 = vpack.c.b16 %v77, %v76
  %v89 = vpack.c.b16 %v79, %v78
  %v90 = vpack.c.b16 %v81, %v80
  %v91 = vpack.c.b16 %v83, %v82
  %v116 = vunpack.c.l.b16 %v36
  %v117 = vunpack.c.l.b16 %v37
  %v118 = vunpack.c.l.b16 %v38
  %v119 = vunpack.c.l.b16 %v39
  %v120 = vunpack.c.l.b16 %v40
  %v121 = vunpack.c.l.b16 %v41
  %v122 = vunpack.c.l.b16 %v42
  %v123 = vunpack.c.l.b16 %v43
  %v124 = vunpack.c.l.b16 %v44
  %v125 = vunpack.c.l.b16 %v45
  %v126 = vunpack.c.l.b16 %v46
  %v127 = vunpack.c.l.b16 %v47
  %v128 = vunpack.c.l.b16 %v48
  %v129 = vunpack.c.l.b16 %v49
  %v130 = vunpack.c.l.b16 %v50
  %v131 = vunpack.c.l.b16 %v51
  %v132 = vpack.c.b16 %v117, %v116
  %v133 = vpack.c.b16 %v119, %v118
  %v134 = vpack.c.b16 %v121, %v120
  %v135 = vpack.c.b16 %v123, %v122
  %v136 = vpack.c.b16 %v125, %v124
  %v137 = vpack.c.b16 %v127, %v126
  %v138 = vpack.c.b16 %v129, %v128
  %v139 = vpack.c.b16 %v131, %v130
  %148 = vmatprep.subr.bf16.mxu0 0
  %149 = vmatpush1.bf16.msra.mxu0 %v139
  %150 = vmatprep.subr.bf16.mxu0 0
  %151 = vmatpush1.bf16.msra.mxu0 %v138
  %152 = vmatprep.subr.bf16.mxu0 0
  %153 = vmatpush1.bf16.msra.mxu0 %v137
  %154 = vmatprep.subr.bf16.mxu0 0
  %155 = vmatpush1.bf16.msra.mxu0 %v136
  %156 = vmatprep.subr.bf16.mxu0 0
  %157 = vmatpush1.bf16.msra.mxu0 %v135
  %158 = vmatprep.subr.bf16.mxu0 0
  %159 = vmatpush1.bf16.msra.mxu0 %v134
  %160 = vmatprep.subr.bf16.mxu0 0
  %161 = vmatpush1.bf16.msra.mxu0 %v133
  %162 = vmatprep.subr.bf16.mxu0 0
  %163 = vmatpush1.bf16.msra.mxu0 %v132
  %164 = vmatprep.subr.bf16.mxu0 0
  %165 = vmatpush2.bf16.msra.mxu0 0
  %166 = vmatprep.subr.bf16.mxu0 0
  %167 = vmatpush2.bf16.msra.mxu0 0
  %168 = vmatprep.subr.bf16.mxu0 0
  %169 = vmatpush2.bf16.msra.mxu0 0
  %170 = vmatprep.subr.bf16.mxu0 0
  %171 = vmatpush2.bf16.msra.mxu0 0
  %172 = vmatprep.subr.bf16.mxu0 0
  %173 = vmatpush2.bf16.msra.mxu0 0
  %174 = vmatprep.subr.bf16.mxu0 0
  %175 = vmatpush2.bf16.msra.mxu0 0
  %176 = vmatprep.subr.bf16.mxu0 0
  %177 = vmatpush2.bf16.msra.mxu0 0
  %178 = vmatprep.subr.bf16.mxu0 0
  %179 = vmatpush2.bf16.msra.mxu0 0
  %180 = vmatprep.mubr.bf16.mxu0 0
  %181 = vmatmul.mubr.bf16.gmra.mxu0 %v84
  %v182 = vpop.f32.mrf.mxu0
  %v183 = vadd.f32 0.0, %v182
  %v184 = vpop.f32.mrf.mxu0
  %v185 = vpop.f32.mrf.mxu0
  %v186 = vadd.f32 0.0, %v185
  %v187 = vpop.f32.mrf.mxu0
  %188 = vmatprep.mubr.bf16.mxu0 0
  %189 = vmatmul.mubr.bf16.gmra.mxu0 %v85
  %v190 = vpop.f32.mrf.mxu0
  %v191 = vadd.f32 0.0, %v190
  %v192 = vpop.f32.mrf.mxu0
  %v193 = vpop.f32.mrf.mxu0
  %v194 = vadd.f32 0.0, %v193
  %v195 = vpop.f32.mrf.mxu0
  %196 = vmatprep.mubr.bf16.mxu0 0
  %197 = vmatmul.mubr.bf16.gmra.mxu0 %v86
  %v198 = vpop.f32.mrf.mxu0
  %v199 = vadd.f32 0.0, %v198
  %v200 = vpop.f32.mrf.mxu0
  %v201 = vpop.f32.mrf.mxu0
  %v202 = vadd.f32 0.0, %v201
  %v203 = vpop.f32.mrf.mxu0
  %204 = vmatprep.mubr.bf16.mxu0 0
  %205 = vmatmul.mubr.bf16.gmra.mxu0 %v87
  %v206 = vpop.f32.mrf.mxu0
  %v207 = vadd.f32 0.0, %v206
  %v208 = vpop.f32.mrf.mxu0
  %v209 = vpop.f32.mrf.mxu0
  %v210 = vadd.f32 0.0, %v209
  %v211 = vpop.f32.mrf.mxu0
  %212 = vmatprep.mubr.bf16.mxu0 0
  %213 = vmatmul.mubr.bf16.gmra.mxu0 %v88
  %v214 = vpop.f32.mrf.mxu0
  %v215 = vadd.f32 0.0, %v214
  %v216 = vpop.f32.mrf.mxu0
  %v217 = vpop.f32.mrf.mxu0
  %v218 = vadd.f32 0.0, %v217
  %v219 = vpop.f32.mrf.mxu0
  %220 = vmatprep.mubr.bf16.mxu0 0
  %221 = vmatmul.mubr.bf16.gmra.mxu0 %v89
  %v222 = vpop.f32.mrf.mxu0
  %v223 = vadd.f32 0.0, %v222
  %v224 = vpop.f32.mrf.mxu0
  %v225 = vpop.f32.mrf.mxu0
  %v226 = vadd.f32 0.0, %v225
  %v227 = vpop.f32.mrf.mxu0
  %228 = vmatprep.mubr.bf16.mxu0 0
  %229 = vmatmul.mubr.bf16.gmra.mxu0 %v90
  %v230 = vpop.f32.mrf.mxu0
  %v231 = vadd.f32 0.0, %v230
  %v232 = vpop.f32.mrf.mxu0
  %v233 = vpop.f32.mrf.mxu0
  %v234 = vadd.f32 0.0, %v233
  %v235 = vpop.f32.mrf.mxu0
  %236 = vmatprep.mubr.bf16.mxu0 0
  %237 = vmatmul.mubr.bf16.gmra.mxu0 %v91
  %v238 = vpop.f32.mrf.mxu0
  %v239 = vadd.f32 0.0, %v238
  %v240 = vpop.f32.mrf.mxu0
  %v241 = vpop.f32.mrf.mxu0
  %v242 = vadd.f32 0.0, %v241
  %v243 = vpop.f32.mrf.mxu0
  %244 = vdwg.mxu0
  %v245 = vpack.c.bf16 %v186, %v183
  %v246 = vpack.c.bf16 %v194, %v191
  %v247 = vpack.c.bf16 %v202, %v199
  %v248 = vpack.c.bf16 %v210, %v207
  %v249 = vpack.c.bf16 %v218, %v215
  %v250 = vpack.c.bf16 %v226, %v223
  %v251 = vpack.c.bf16 %v234, %v231
  %v252 = vpack.c.bf16 %v242, %v239
  %v261 = vunpack.c.l.b16 %v245
  %v262 = vunpack.c.h.b16 %v245
  %v263 = vunpack.c.l.b16 %v246
  %v264 = vunpack.c.h.b16 %v246
  %v265 = vunpack.c.l.b16 %v247
  %v266 = vunpack.c.h.b16 %v247
  %v267 = vunpack.c.l.b16 %v248
  %v268 = vunpack.c.h.b16 %v248
  %v269 = vunpack.c.l.b16 %v249
  %v270 = vunpack.c.h.b16 %v249
  %v271 = vunpack.c.l.b16 %v250
  %v272 = vunpack.c.h.b16 %v250
  %v273 = vunpack.c.l.b16 %v251
  %v274 = vunpack.c.h.b16 %v251
  %v275 = vunpack.c.l.b16 %v252
  %v276 = vunpack.c.h.b16 %v252
  %v277 = vpack.c.b16 %v261, %v261
  %v278 = vpack.c.b16 %v262, %v262
  %v279 = vpack.c.b16 %v263, %v263
  %v280 = vpack.c.b16 %v264, %v264
  %v281 = vpack.c.b16 %v265, %v265
  %v282 = vpack.c.b16 %v266, %v266
  %v283 = vpack.c.b16 %v267, %v267
  %v284 = vpack.c.b16 %v268, %v268
  %v285 = vpack.c.b16 %v269, %v269
  %v286 = vpack.c.b16 %v270, %v270
  %v287 = vpack.c.b16 %v271, %v271
  %v288 = vpack.c.b16 %v272, %v272
  %v289 = vpack.c.b16 %v273, %v273
  %v290 = vpack.c.b16 %v274, %v274
  %v291 = vpack.c.b16 %v275, %v275
  %v292 = vpack.c.b16 %v276, %v276
  %309 = vst [vmem:[%s4] sm:$0xf] %v277
  %310 = vst [vmem:[%s4 + $0x4] sm:$0xf] %v278
  %311 = vst [vmem:[%s4 + $0x8] sm:$0xf] %v279
  %312 = vst [vmem:[%s4 + $0xc] sm:$0xf] %v280
  %313 = vst [vmem:[%s4 + $0x10] sm:$0xf] %v281
  %314 = vst [vmem:[%s4 + $0x14] sm:$0xf] %v282
  %315 = vst [vmem:[%s4 + $0x18] sm:$0xf] %v283
  %316 = vst [vmem:[%s4 + $0x1c] sm:$0xf] %v284
  %317 = vst [vmem:[%s4 + $0x20] sm:$0xf] %v285
  %318 = vst [vmem:[%s4 + $0x24] sm:$0xf] %v286
  %319 = vst [vmem:[%s4 + $0x28] sm:$0xf] %v287
  %320 = vst [vmem:[%s4 + $0x2c] sm:$0xf] %v288
  %321 = vst [vmem:[%s4 + $0x30] sm:$0xf] %v289
  %322 = vst [vmem:[%s4 + $0x34] sm:$0xf] %v290
  %323 = vst [vmem:[%s4 + $0x38] sm:$0xf] %v291
  %324 = vst [vmem:[%s4 + $0x3c] sm:$0xf] %v292
  %v325 = vadd.f32 %v183, %v186
  %v326 = vadd.f32 %v325, %v191
  %v327 = vadd.f32 %v326, %v194
  %v328 = vadd.f32 %v327, %v199
  %v329 = vadd.f32 %v328, %v202
  %v330 = vadd.f32 %v329, %v207
  %v331 = vadd.f32 %v330, %v210
  %v332 = vadd.f32 %v331, %v215
  %v333 = vadd.f32 %v332, %v218
  %v334 = vadd.f32 %v333, %v223
  %v335 = vadd.f32 %v334, %v226
  %v336 = vadd.f32 %v335, %v231
  %v337 = vadd.f32 %v336, %v234
  %v338 = vadd.f32 %v337, %v239
  %v339 = vadd.f32 %v338, %v242
  %v340 = vrot.slane %v339, 4
  %v341 = vadd.f32 %v339, %v340
  %v342 = vrot.slane %v341, 2
  %v343 = vadd.f32 %v341, %v342
  %v344 = vrot.slane %v343, 1
  %v345 = vadd.f32 %v343, %v344
  %v346 = vmul.f32 %v183, %v183
  %v347 = vmul.f32 %v186, %v186
  %v348 = vmul.f32 %v191, %v191
  %v349 = vmul.f32 %v194, %v194
  %v350 = vmul.f32 %v199, %v199
  %v351 = vmul.f32 %v202, %v202
  %v352 = vmul.f32 %v207, %v207
  %v353 = vmul.f32 %v210, %v210
  %v354 = vmul.f32 %v215, %v215
  %v355 = vmul.f32 %v218, %v218
  %v356 = vmul.f32 %v223, %v223
  %v357 = vmul.f32 %v226, %v226
  %v358 = vmul.f32 %v231, %v231
  %v359 = vmul.f32 %v234, %v234
  %v360 = vmul.f32 %v239, %v239
  %v361 = vmul.f32 %v242, %v242
  %v362 = vadd.f32 %v346, %v347
  %v363 = vadd.f32 %v362, %v348
  %v364 = vadd.f32 %v363, %v349
  %v365 = vadd.f32 %v364, %v350
  %v366 = vadd.f32 %v365, %v351
  %v367 = vadd.f32 %v366, %v352
  %v368 = vadd.f32 %v367, %v353
  %v369 = vadd.f32 %v368, %v354
  %v370 = vadd.f32 %v369, %v355
  %v371 = vadd.f32 %v370, %v356
  %v372 = vadd.f32 %v371, %v357
  %v373 = vadd.f32 %v372, %v358
  %v374 = vadd.f32 %v373, %v359
  %v375 = vadd.f32 %v374, %v360
  %v376 = vadd.f32 %v375, %v361
  %v377 = vrot.slane %v376, 4
  %v378 = vadd.f32 %v376, %v377
  %v379 = vrot.slane %v378, 2
  %v380 = vadd.f32 %v378, %v379
  %v381 = vrot.slane %v380, 1
  %v382 = vadd.f32 %v380, %v381
  %vm383 = vcmask 1040384
  %v384 = vsel %vm383, %v345, %v382
  %vm385 = vcmask 1041408
  %v386 = vsel %vm385, %v384, 0.0
  %387 = vst [vmem:[%s5] sm:$0xff] %v386
  // Predicated region
  $region18: #{bottleneck_forward.8} parent=0 // pred_check
    _
  $region19: #{bottleneck_forward.8} parent=0 // pred_check_branch
    %389 = sbr.rel (0) target = $region21
  $region20: #{bottleneck_forward.8} parent=0 // pred_region
    _
  $region21: #{bottleneck_forward.8} parent=0 // pred_fallthru
    _
  // Predicated region
  $region22: #{bottleneck_forward.8} parent=0 // pred_check
    _
  $region23: #{bottleneck_forward.8} parent=0 // pred_check_branch
    %391 = sbr.rel (0) target = $region25
  $region24: #{bottleneck_forward.8} parent=0 // pred_region
    _
  $region25: #{bottleneck_forward.8} parent=0 // pred_fallthru
    _
  // Predicated region
  $region26: #{bottleneck_forward.8} parent=0 // pred_check
    _
  $region27: #{bottleneck_forward.8} parent=0 // pred_check_branch
    %393 = sbr.rel (0) target = $region29
  $region28: #{bottleneck_forward.8} parent=0 // pred_region
    _
  $region29: #{bottleneck_forward.8} parent=0 // pred_fallthru
    _
  // Predicated region
  $region30: #{bottleneck_forward.8} parent=0 // pred_check
    _
  $region31: #{bottleneck_forward.8} parent=0 // pred_check_branch
    %395 = sbr.rel (0) target = $region33
  $region32: #{bottleneck_forward.8} parent=0 // pred_region
    _
  $region33: #{bottleneck_forward.8} parent=0 // pred_fallthru
    _

// kernel: bottleneck_forward.9
$region0: #{bottleneck_forward.9}
  #allocation0 [shape = 'u32[]', space=smem, size = 0x4, offset = 0x4, fixed_abs, tag = 'smem constant byte address 0x4 - core index']
  #allocation1 [shape = 'u32[144,128]{1,0:T(1,128)}', space=vmem, size = 0x12000, scoped, tag = 'internal scratch']
  %s0 = inlined_call_operand.vmem [shape: bf16[128,128], index: 0, kind: input, shape index: {}]
  %s1 = inlined_call_operand.vmem [shape: bf16[128,128], index: 1, kind: input, shape index: {}]
  %s2 = inlined_call_operand.vmem [shape: f32[1,128], index: 2, kind: input, shape index: {}]
  %s3 = inlined_call_operand.vmem [shape: f32[1,128], index: 3, kind: input, shape index: {}]
  %s4 = inlined_call_operand.vmem [shape: f32[1,128], index: 4, kind: input, shape index: {}]
  %s5 = inlined_call_operand.vmem [shape: f32[1,128], index: 5, kind: input, shape index: {}]
  %s6 = inlined_call_operand.hbm [shape: f32[128,128], index: 6, kind: output, shape index: {}]
  %s7 = sld [smem:[#allocation0]]
  $region34: #{bottleneck_forward.9} parent=0
    _
  %s9 = ssub.s32 1, %s7
  %s10 = scalar_select 0, %s9, %s7
  $region1: #{bottleneck_forward.9} parent=0
    #allocation2 [shape = 'u8[65536]{0}', space=vmem, size = 0x10000, scoped, tag = 'output window, operand 0, single buffered']
    #allocation3 [shape = 's32[1]{0}', space=sflag, size = 0x4, scoped, tag = 'scoped memory for bottleneck_forward.9']
    %11 = vsyncpa [#allocation3], 0
    // Predicated region
    $region2: #{bottleneck_forward.9} parent=1 // pred_check
      _
    $region3: #{bottleneck_forward.9} parent=1 // pred_check_branch
      %13 = sbr.rel (0) target = $region5
    $region4: #{bottleneck_forward.9} parent=1 // pred_region
      _
    $region5: #{bottleneck_forward.9} parent=1 // pred_fallthru
      _
    // Predicated region
    $region6: #{bottleneck_forward.9} parent=1 // pred_check
      _
    $region7: #{bottleneck_forward.9} parent=1 // pred_check_branch
      %15 = sbr.rel (0) target = $region9
    $region8: #{bottleneck_forward.9} parent=1 // pred_region
      _
    $region9: #{bottleneck_forward.9} parent=1 // pred_fallthru
      _
    // Predicated region
    $region10: #{bottleneck_forward.9} parent=1 // pred_check
      _
    $region11: #{bottleneck_forward.9} parent=1 // pred_check_branch
      %17 = sbr.rel (0) target = $region13
    $region12: #{bottleneck_forward.9} parent=1 // pred_region
      _
    $region13: #{bottleneck_forward.9} parent=1 // pred_fallthru
      _
    // Predicated region
    $region14: #{bottleneck_forward.9} parent=1 // pred_check
      _
    $region15: #{bottleneck_forward.9} parent=1 // pred_check_branch
      %19 = sbr.rel (0) target = $region17
    $region16: #{bottleneck_forward.9} parent=1 // pred_region
      _
    $region17: #{bottleneck_forward.9} parent=1 // pred_fallthru
      _
    // Predicated region
    $region18: #{bottleneck_forward.9} parent=1 // pred_check
      _
    $region19: #{bottleneck_forward.9} parent=1 // pred_check_branch
      %21 = sbr.rel (0) target = $region21
    $region20: #{bottleneck_forward.9} parent=1 // pred_region
      _
    $region21: #{bottleneck_forward.9} parent=1 // pred_fallthru
      _
    // Predicated region
    $region22: #{bottleneck_forward.9} parent=1 // pred_check
      _
    $region23: #{bottleneck_forward.9} parent=1 // pred_check_branch
      %23 = sbr.rel (0) target = $region25
    $region24: #{bottleneck_forward.9} parent=1 // pred_region
      _
    $region25: #{bottleneck_forward.9} parent=1 // pred_fallthru
      _
    %v24 = vld [vmem:[%s0] sm:$0xf]
    %v25 = vld [vmem:[%s0 + $0x4] sm:$0xf]
    %v26 = vld [vmem:[%s0 + $0x8] sm:$0xf]
    %v27 = vld [vmem:[%s0 + $0xc] sm:$0xf]
    %v28 = vld [vmem:[%s0 + $0x10] sm:$0xf]
    %v29 = vld [vmem:[%s0 + $0x14] sm:$0xf]
    %v30 = vld [vmem:[%s0 + $0x18] sm:$0xf]
    %v31 = vld [vmem:[%s0 + $0x1c] sm:$0xf]
    %v32 = vld [vmem:[%s0 + $0x20] sm:$0xf]
    %v33 = vld [vmem:[%s0 + $0x24] sm:$0xf]
    %v34 = vld [vmem:[%s0 + $0x28] sm:$0xf]
    %v35 = vld [vmem:[%s0 + $0x2c] sm:$0xf]
    %v36 = vld [vmem:[%s0 + $0x30] sm:$0xf]
    %v37 = vld [vmem:[%s0 + $0x34] sm:$0xf]
    %v38 = vld [vmem:[%s0 + $0x38] sm:$0xf]
    %v39 = vld [vmem:[%s0 + $0x3c] sm:$0xf]
    %v40 = vunpack.c.l.bf16 %v24
    %v41 = vunpack.c.l.bf16 %v25
    %v42 = vunpack.c.l.bf16 %v26
    %v43 = vunpack.c.l.bf16 %v27
    %v44 = vunpack.c.l.bf16 %v28
    %v45 = vunpack.c.l.bf16 %v29
    %v46 = vunpack.c.l.bf16 %v30
    %v47 = vunpack.c.l.bf16 %v31
    %v48 = vunpack.c.l.bf16 %v32
    %v49 = vunpack.c.l.bf16 %v33
    %v50 = vunpack.c.l.bf16 %v34
    %v51 = vunpack.c.l.bf16 %v35
    %v52 = vunpack.c.l.bf16 %v36
    %v53 = vunpack.c.l.bf16 %v37
    %v54 = vunpack.c.l.bf16 %v38
    %v55 = vunpack.c.l.bf16 %v39
    %v56 = vld [vmem:[%s2] sm:$0x1]
    %v58 = vlaneseq
    %v59 = vshrl.u32 %v58, 7
    %v60 = vsub.s32 0, %v59
    %v61 = vrot.slane %v56, %v60
    %v63 = vmul.f32 %v40, %v61
    %v64 = vmul.f32 %v41, %v61
    %v65 = vmul.f32 %v42, %v61
    %v66 = vmul.f32 %v43, %v61
    %v67 = vmul.f32 %v44, %v61
    %v68 = vmul.f32 %v45, %v61
    %v69 = vmul.f32 %v46, %v61
    %v70 = vmul.f32 %v47, %v61
    %v71 = vmul.f32 %v48, %v61
    %v72 = vmul.f32 %v49, %v61
    %v73 = vmul.f32 %v50, %v61
    %v74 = vmul.f32 %v51, %v61
    %v75 = vmul.f32 %v52, %v61
    %v76 = vmul.f32 %v53, %v61
    %v77 = vmul.f32 %v54, %v61
    %v78 = vmul.f32 %v55, %v61
    %v79 = vld [vmem:[%s3] sm:$0x1]
    %v81 = vlaneseq
    %v82 = vshrl.u32 %v81, 7
    %v83 = vsub.s32 0, %v82
    %v84 = vrot.slane %v79, %v83
    %v86 = vadd.f32 %v63, %v84
    %v87 = vadd.f32 %v64, %v84
    %v88 = vadd.f32 %v65, %v84
    %v89 = vadd.f32 %v66, %v84
    %v90 = vadd.f32 %v67, %v84
    %v91 = vadd.f32 %v68, %v84
    %v92 = vadd.f32 %v69, %v84
    %v93 = vadd.f32 %v70, %v84
    %v94 = vadd.f32 %v71, %v84
    %v95 = vadd.f32 %v72, %v84
    %v96 = vadd.f32 %v73, %v84
    %v97 = vadd.f32 %v74, %v84
    %v98 = vadd.f32 %v75, %v84
    %v99 = vadd.f32 %v76, %v84
    %v100 = vadd.f32 %v77, %v84
    %v101 = vadd.f32 %v78, %v84
    %v102 = vld [vmem:[%s1] sm:$0xf]
    %v103 = vld [vmem:[%s1 + $0x4] sm:$0xf]
    %v104 = vld [vmem:[%s1 + $0x8] sm:$0xf]
    %v105 = vld [vmem:[%s1 + $0xc] sm:$0xf]
    %v106 = vld [vmem:[%s1 + $0x10] sm:$0xf]
    %v107 = vld [vmem:[%s1 + $0x14] sm:$0xf]
    %v108 = vld [vmem:[%s1 + $0x18] sm:$0xf]
    %v109 = vld [vmem:[%s1 + $0x1c] sm:$0xf]
    %v110 = vld [vmem:[%s1 + $0x20] sm:$0xf]
    %v111 = vld [vmem:[%s1 + $0x24] sm:$0xf]
    %v112 = vld [vmem:[%s1 + $0x28] sm:$0xf]
    %v113 = vld [vmem:[%s1 + $0x2c] sm:$0xf]
    %v114 = vld [vmem:[%s1 + $0x30] sm:$0xf]
    %v115 = vld [vmem:[%s1 + $0x34] sm:$0xf]
    %v116 = vld [vmem:[%s1 + $0x38] sm:$0xf]
    %v117 = vld [vmem:[%s1 + $0x3c] sm:$0xf]
    %v118 = vunpack.c.l.bf16 %v102
    %v119 = vunpack.c.l.bf16 %v103
    %v120 = vunpack.c.l.bf16 %v104
    %v121 = vunpack.c.l.bf16 %v105
    %v122 = vunpack.c.l.bf16 %v106
    %v123 = vunpack.c.l.bf16 %v107
    %v124 = vunpack.c.l.bf16 %v108
    %v125 = vunpack.c.l.bf16 %v109
    %v126 = vunpack.c.l.bf16 %v110
    %v127 = vunpack.c.l.bf16 %v111
    %v128 = vunpack.c.l.bf16 %v112
    %v129 = vunpack.c.l.bf16 %v113
    %v130 = vunpack.c.l.bf16 %v114
    %v131 = vunpack.c.l.bf16 %v115
    %v132 = vunpack.c.l.bf16 %v116
    %v133 = vunpack.c.l.bf16 %v117
    %v134 = vld [vmem:[%s4] sm:$0x1]
    %v136 = vlaneseq
    %v137 = vshrl.u32 %v136, 7
    %v138 = vsub.s32 0, %v137
    %v139 = vrot.slane %v134, %v138
    %v141 = vmul.f32 %v118, %v139
    %v142 = vmul.f32 %v119, %v139
    %v143 = vmul.f32 %v120, %v139
    %v144 = vmul.f32 %v121, %v139
    %v145 = vmul.f32 %v122, %v139
    %v146 = vmul.f32 %v123, %v139
    %v147 = vmul.f32 %v124, %v139
    %v148 = vmul.f32 %v125, %v139
    %v149 = vmul.f32 %v126, %v139
    %v150 = vmul.f32 %v127, %v139
    %v151 = vmul.f32 %v128, %v139
    %v152 = vmul.f32 %v129, %v139
    %v153 = vmul.f32 %v130, %v139
    %v154 = vmul.f32 %v131, %v139
    %v155 = vmul.f32 %v132, %v139
    %v156 = vmul.f32 %v133, %v139
    %v157 = vld [vmem:[%s5] sm:$0x1]
    %v159 = vlaneseq
    %v160 = vshrl.u32 %v159, 7
    %v161 = vsub.s32 0, %v160
    %v162 = vrot.slane %v157, %v161
    %v164 = vadd.f32 %v141, %v162
    %v165 = vadd.f32 %v142, %v162
    %v166 = vadd.f32 %v143, %v162
    %v167 = vadd.f32 %v144, %v162
    %v168 = vadd.f32 %v145, %v162
    %v169 = vadd.f32 %v146, %v162
    %v170 = vadd.f32 %v147, %v162
    %v171 = vadd.f32 %v148, %v162
    %v172 = vadd.f32 %v149, %v162
    %v173 = vadd.f32 %v150, %v162
    %v174 = vadd.f32 %v151, %v162
    %v175 = vadd.f32 %v152, %v162
    %v176 = vadd.f32 %v153, %v162
    %v177 = vadd.f32 %v154, %v162
    %v178 = vadd.f32 %v155, %v162
    %v179 = vadd.f32 %v156, %v162
    %v180 = vadd.f32 %v86, %v164
    %v181 = vadd.f32 %v87, %v165
    %v182 = vadd.f32 %v88, %v166
    %v183 = vadd.f32 %v89, %v167
    %v184 = vadd.f32 %v90, %v168
    %v185 = vadd.f32 %v91, %v169
    %v186 = vadd.f32 %v92, %v170
    %v187 = vadd.f32 %v93, %v171
    %v188 = vadd.f32 %v94, %v172
    %v189 = vadd.f32 %v95, %v173
    %v190 = vadd.f32 %v96, %v174
    %v191 = vadd.f32 %v97, %v175
    %v192 = vadd.f32 %v98, %v176
    %v193 = vadd.f32 %v99, %v177
    %v194 = vadd.f32 %v100, %v178
    %v195 = vadd.f32 %v101, %v179
    %v196 = vmax.f32 %v180, 0.0
    %v197 = vmax.f32 %v181, 0.0
    %v198 = vmax.f32 %v182, 0.0
    %v199 = vmax.f32 %v183, 0.0
    %v200 = vmax.f32 %v184, 0.0
    %v201 = vmax.f32 %v185, 0.0
    %v202 = vmax.f32 %v186, 0.0
    %v203 = vmax.f32 %v187, 0.0
    %v204 = vmax.f32 %v188, 0.0
    %v205 = vmax.f32 %v189, 0.0
    %v206 = vmax.f32 %v190, 0.0
    %v207 = vmax.f32 %v191, 0.0
    %v208 = vmax.f32 %v192, 0.0
    %v209 = vmax.f32 %v193, 0.0
    %v210 = vmax.f32 %v194, 0.0
    %v211 = vmax.f32 %v195, 0.0
    %212 = vst [vmem:[#allocation2] sm:$0xff] %v196
    %213 = vst [vmem:[#allocation2 + $0x8] sm:$0xff] %v197
    %214 = vst [vmem:[#allocation2 + $0x10] sm:$0xff] %v198
    %215 = vst [vmem:[#allocation2 + $0x18] sm:$0xff] %v199
    %216 = vst [vmem:[#allocation2 + $0x20] sm:$0xff] %v200
    %217 = vst [vmem:[#allocation2 + $0x28] sm:$0xff] %v201
    %218 = vst [vmem:[#allocation2 + $0x30] sm:$0xff] %v202
    %219 = vst [vmem:[#allocation2 + $0x38] sm:$0xff] %v203
    %220 = vst [vmem:[#allocation2 + $0x40] sm:$0xff] %v204
    %221 = vst [vmem:[#allocation2 + $0x48] sm:$0xff] %v205
    %222 = vst [vmem:[#allocation2 + $0x50] sm:$0xff] %v206
    %223 = vst [vmem:[#allocation2 + $0x58] sm:$0xff] %v207
    %224 = vst [vmem:[#allocation2 + $0x60] sm:$0xff] %v208
    %225 = vst [vmem:[#allocation2 + $0x68] sm:$0xff] %v209
    %226 = vst [vmem:[#allocation2 + $0x70] sm:$0xff] %v210
    %227 = vst [vmem:[#allocation2 + $0x78] sm:$0xff] %v211
    // Predicated region
    $region26: #{bottleneck_forward.9} parent=1 // pred_check
      _
    $region27: #{bottleneck_forward.9} parent=1 // pred_check_branch
      %229 = sbr.rel (0) target = $region29
    $region28: #{bottleneck_forward.9} parent=1 // pred_region
      %s231 = ssub.s32 2048, 2048
      %232 = vsyncadd [#allocation3], %s231
      %s233 = sshll.u32 [#allocation2], 4
      %s234 = int_to_ptr.vmem [resolvable:$true] %s233
      %239 = dma.vmem_to_hbm [thread:$0]  %s234, 2048, %s6, [#allocation3], 128, 128, 8
    $region29: #{bottleneck_forward.9} parent=1 // pred_fallthru
      _
    // Predicated region
    $region30: #{bottleneck_forward.9} parent=1 // pred_check
      _
    $region31: #{bottleneck_forward.9} parent=1 // pred_check_branch
      %241 = sbr.rel (0) target = $region33
    $region32: #{bottleneck_forward.9} parent=1 // pred_region
      %242 = dma.done [#allocation3], 2048
    $region33: #{bottleneck_forward.9} parent=1 // pred_fallthru
      _
    %243 = vsyncpa [#allocation3], 1

// kernel: bottleneck_forward.6
$region0: #{bottleneck_forward.6}
  #allocation0 [shape = 'u32[]', space=smem, size = 0x4, offset = 0x4, fixed_abs, tag = 'smem constant byte address 0x4 - core index']
  #allocation1 [shape = 'u32[144,128]{1,0:T(1,128)}', space=vmem, size = 0x12000, scoped, tag = 'internal scratch']
  %s0 = inlined_call_operand.vmem [shape: bf16[128,1152], index: 0, kind: input, shape index: {}]
  %s1 = inlined_call_operand.vmem [shape: bf16[1152,128], index: 1, kind: input, shape index: {}]
  %s2 = inlined_call_operand.vmem [shape: f32[1,1152], index: 2, kind: input, shape index: {}]
  %s3 = inlined_call_operand.vmem [shape: f32[1,1152], index: 3, kind: input, shape index: {}]
  %s4 = inlined_call_operand.vmem [shape: bf16[128,128], index: 4, kind: output, shape index: {0}]
  %s5 = inlined_call_operand.vmem [shape: f32[1,8,128], index: 5, kind: output, shape index: {1}]
  %6 = xla_tuple %s4, %s5
  %s7 = sld [smem:[#allocation0]]
  $region34: #{bottleneck_forward.6} parent=0
    _
  %s9 = ssub.s32 1, %s7
  %s10 = scalar_select 0, %s9, %s7
  // Predicated region
  $region2: #{bottleneck_forward.6} parent=0 // pred_check
    _
  $region3: #{bottleneck_forward.6} parent=0 // pred_check_branch
    %12 = sbr.rel (0) target = $region5
  $region4: #{bottleneck_forward.6} parent=0 // pred_region
    _
  $region5: #{bottleneck_forward.6} parent=0 // pred_fallthru
    _
  // Predicated region
  $region6: #{bottleneck_forward.6} parent=0 // pred_check
    _
  $region7: #{bottleneck_forward.6} parent=0 // pred_check_branch
    %14 = sbr.rel (0) target = $region9
  $region8: #{bottleneck_forward.6} parent=0 // pred_region
    _
  $region9: #{bottleneck_forward.6} parent=0 // pred_fallthru
    _
  // Predicated region
  $region10: #{bottleneck_forward.6} parent=0 // pred_check
    _
  $region11: #{bottleneck_forward.6} parent=0 // pred_check_branch
    %16 = sbr.rel (0) target = $region13
  $region12: #{bottleneck_forward.6} parent=0 // pred_region
    _
  $region13: #{bottleneck_forward.6} parent=0 // pred_fallthru
    _
  // Predicated region
  $region14: #{bottleneck_forward.6} parent=0 // pred_check
    _
  $region15: #{bottleneck_forward.6} parent=0 // pred_check_branch
    %18 = sbr.rel (0) target = $region17
  $region16: #{bottleneck_forward.6} parent=0 // pred_region
    _
  $region17: #{bottleneck_forward.6} parent=0 // pred_fallthru
    _
  %v20 = vld [vmem:[%s0] sm:$0xff]
  %v21 = vld [vmem:[%s0 + $0x8] sm:$0xff]
  %v22 = vld [vmem:[%s0 + $0x10] sm:$0xff]
  %v23 = vld [vmem:[%s0 + $0x18] sm:$0xff]
  %v24 = vld [vmem:[%s0 + $0x20] sm:$0xf]
  %v25 = vld [vmem:[%s0 + $0x24] sm:$0xff]
  %v26 = vld [vmem:[%s0 + $0x2c] sm:$0xff]
  %v27 = vld [vmem:[%s0 + $0x34] sm:$0xff]
  %v28 = vld [vmem:[%s0 + $0x3c] sm:$0xff]
  %v29 = vld [vmem:[%s0 + $0x44] sm:$0xf]
  %v30 = vld [vmem:[%s0 + $0x48] sm:$0xff]
  %v31 = vld [vmem:[%s0 + $0x50] sm:$0xff]
  %v32 = vld [vmem:[%s0 + $0x58] sm:$0xff]
  %v33 = vld [vmem:[%s0 + $0x60] sm:$0xff]
  %v34 = vld [vmem:[%s0 + $0x68] sm:$0xf]
  %v35 = vld [vmem:[%s0 + $0x6c] sm:$0xff]
  %v36 = vld [vmem:[%s0 + $0x74] sm:$0xff]
  %v37 = vld [vmem:[%s0 + $0x7c] sm:$0xff]
  %v38 = vld [vmem:[%s0 + $0x84] sm:$0xff]
  %v39 = vld [vmem:[%s0 + $0x8c] sm:$0xf]
  %v40 = vld [vmem:[%s0 + $0x90] sm:$0xff]
  %v41 = vld [vmem:[%s0 + $0x98] sm:$0xff]
  %v42 = vld [vmem:[%s0 + $0xa0] sm:$0xff]
  %v43 = vld [vmem:[%s0 + $0xa8] sm:$0xff]
  %v44 = vld [vmem:[%s0 + $0xb0] sm:$0xf]
  %v45 = vld [vmem:[%s0 + $0xb4] sm:$0xff]
  %v46 = vld [vmem:[%s0 + $0xbc] sm:$0xff]
  %v47 = vld [vmem:[%s0 + $0xc4] sm:$0xff]
  %v48 = vld [vmem:[%s0 + $0xcc] sm:$0xff]
  %v49 = vld [vmem:[%s0 + $0xd4] sm:$0xf]
  %v50 = vld [vmem:[%s0 + $0xd8] sm:$0xff]
  %v51 = vld [vmem:[%s0 + $0xe0] sm:$0xff]
  %v52 = vld [vmem:[%s0 + $0xe8] sm:$0xff]
  %v53 = vld [vmem:[%s0 + $0xf0] sm:$0xff]
  %v54 = vld [vmem:[%s0 + $0xf8] sm:$0xf]
  %v55 = vld [vmem:[%s0 + $0xfc] sm:$0xff]
  %v56 = vld [vmem:[%s0 + $0x104] sm:$0xff]
  %v57 = vld [vmem:[%s0 + $0x10c] sm:$0xff]
  %v58 = vld [vmem:[%s0 + $0x114] sm:$0xff]
  %v59 = vld [vmem:[%s0 + $0x11c] sm:$0xf]
  %v60 = vld [vmem:[%s0 + $0x120] sm:$0xff]
  %v61 = vld [vmem:[%s0 + $0x128] sm:$0xff]
  %v62 = vld [vmem:[%s0 + $0x130] sm:$0xff]
  %v63 = vld [vmem:[%s0 + $0x138] sm:$0xff]
  %v64 = vld [vmem:[%s0 + $0x140] sm:$0xf]
  %v65 = vld [vmem:[%s0 + $0x144] sm:$0xff]
  %v66 = vld [vmem:[%s0 + $0x14c] sm:$0xff]
  %v67 = vld [vmem:[%s0 + $0x154] sm:$0xff]
  %v68 = vld [vmem:[%s0 + $0x15c] sm:$0xff]
  %v69 = vld [vmem:[%s0 + $0x164] sm:$0xf]
  %v70 = vld [vmem:[%s0 + $0x168] sm:$0xff]
  %v71 = vld [vmem:[%s0 + $0x170] sm:$0xff]
  %v72 = vld [vmem:[%s0 + $0x178] sm:$0xff]
  %v73 = vld [vmem:[%s0 + $0x180] sm:$0xff]
  %v74 = vld [vmem:[%s0 + $0x188] sm:$0xf]
  %v75 = vld [vmem:[%s0 + $0x18c] sm:$0xff]
  %v76 = vld [vmem:[%s0 + $0x194] sm:$0xff]
  %v77 = vld [vmem:[%s0 + $0x19c] sm:$0xff]
  %v78 = vld [vmem:[%s0 + $0x1a4] sm:$0xff]
  %v79 = vld [vmem:[%s0 + $0x1ac] sm:$0xf]
  %v80 = vld [vmem:[%s0 + $0x1b0] sm:$0xff]
  %v81 = vld [vmem:[%s0 + $0x1b8] sm:$0xff]
  %v82 = vld [vmem:[%s0 + $0x1c0] sm:$0xff]
  %v83 = vld [vmem:[%s0 + $0x1c8] sm:$0xff]
  %v84 = vld [vmem:[%s0 + $0x1d0] sm:$0xf]
  %v85 = vld [vmem:[%s0 + $0x1d4] sm:$0xff]
  %v86 = vld [vmem:[%s0 + $0x1dc] sm:$0xff]
  %v87 = vld [vmem:[%s0 + $0x1e4] sm:$0xff]
  %v88 = vld [vmem:[%s0 + $0x1ec] sm:$0xff]
  %v89 = vld [vmem:[%s0 + $0x1f4] sm:$0xf]
  %v90 = vld [vmem:[%s0 + $0x1f8] sm:$0xff]
  %v91 = vld [vmem:[%s0 + $0x200] sm:$0xff]
  %v92 = vld [vmem:[%s0 + $0x208] sm:$0xff]
  %v93 = vld [vmem:[%s0 + $0x210] sm:$0xff]
  %v94 = vld [vmem:[%s0 + $0x218] sm:$0xf]
  %v95 = vld [vmem:[%s0 + $0x21c] sm:$0xff]
  %v96 = vld [vmem:[%s0 + $0x224] sm:$0xff]
  %v97 = vld [vmem:[%s0 + $0x22c] sm:$0xff]
  %v98 = vld [vmem:[%s0 + $0x234] sm:$0xff]
  %v99 = vld [vmem:[%s0 + $0x23c] sm:$0xf]
  %v100 = vld [vmem:[%s1] sm:$0xf]
  %v101 = vld [vmem:[%s1 + $0x4] sm:$0xf]
  %v102 = vld [vmem:[%s1 + $0x8] sm:$0xf]
  %v103 = vld [vmem:[%s1 + $0xc] sm:$0xf]
  %v104 = vld [vmem:[%s1 + $0x10] sm:$0xf]
  %v105 = vld [vmem:[%s1 + $0x14] sm:$0xf]
  %v106 = vld [vmem:[%s1 + $0x18] sm:$0xf]
  %v107 = vld [vmem:[%s1 + $0x1c] sm:$0xf]
  %v108 = vld [vmem:[%s1 + $0x20] sm:$0xf]
  %v109 = vld [vmem:[%s1 + $0x24] sm:$0xf]
  %v110 = vld [vmem:[%s1 + $0x28] sm:$0xf]
  %v111 = vld [vmem:[%s1 + $0x2c] sm:$0xf]
  %v112 = vld [vmem:[%s1 + $0x30] sm:$0xf]
  %v113 = vld [vmem:[%s1 + $0x34] sm:$0xf]
  %v114 = vld [vmem:[%s1 + $0x38] sm:$0xf]
  %v115 = vld [vmem:[%s1 + $0x3c] sm:$0xf]
  %v116 = vld [vmem:[%s1 + $0x40] sm:$0xf]
  %v117 = vld [vmem:[%s1 + $0x44] sm:$0xf]
  %v118 = vld [vmem:[%s1 + $0x48] sm:$0xf]
  %v119 = vld [vmem:[%s1 + $0x4c] sm:$0xf]
  %v120 = vld [vmem:[%s1 + $0x50] sm:$0xf]
  %v121 = vld [vmem:[%s1 + $0x54] sm:$0xf]
  %v122 = vld [vmem:[%s1 + $0x58] sm:$0xf]
  %v123 = vld [vmem:[%s1 + $0x5c] sm:$0xf]
  %v124 = vld [vmem:[%s1 + $0x60] sm:$0xf]
  %v125 = vld [vmem:[%s1 + $0x64] sm:$0xf]
  %v126 = vld [vmem:[%s1 + $0x68] sm:$0xf]
  %v127 = vld [vmem:[%s1 + $0x6c] sm:$0xf]
  %v128 = vld [vmem:[%s1 + $0x70] sm:$0xf]
  %v129 = vld [vmem:[%s1 + $0x74] sm:$0xf]
  %v130 = vld [vmem:[%s1 + $0x78] sm:$0xf]
  %v131 = vld [vmem:[%s1 + $0x7c] sm:$0xf]
  %v132 = vld [vmem:[%s1 + $0x80] sm:$0xf]
  %v133 = vld [vmem:[%s1 + $0x84] sm:$0xf]
  %v134 = vld [vmem:[%s1 + $0x88] sm:$0xf]
  %v135 = vld [vmem:[%s1 + $0x8c] sm:$0xf]
  %v136 = vld [vmem:[%s1 + $0x90] sm:$0xf]
  %v137 = vld [vmem:[%s1 + $0x94] sm:$0xf]
  %v138 = vld [vmem:[%s1 + $0x98] sm:$0xf]
  %v139 = vld [vmem:[%s1 + $0x9c] sm:$0xf]
  %v140 = vld [vmem:[%s1 + $0xa0] sm:$0xf]
  %v141 = vld [vmem:[%s1 + $0xa4] sm:$0xf]
  %v142 = vld [vmem:[%s1 + $0xa8] sm:$0xf]
  %v143 = vld [vmem:[%s1 + $0xac] sm:$0xf]
  %v144 = vld [vmem:[%s1 + $0xb0] sm:$0xf]
  %v145 = vld [vmem:[%s1 + $0xb4] sm:$0xf]
  %v146 = vld [vmem:[%s1 + $0xb8] sm:$0xf]
  %v147 = vld [vmem:[%s1 + $0xbc] sm:$0xf]
  %v148 = vld [vmem:[%s1 + $0xc0] sm:$0xf]
  %v149 = vld [vmem:[%s1 + $0xc4] sm:$0xf]
  %v150 = vld [vmem:[%s1 + $0xc8] sm:$0xf]
  %v151 = vld [vmem:[%s1 + $0xcc] sm:$0xf]
  %v152 = vld [vmem:[%s1 + $0xd0] sm:$0xf]
  %v153 = vld [vmem:[%s1 + $0xd4] sm:$0xf]
  %v154 = vld [vmem:[%s1 + $0xd8] sm:$0xf]
  %v155 = vld [vmem:[%s1 + $0xdc] sm:$0xf]
  %v156 = vld [vmem:[%s1 + $0xe0] sm:$0xf]
  %v157 = vld [vmem:[%s1 + $0xe4] sm:$0xf]
  %v158 = vld [vmem:[%s1 + $0xe8] sm:$0xf]
  %v159 = vld [vmem:[%s1 + $0xec] sm:$0xf]
  %v160 = vld [vmem:[%s1 + $0xf0] sm:$0xf]
  %v161 = vld [vmem:[%s1 + $0xf4] sm:$0xf]
  %v162 = vld [vmem:[%s1 + $0xf8] sm:$0xf]
  %v163 = vld [vmem:[%s1 + $0xfc] sm:$0xf]
  %v164 = vld [vmem:[%s1 + $0x100] sm:$0xf]
  %v165 = vld [vmem:[%s1 + $0x104] sm:$0xf]
  %v166 = vld [vmem:[%s1 + $0x108] sm:$0xf]
  %v167 = vld [vmem:[%s1 + $0x10c] sm:$0xf]
  %v168 = vld [vmem:[%s1 + $0x110] sm:$0xf]
  %v169 = vld [vmem:[%s1 + $0x114] sm:$0xf]
  %v170 = vld [vmem:[%s1 + $0x118] sm:$0xf]
  %v171 = vld [vmem:[%s1 + $0x11c] sm:$0xf]
  %v172 = vld [vmem:[%s1 + $0x120] sm:$0xf]
  %v173 = vld [vmem:[%s1 + $0x124] sm:$0xf]
  %v174 = vld [vmem:[%s1 + $0x128] sm:$0xf]
  %v175 = vld [vmem:[%s1 + $0x12c] sm:$0xf]
  %v176 = vld [vmem:[%s1 + $0x130] sm:$0xf]
  %v177 = vld [vmem:[%s1 + $0x134] sm:$0xf]
  %v178 = vld [vmem:[%s1 + $0x138] sm:$0xf]
  %v179 = vld [vmem:[%s1 + $0x13c] sm:$0xf]
  %v180 = vld [vmem:[%s1 + $0x140] sm:$0xf]
  %v181 = vld [vmem:[%s1 + $0x144] sm:$0xf]
  %v182 = vld [vmem:[%s1 + $0x148] sm:$0xf]
  %v183 = vld [vmem:[%s1 + $0x14c] sm:$0xf]
  %v184 = vld [vmem:[%s1 + $0x150] sm:$0xf]
  %v185 = vld [vmem:[%s1 + $0x154] sm:$0xf]
  %v186 = vld [vmem:[%s1 + $0x158] sm:$0xf]
  %v187 = vld [vmem:[%s1 + $0x15c] sm:$0xf]
  %v188 = vld [vmem:[%s1 + $0x160] sm:$0xf]
  %v189 = vld [vmem:[%s1 + $0x164] sm:$0xf]
  %v190 = vld [vmem:[%s1 + $0x168] sm:$0xf]
  %v191 = vld [vmem:[%s1 + $0x16c] sm:$0xf]
  %v192 = vld [vmem:[%s1 + $0x170] sm:$0xf]
  %v193 = vld [vmem:[%s1 + $0x174] sm:$0xf]
  %v194 = vld [vmem:[%s1 + $0x178] sm:$0xf]
  %v195 = vld [vmem:[%s1 + $0x17c] sm:$0xf]
  %v196 = vld [vmem:[%s1 + $0x180] sm:$0xf]
  %v197 = vld [vmem:[%s1 + $0x184] sm:$0xf]
  %v198 = vld [vmem:[%s1 + $0x188] sm:$0xf]
  %v199 = vld [vmem:[%s1 + $0x18c] sm:$0xf]
  %v200 = vld [vmem:[%s1 + $0x190] sm:$0xf]
  %v201 = vld [vmem:[%s1 + $0x194] sm:$0xf]
  %v202 = vld [vmem:[%s1 + $0x198] sm:$0xf]
  %v203 = vld [vmem:[%s1 + $0x19c] sm:$0xf]
  %v204 = vld [vmem:[%s1 + $0x1a0] sm:$0xf]
  %v205 = vld [vmem:[%s1 + $0x1a4] sm:$0xf]
  %v206 = vld [vmem:[%s1 + $0x1a8] sm:$0xf]
  %v207 = vld [vmem:[%s1 + $0x1ac] sm:$0xf]
  %v208 = vld [vmem:[%s1 + $0x1b0] sm:$0xf]
  %v209 = vld [vmem:[%s1 + $0x1b4] sm:$0xf]
  %v210 = vld [vmem:[%s1 + $0x1b8] sm:$0xf]
  %v211 = vld [vmem:[%s1 + $0x1bc] sm:$0xf]
  %v212 = vld [vmem:[%s1 + $0x1c0] sm:$0xf]
  %v213 = vld [vmem:[%s1 + $0x1c4] sm:$0xf]
  %v214 = vld [vmem:[%s1 + $0x1c8] sm:$0xf]
  %v215 = vld [vmem:[%s1 + $0x1cc] sm:$0xf]
  %v216 = vld [vmem:[%s1 + $0x1d0] sm:$0xf]
  %v217 = vld [vmem:[%s1 + $0x1d4] sm:$0xf]
  %v218 = vld [vmem:[%s1 + $0x1d8] sm:$0xf]
  %v219 = vld [vmem:[%s1 + $0x1dc] sm:$0xf]
  %v220 = vld [vmem:[%s1 + $0x1e0] sm:$0xf]
  %v221 = vld [vmem:[%s1 + $0x1e4] sm:$0xf]
  %v222 = vld [vmem:[%s1 + $0x1e8] sm:$0xf]
  %v223 = vld [vmem:[%s1 + $0x1ec] sm:$0xf]
  %v224 = vld [vmem:[%s1 + $0x1f0] sm:$0xf]
  %v225 = vld [vmem:[%s1 + $0x1f4] sm:$0xf]
  %v226 = vld [vmem:[%s1 + $0x1f8] sm:$0xf]
  %v227 = vld [vmem:[%s1 + $0x1fc] sm:$0xf]
  %v228 = vld [vmem:[%s1 + $0x200] sm:$0xf]
  %v229 = vld [vmem:[%s1 + $0x204] sm:$0xf]
  %v230 = vld [vmem:[%s1 + $0x208] sm:$0xf]
  %v231 = vld [vmem:[%s1 + $0x20c] sm:$0xf]
  %v232 = vld [vmem:[%s1 + $0x210] sm:$0xf]
  %v233 = vld [vmem:[%s1 + $0x214] sm:$0xf]
  %v234 = vld [vmem:[%s1 + $0x218] sm:$0xf]
  %v235 = vld [vmem:[%s1 + $0x21c] sm:$0xf]
  %v236 = vld [vmem:[%s1 + $0x220] sm:$0xf]
  %v237 = vld [vmem:[%s1 + $0x224] sm:$0xf]
  %v238 = vld [vmem:[%s1 + $0x228] sm:$0xf]
  %v239 = vld [vmem:[%s1 + $0x22c] sm:$0xf]
  %v240 = vld [vmem:[%s1 + $0x230] sm:$0xf]
  %v241 = vld [vmem:[%s1 + $0x234] sm:$0xf]
  %v242 = vld [vmem:[%s1 + $0x238] sm:$0xf]
  %v243 = vld [vmem:[%s1 + $0x23c] sm:$0xf]
  %v324 = vunpack.c.l.b16 %v20
  %v325 = vunpack.c.h.b16 %v20
  %v326 = vunpack.c.l.b16 %v21
  %v327 = vunpack.c.h.b16 %v21
  %v328 = vunpack.c.l.b16 %v22
  %v329 = vunpack.c.h.b16 %v22
  %v330 = vunpack.c.l.b16 %v23
  %v331 = vunpack.c.h.b16 %v23
  %v332 = vunpack.c.l.b16 %v24
  %v333 = vunpack.c.l.b16 %v25
  %v334 = vunpack.c.h.b16 %v25
  %v335 = vunpack.c.l.b16 %v26
  %v336 = vunpack.c.h.b16 %v26
  %v337 = vunpack.c.l.b16 %v27
  %v338 = vunpack.c.h.b16 %v27
  %v339 = vunpack.c.l.b16 %v28
  %v340 = vunpack.c.h.b16 %v28
  %v341 = vunpack.c.l.b16 %v29
  %v342 = vunpack.c.l.b16 %v30
  %v343 = vunpack.c.h.b16 %v30
  %v344 = vunpack.c.l.b16 %v31
  %v345 = vunpack.c.h.b16 %v31
  %v346 = vunpack.c.l.b16 %v32
  %v347 = vunpack.c.h.b16 %v32
  %v348 = vunpack.c.l.b16 %v33
  %v349 = vunpack.c.h.b16 %v33
  %v350 = vunpack.c.l.b16 %v34
  %v351 = vunpack.c.l.b16 %v35
  %v352 = vunpack.c.h.b16 %v35
  %v353 = vunpack.c.l.b16 %v36
  %v354 = vunpack.c.h.b16 %v36
  %v355 = vunpack.c.l.b16 %v37
  %v356 = vunpack.c.h.b16 %v37
  %v357 = vunpack.c.l.b16 %v38
  %v358 = vunpack.c.h.b16 %v38
  %v359 = vunpack.c.l.b16 %v39
  %v360 = vunpack.c.l.b16 %v40
  %v361 = vunpack.c.h.b16 %v40
  %v362 = vunpack.c.l.b16 %v41
  %v363 = vunpack.c.h.b16 %v41
  %v364 = vunpack.c.l.b16 %v42
  %v365 = vunpack.c.h.b16 %v42
  %v366 = vunpack.c.l.b16 %v43
  %v367 = vunpack.c.h.b16 %v43
  %v368 = vunpack.c.l.b16 %v44
  %v369 = vunpack.c.l.b16 %v45
  %v370 = vunpack.c.h.b16 %v45
  %v371 = vunpack.c.l.b16 %v46
  %v372 = vunpack.c.h.b16 %v46
  %v373 = vunpack.c.l.b16 %v47
  %v374 = vunpack.c.h.b16 %v47
  %v375 = vunpack.c.l.b16 %v48
  %v376 = vunpack.c.h.b16 %v48
  %v377 = vunpack.c.l.b16 %v49
  %v378 = vunpack.c.l.b16 %v50
  %v379 = vunpack.c.h.b16 %v50
  %v380 = vunpack.c.l.b16 %v51
  %v381 = vunpack.c.h.b16 %v51
  %v382 = vunpack.c.l.b16 %v52
  %v383 = vunpack.c.h.b16 %v52
  %v384 = vunpack.c.l.b16 %v53
  %v385 = vunpack.c.h.b16 %v53
  %v386 = vunpack.c.l.b16 %v54
  %v387 = vunpack.c.l.b16 %v55
  %v388 = vunpack.c.h.b16 %v55
  %v389 = vunpack.c.l.b16 %v56
  %v390 = vunpack.c.h.b16 %v56
  %v391 = vunpack.c.l.b16 %v57
  %v392 = vunpack.c.h.b16 %v57
  %v393 = vunpack.c.l.b16 %v58
  %v394 = vunpack.c.h.b16 %v58
  %v395 = vunpack.c.l.b16 %v59
  %v396 = vunpack.c.l.b16 %v60
  %v397 = vunpack.c.h.b16 %v60
  %v398 = vunpack.c.l.b16 %v61
  %v399 = vunpack.c.h.b16 %v61
  %v400 = vunpack.c.l.b16 %v62
  %v401 = vunpack.c.h.b16 %v62
  %v402 = vunpack.c.l.b16 %v63
  %v403 = vunpack.c.h.b16 %v63
  %v404 = vunpack.c.l.b16 %v64
  %v405 = vunpack.c.l.b16 %v65
  %v406 = vunpack.c.h.b16 %v65
  %v407 = vunpack.c.l.b16 %v66
  %v408 = vunpack.c.h.b16 %v66
  %v409 = vunpack.c.l.b16 %v67
  %v410 = vunpack.c.h.b16 %v67
  %v411 = vunpack.c.l.b16 %v68
  %v412 = vunpack.c.h.b16 %v68
  %v413 = vunpack.c.l.b16 %v69
  %v414 = vunpack.c.l.b16 %v70
  %v415 = vunpack.c.h.b16 %v70
  %v416 = vunpack.c.l.b16 %v71
  %v417 = vunpack.c.h.b16 %v71
  %v418 = vunpack.c.l.b16 %v72
  %v419 = vunpack.c.h.b16 %v72
  %v420 = vunpack.c.l.b16 %v73
  %v421 = vunpack.c.h.b16 %v73
  %v422 = vunpack.c.l.b16 %v74
  %v423 = vunpack.c.l.b16 %v75
  %v424 = vunpack.c.h.b16 %v75
  %v425 = vunpack.c.l.b16 %v76
  %v426 = vunpack.c.h.b16 %v76
  %v427 = vunpack.c.l.b16 %v77
  %v428 = vunpack.c.h.b16 %v77
  %v429 = vunpack.c.l.b16 %v78
  %v430 = vunpack.c.h.b16 %v78
  %v431 = vunpack.c.l.b16 %v79
  %v432 = vunpack.c.l.b16 %v80
  %v433 = vunpack.c.h.b16 %v80
  %v434 = vunpack.c.l.b16 %v81
  %v435 = vunpack.c.h.b16 %v81
  %v436 = vunpack.c.l.b16 %v82
  %v437 = vunpack.c.h.b16 %v82
  %v438 = vunpack.c.l.b16 %v83
  %v439 = vunpack.c.h.b16 %v83
  %v440 = vunpack.c.l.b16 %v84
  %v441 = vunpack.c.l.b16 %v85
  %v442 = vunpack.c.h.b16 %v85
  %v443 = vunpack.c.l.b16 %v86
  %v444 = vunpack.c.h.b16 %v86
  %v445 = vunpack.c.l.b16 %v87
  %v446 = vunpack.c.h.b16 %v87
  %v447 = vunpack.c.l.b16 %v88
  %v448 = vunpack.c.h.b16 %v88
  %v449 = vunpack.c.l.b16 %v89
  %v450 = vunpack.c.l.b16 %v90
  %v451 = vunpack.c.h.b16 %v90
  %v452 = vunpack.c.l.b16 %v91
  %v453 = vunpack.c.h.b16 %v91
  %v454 = vunpack.c.l.b16 %v92
  %v455 = vunpack.c.h.b16 %v92
  %v456 = vunpack.c.l.b16 %v93
  %v457 = vunpack.c.h.b16 %v93
  %v458 = vunpack.c.l.b16 %v94
  %v459 = vunpack.c.l.b16 %v95
  %v460 = vunpack.c.h.b16 %v95
  %v461 = vunpack.c.l.b16 %v96
  %v462 = vunpack.c.h.b16 %v96
  %v463 = vunpack.c.l.b16 %v97
  %v464 = vunpack.c.h.b16 %v97
  %v465 = vunpack.c.l.b16 %v98
  %v466 = vunpack.c.h.b16 %v98
  %v467 = vunpack.c.l.b16 %v99
  %v468 = vpack.c.b16 %v333, %v324
  %v469 = vpack.c.b16 %v334, %v325
  %v470 = vpack.c.b16 %v335, %v326
  %v471 = vpack.c.b16 %v336, %v327
  %v472 = vpack.c.b16 %v337, %v328
  %v473 = vpack.c.b16 %v338, %v329
  %v474 = vpack.c.b16 %v339, %v330
  %v475 = vpack.c.b16 %v340, %v331
  %v476 = vpack.c.b16 %v341, %v332
  %v477 = vpack.c.b16 %v351, %v342
  %v478 = vpack.c.b16 %v352, %v343
  %v479 = vpack.c.b16 %v353, %v344
  %v480 = vpack.c.b16 %v354, %v345
  %v481 = vpack.c.b16 %v355, %v346
  %v482 = vpack.c.b16 %v356, %v347
  %v483 = vpack.c.b16 %v357, %v348
  %v484 = vpack.c.b16 %v358, %v349
  %v485 = vpack.c.b16 %v359, %v350
  %v486 = vpack.c.b16 %v369, %v360
  %v487 = vpack.c.b16 %v370, %v361
  %v488 = vpack.c.b16 %v371, %v362
  %v489 = vpack.c.b16 %v372, %v363
  %v490 = vpack.c.b16 %v373, %v364
  %v491 = vpack.c.b16 %v374, %v365
  %v492 = vpack.c.b16 %v375, %v366
  %v493 = vpack.c.b16 %v376, %v367
  %v494 = vpack.c.b16 %v377, %v368
  %v495 = vpack.c.b16 %v387, %v378
  %v496 = vpack.c.b16 %v388, %v379
  %v497 = vpack.c.b16 %v389, %v380
  %v498 = vpack.c.b16 %v390, %v381
  %v499 = vpack.c.b16 %v391, %v382
  %v500 = vpack.c.b16 %v392, %v383
  %v501 = vpack.c.b16 %v393, %v384
  %v502 = vpack.c.b16 %v394, %v385
  %v503 = vpack.c.b16 %v395, %v386
  %v504 = vpack.c.b16 %v405, %v396
  %v505 = vpack.c.b16 %v406, %v397
  %v506 = vpack.c.b16 %v407, %v398
  %v507 = vpack.c.b16 %v408, %v399
  %v508 = vpack.c.b16 %v409, %v400
  %v509 = vpack.c.b16 %v410, %v401
  %v510 = vpack.c.b16 %v411, %v402
  %v511 = vpack.c.b16 %v412, %v403
  %v512 = vpack.c.b16 %v413, %v404
  %v513 = vpack.c.b16 %v423, %v414
  %v514 = vpack.c.b16 %v424, %v415
  %v515 = vpack.c.b16 %v425, %v416
  %v516 = vpack.c.b16 %v426, %v417
  %v517 = vpack.c.b16 %v427, %v418
  %v518 = vpack.c.b16 %v428, %v419
  %v519 = vpack.c.b16 %v429, %v420
  %v520 = vpack.c.b16 %v430, %v421
  %v521 = vpack.c.b16 %v431, %v422
  %v522 = vpack.c.b16 %v441, %v432
  %v523 = vpack.c.b16 %v442, %v433
  %v524 = vpack.c.b16 %v443, %v434
  %v525 = vpack.c.b16 %v444, %v435
  %v526 = vpack.c.b16 %v445, %v436
  %v527 = vpack.c.b16 %v446, %v437
  %v528 = vpack.c.b16 %v447, %v438
  %v529 = vpack.c.b16 %v448, %v439
  %v530 = vpack.c.b16 %v449, %v440
  %v531 = vpack.c.b16 %v459, %v450
  %v532 = vpack.c.b16 %v460, %v451
  %v533 = vpack.c.b16 %v461, %v452
  %v534 = vpack.c.b16 %v462, %v453
  %v535 = vpack.c.b16 %v463, %v454
  %v536 = vpack.c.b16 %v464, %v455
  %v537 = vpack.c.b16 %v465, %v456
  %v538 = vpack.c.b16 %v466, %v457
  %v539 = vpack.c.b16 %v467, %v458
  %v756 = vunpack.c.l.b16 %v100
  %v757 = vunpack.c.l.b16 %v101
  %v758 = vunpack.c.l.b16 %v102
  %v759 = vunpack.c.l.b16 %v103
  %v760 = vunpack.c.l.b16 %v104
  %v761 = vunpack.c.l.b16 %v105
  %v762 = vunpack.c.l.b16 %v106
  %v763 = vunpack.c.l.b16 %v107
  %v764 = vunpack.c.l.b16 %v108
  %v765 = vunpack.c.l.b16 %v109
  %v766 = vunpack.c.l.b16 %v110
  %v767 = vunpack.c.l.b16 %v111
  %v768 = vunpack.c.l.b16 %v112
  %v769 = vunpack.c.l.b16 %v113
  %v770 = vunpack.c.l.b16 %v114
  %v771 = vunpack.c.l.b16 %v115
  %v772 = vunpack.c.l.b16 %v116
  %v773 = vunpack.c.l.b16 %v117
  %v774 = vunpack.c.l.b16 %v118
  %v775 = vunpack.c.l.b16 %v119
  %v776 = vunpack.c.l.b16 %v120
  %v777 = vunpack.c.l.b16 %v121
  %v778 = vunpack.c.l.b16 %v122
  %v779 = vunpack.c.l.b16 %v123
  %v780 = vunpack.c.l.b16 %v124
  %v781 = vunpack.c.l.b16 %v125
  %v782 = vunpack.c.l.b16 %v126
  %v783 = vunpack.c.l.b16 %v127
  %v784 = vunpack.c.l.b16 %v128
  %v785 = vunpack.c.l.b16 %v129
  %v786 = vunpack.c.l.b16 %v130
  %v787 = vunpack.c.l.b16 %v131
  %v788 = vunpack.c.l.b16 %v132
  %v789 = vunpack.c.l.b16 %v133
  %v790 = vunpack.c.l.b16 %v134
  %v791 = vunpack.c.l.b16 %v135
  %v792 = vunpack.c.l.b16 %v136
  %v793 = vunpack.c.l.b16 %v137
  %v794 = vunpack.c.l.b16 %v138
  %v795 = vunpack.c.l.b16 %v139
  %v796 = vunpack.c.l.b16 %v140
  %v797 = vunpack.c.l.b16 %v141
  %v798 = vunpack.c.l.b16 %v142
  %v799 = vunpack.c.l.b16 %v143
  %v800 = vunpack.c.l.b16 %v144
  %v801 = vunpack.c.l.b16 %v145
  %v802 = vunpack.c.l.b16 %v146
  %v803 = vunpack.c.l.b16 %v147
  %v804 = vunpack.c.l.b16 %v148
  %v805 = vunpack.c.l.b16 %v149
  %v806 = vunpack.c.l.b16 %v150
  %v807 = vunpack.c.l.b16 %v151
  %v808 = vunpack.c.l.b16 %v152
  %v809 = vunpack.c.l.b16 %v153
  %v810 = vunpack.c.l.b16 %v154
  %v811 = vunpack.c.l.b16 %v155
  %v812 = vunpack.c.l.b16 %v156
  %v813 = vunpack.c.l.b16 %v157
  %v814 = vunpack.c.l.b16 %v158
  %v815 = vunpack.c.l.b16 %v159
  %v816 = vunpack.c.l.b16 %v160
  %v817 = vunpack.c.l.b16 %v161
  %v818 = vunpack.c.l.b16 %v162
  %v819 = vunpack.c.l.b16 %v163
  %v820 = vunpack.c.l.b16 %v164
  %v821 = vunpack.c.l.b16 %v165
  %v822 = vunpack.c.l.b16 %v166
  %v823 = vunpack.c.l.b16 %v167
  %v824 = vunpack.c.l.b16 %v168
  %v825 = vunpack.c.l.b16 %v169
  %v826 = vunpack.c.l.b16 %v170
  %v827 = vunpack.c.l.b16 %v171
  %v828 = vunpack.c.l.b16 %v172
  %v829 = vunpack.c.l.b16 %v173
  %v830 = vunpack.c.l.b16 %v174
  %v831 = vunpack.c.l.b16 %v175
  %v832 = vunpack.c.l.b16 %v176
  %v833 = vunpack.c.l.b16 %v177
  %v834 = vunpack.c.l.b16 %v178
  %v835 = vunpack.c.l.b16 %v179
  %v836 = vunpack.c.l.b16 %v180
  %v837 = vunpack.c.l.b16 %v181
  %v838 = vunpack.c.l.b16 %v182
  %v839 = vunpack.c.l.b16 %v183
  %v840 = vunpack.c.l.b16 %v184
  %v841 = vunpack.c.l.b16 %v185
  %v842 = vunpack.c.l.b16 %v186
  %v843 = vunpack.c.l.b16 %v187
  %v844 = vunpack.c.l.b16 %v188
  %v845 = vunpack.c.l.b16 %v189
  %v846 = vunpack.c.l.b16 %v190
  %v847 = vunpack.c.l.b16 %v191
  %v848 = vunpack.c.l.b16 %v192
  %v849 = vunpack.c.l.b16 %v193
  %v850 = vunpack.c.l.b16 %v194
  %v851 = vunpack.c.l.b16 %v195
  %v852 = vunpack.c.l.b16 %v196
  %v853 = vunpack.c.l.b16 %v197
  %v854 = vunpack.c.l.b16 %v198
  %v855 = vunpack.c.l.b16 %v199
  %v856 = vunpack.c.l.b16 %v200
  %v857 = vunpack.c.l.b16 %v201
  %v858 = vunpack.c.l.b16 %v202
  %v859 = vunpack.c.l.b16 %v203
  %v860 = vunpack.c.l.b16 %v204
  %v861 = vunpack.c.l.b16 %v205
  %v862 = vunpack.c.l.b16 %v206
  %v863 = vunpack.c.l.b16 %v207
  %v864 = vunpack.c.l.b16 %v208
  %v865 = vunpack.c.l.b16 %v209
  %v866 = vunpack.c.l.b16 %v210
  %v867 = vunpack.c.l.b16 %v211
  %v868 = vunpack.c.l.b16 %v212
  %v869 = vunpack.c.l.b16 %v213
  %v870 = vunpack.c.l.b16 %v214
  %v871 = vunpack.c.l.b16 %v215
  %v872 = vunpack.c.l.b16 %v216
  %v873 = vunpack.c.l.b16 %v217
  %v874 = vunpack.c.l.b16 %v218
  %v875 = vunpack.c.l.b16 %v219
  %v876 = vunpack.c.l.b16 %v220
  %v877 = vunpack.c.l.b16 %v221
  %v878 = vunpack.c.l.b16 %v222
  %v879 = vunpack.c.l.b16 %v223
  %v880 = vunpack.c.l.b16 %v224
  %v881 = vunpack.c.l.b16 %v225
  %v882 = vunpack.c.l.b16 %v226
  %v883 = vunpack.c.l.b16 %v227
  %v884 = vunpack.c.l.b16 %v228
  %v885 = vunpack.c.l.b16 %v229
  %v886 = vunpack.c.l.b16 %v230
  %v887 = vunpack.c.l.b16 %v231
  %v888 = vunpack.c.l.b16 %v232
  %v889 = vunpack.c.l.b16 %v233
  %v890 = vunpack.c.l.b16 %v234
  %v891 = vunpack.c.l.b16 %v235
  %v892 = vunpack.c.l.b16 %v236
  %v893 = vunpack.c.l.b16 %v237
  %v894 = vunpack.c.l.b16 %v238
  %v895 = vunpack.c.l.b16 %v239
  %v896 = vunpack.c.l.b16 %v240
  %v897 = vunpack.c.l.b16 %v241
  %v898 = vunpack.c.l.b16 %v242
  %v899 = vunpack.c.l.b16 %v243
  %v900 = vpack.c.b16 %v757, %v756
  %v901 = vpack.c.b16 %v759, %v758
  %v902 = vpack.c.b16 %v761, %v760
  %v903 = vpack.c.b16 %v763, %v762
  %v904 = vpack.c.b16 %v765, %v764
  %v905 = vpack.c.b16 %v767, %v766
  %v906 = vpack.c.b16 %v769, %v768
  %v907 = vpack.c.b16 %v771, %v770
  %v908 = vpack.c.b16 %v773, %v772
  %v909 = vpack.c.b16 %v775, %v774
  %v910 = vpack.c.b16 %v777, %v776
  %v911 = vpack.c.b16 %v779, %v778
  %v912 = vpack.c.b16 %v781, %v780
  %v913 = vpack.c.b16 %v783, %v782
  %v914 = vpack.c.b16 %v785, %v784
  %v915 = vpack.c.b16 %v787, %v786
  %v916 = vpack.c.b16 %v789, %v788
  %v917 = vpack.c.b16 %v791, %v790
  %v918 = vpack.c.b16 %v793, %v792
  %v919 = vpack.c.b16 %v795, %v794
  %v920 = vpack.c.b16 %v797, %v796
  %v921 = vpack.c.b16 %v799, %v798
  %v922 = vpack.c.b16 %v801, %v800
  %v923 = vpack.c.b16 %v803, %v802
  %v924 = vpack.c.b16 %v805, %v804
  %v925 = vpack.c.b16 %v807, %v806
  %v926 = vpack.c.b16 %v809, %v808
  %v927 = vpack.c.b16 %v811, %v810
  %v928 = vpack.c.b16 %v813, %v812
  %v929 = vpack.c.b16 %v815, %v814
  %v930 = vpack.c.b16 %v817, %v816
  %v931 = vpack.c.b16 %v819, %v818
  %v932 = vpack.c.b16 %v821, %v820
  %v933 = vpack.c.b16 %v823, %v822
  %v934 = vpack.c.b16 %v825, %v824
  %v935 = vpack.c.b16 %v827, %v826
  %v936 = vpack.c.b16 %v829, %v828
  %v937 = vpack.c.b16 %v831, %v830
  %v938 = vpack.c.b16 %v833, %v832
  %v939 = vpack.c.b16 %v835, %v834
  %v940 = vpack.c.b16 %v837, %v836
  %v941 = vpack.c.b16 %v839, %v838
  %v942 = vpack.c.b16 %v841, %v840
  %v943 = vpack.c.b16 %v843, %v842
  %v944 = vpack.c.b16 %v845, %v844
  %v945 = vpack.c.b16 %v847, %v846
  %v946 = vpack.c.b16 %v849, %v848
  %v947 = vpack.c.b16 %v851, %v850
  %v948 = vpack.c.b16 %v853, %v852
  %v949 = vpack.c.b16 %v855, %v854
  %v950 = vpack.c.b16 %v857, %v856
  %v951 = vpack.c.b16 %v859, %v858
  %v952 = vpack.c.b16 %v861, %v860
  %v953 = vpack.c.b16 %v863, %v862
  %v954 = vpack.c.b16 %v865, %v864
  %v955 = vpack.c.b16 %v867, %v866
  %v956 = vpack.c.b16 %v869, %v868
  %v957 = vpack.c.b16 %v871, %v870
  %v958 = vpack.c.b16 %v873, %v872
  %v959 = vpack.c.b16 %v875, %v874
  %v960 = vpack.c.b16 %v877, %v876
  %v961 = vpack.c.b16 %v879, %v878
  %v962 = vpack.c.b16 %v881, %v880
  %v963 = vpack.c.b16 %v883, %v882
  %v964 = vpack.c.b16 %v885, %v884
  %v965 = vpack.c.b16 %v887, %v886
  %v966 = vpack.c.b16 %v889, %v888
  %v967 = vpack.c.b16 %v891, %v890
  %v968 = vpack.c.b16 %v893, %v892
  %v969 = vpack.c.b16 %v895, %v894
  %v970 = vpack.c.b16 %v897, %v896
  %v971 = vpack.c.b16 %v899, %v898
  %1044 = vmatprep.subr.bf16.mxu0 0
  %1045 = vmatpush1.bf16.msra.mxu0 %v907
  %1046 = vmatprep.subr.bf16.mxu0 0
  %1047 = vmatpush1.bf16.msra.mxu0 %v906
  %1048 = vmatprep.subr.bf16.mxu0 0
  %1049 = vmatpush1.bf16.msra.mxu0 %v905
  %1050 = vmatprep.subr.bf16.mxu0 0
  %1051 = vmatpush1.bf16.msra.mxu0 %v904
  %1052 = vmatprep.subr.bf16.mxu0 0
  %1053 = vmatpush1.bf16.msra.mxu0 %v903
  %1054 = vmatprep.subr.bf16.mxu0 0
  %1055 = vmatpush1.bf16.msra.mxu0 %v902
  %1056 = vmatprep.subr.bf16.mxu0 0
  %1057 = vmatpush1.bf16.msra.mxu0 %v901
  %1058 = vmatprep.subr.bf16.mxu0 0
  %1059 = vmatpush1.bf16.msra.mxu0 %v900
  %1060 = vmatprep.subr.bf16.mxu0 0
  %1061 = vmatpush2.bf16.msra.mxu0 %v915
  %1062 = vmatprep.subr.bf16.mxu0 0
  %1063 = vmatpush2.bf16.msra.mxu0 %v914
  %1064 = vmatprep.subr.bf16.mxu0 0
  %1065 = vmatpush2.bf16.msra.mxu0 %v913
  %1066 = vmatprep.subr.bf16.mxu0 0
  %1067 = vmatpush2.bf16.msra.mxu0 %v912
  %1068 = vmatprep.subr.bf16.mxu0 0
  %1069 = vmatpush2.bf16.msra.mxu0 %v911
  %1070 = vmatprep.subr.bf16.mxu0 0
  %1071 = vmatpush2.bf16.msra.mxu0 %v910
  %1072 = vmatprep.subr.bf16.mxu0 0
  %1073 = vmatpush2.bf16.msra.mxu0 %v909
  %1074 = vmatprep.subr.bf16.mxu0 0
  %1075 = vmatpush2.bf16.msra.mxu0 %v908
  %1076 = vmatprep.mubr.bf16.mxu0 %v469
  %1077 = vmatmul.mubr.bf16.gmra.mxu0 %v468
  %v1078 = vpop.f32.mrf.mxu0
  %v1079 = vadd.f32 0.0, %v1078
  %v1080 = vpop.f32.mrf.mxu0
  %v1081 = vpop.f32.mrf.mxu0
  %v1082 = vadd.f32 0.0, %v1081
  %v1083 = vpop.f32.mrf.mxu0
  %1084 = vmatprep.mubr.bf16.mxu0 %v478
  %1085 = vmatmul.mubr.bf16.gmra.mxu0 %v477
  %v1086 = vpop.f32.mrf.mxu0
  %v1087 = vadd.f32 0.0, %v1086
  %v1088 = vpop.f32.mrf.mxu0
  %v1089 = vpop.f32.mrf.mxu0
  %v1090 = vadd.f32 0.0, %v1089
  %v1091 = vpop.f32.mrf.mxu0
  %1092 = vmatprep.mubr.bf16.mxu0 %v487
  %1093 = vmatmul.mubr.bf16.gmra.mxu0 %v486
  %v1094 = vpop.f32.mrf.mxu0
  %v1095 = vadd.f32 0.0, %v1094
  %v1096 = vpop.f32.mrf.mxu0
  %v1097 = vpop.f32.mrf.mxu0
  %v1098 = vadd.f32 0.0, %v1097
  %v1099 = vpop.f32.mrf.mxu0
  %1100 = vmatprep.mubr.bf16.mxu0 %v496
  %1101 = vmatmul.mubr.bf16.gmra.mxu0 %v495
  %v1102 = vpop.f32.mrf.mxu0
  %v1103 = vadd.f32 0.0, %v1102
  %v1104 = vpop.f32.mrf.mxu0
  %v1105 = vpop.f32.mrf.mxu0
  %v1106 = vadd.f32 0.0, %v1105
  %v1107 = vpop.f32.mrf.mxu0
  %1108 = vmatprep.mubr.bf16.mxu0 %v505
  %1109 = vmatmul.mubr.bf16.gmra.mxu0 %v504
  %v1110 = vpop.f32.mrf.mxu0
  %v1111 = vadd.f32 0.0, %v1110
  %v1112 = vpop.f32.mrf.mxu0
  %v1113 = vpop.f32.mrf.mxu0
  %v1114 = vadd.f32 0.0, %v1113
  %v1115 = vpop.f32.mrf.mxu0
  %1116 = vmatprep.mubr.bf16.mxu0 %v514
  %1117 = vmatmul.mubr.bf16.gmra.mxu0 %v513
  %v1118 = vpop.f32.mrf.mxu0
  %v1119 = vadd.f32 0.0, %v1118
  %v1120 = vpop.f32.mrf.mxu0
  %v1121 = vpop.f32.mrf.mxu0
  %v1122 = vadd.f32 0.0, %v1121
  %v1123 = vpop.f32.mrf.mxu0
  %1124 = vmatprep.mubr.bf16.mxu0 %v523
  %1125 = vmatmul.mubr.bf16.gmra.mxu0 %v522
  %v1126 = vpop.f32.mrf.mxu0
  %v1127 = vadd.f32 0.0, %v1126
  %v1128 = vpop.f32.mrf.mxu0
  %v1129 = vpop.f32.mrf.mxu0
  %v1130 = vadd.f32 0.0, %v1129
  %v1131 = vpop.f32.mrf.mxu0
  %1132 = vmatprep.mubr.bf16.mxu0 %v532
  %1133 = vmatmul.mubr.bf16.gmra.mxu0 %v531
  %v1134 = vpop.f32.mrf.mxu0
  %v1135 = vadd.f32 0.0, %v1134
  %v1136 = vpop.f32.mrf.mxu0
  %v1137 = vpop.f32.mrf.mxu0
  %v1138 = vadd.f32 0.0, %v1137
  %v1139 = vpop.f32.mrf.mxu0
  %1140 = vdwg.mxu0
  %1141 = vmatprep.subr.bf16.mxu0 0
  %1142 = vmatpush1.bf16.msra.mxu0 %v923
  %1143 = vmatprep.subr.bf16.mxu0 0
  %1144 = vmatpush1.bf16.msra.mxu0 %v922
  %1145 = vmatprep.subr.bf16.mxu0 0
  %1146 = vmatpush1.bf16.msra.mxu0 %v921
  %1147 = vmatprep.subr.bf16.mxu0 0
  %1148 = vmatpush1.bf16.msra.mxu0 %v920
  %1149 = vmatprep.subr.bf16.mxu0 0
  %1150 = vmatpush1.bf16.msra.mxu0 %v919
  %1151 = vmatprep.subr.bf16.mxu0 0
  %1152 = vmatpush1.bf16.msra.mxu0 %v918
  %1153 = vmatprep.subr.bf16.mxu0 0
  %1154 = vmatpush1.bf16.msra.mxu0 %v917
  %1155 = vmatprep.subr.bf16.mxu0 0
  %1156 = vmatpush1.bf16.msra.mxu0 %v916
  %1157 = vmatprep.subr.bf16.mxu0 0
  %1158 = vmatpush2.bf16.msra.mxu0 %v931
  %1159 = vmatprep.subr.bf16.mxu0 0
  %1160 = vmatpush2.bf16.msra.mxu0 %v930
  %1161 = vmatprep.subr.bf16.mxu0 0
  %1162 = vmatpush2.bf16.msra.mxu0 %v929
  %1163 = vmatprep.subr.bf16.mxu0 0
  %1164 = vmatpush2.bf16.msra.mxu0 %v928
  %1165 = vmatprep.subr.bf16.mxu0 0
  %1166 = vmatpush2.bf16.msra.mxu0 %v927
  %1167 = vmatprep.subr.bf16.mxu0 0
  %1168 = vmatpush2.bf16.msra.mxu0 %v926
  %1169 = vmatprep.subr.bf16.mxu0 0
  %1170 = vmatpush2.bf16.msra.mxu0 %v925
  %1171 = vmatprep.subr.bf16.mxu0 0
  %1172 = vmatpush2.bf16.msra.mxu0 %v924
  %1173 = vmatprep.mubr.bf16.mxu0 %v471
  %1174 = vmatmul.mubr.bf16.gmra.mxu0 %v470
  %v1175 = vpop.f32.mrf.mxu0
  %v1176 = vadd.f32 %v1079, %v1175
  %v1177 = vpop.f32.mrf.mxu0
  %v1178 = vpop.f32.mrf.mxu0
  %v1179 = vadd.f32 %v1082, %v1178
  %v1180 = vpop.f32.mrf.mxu0
  %1181 = vmatprep.mubr.bf16.mxu0 %v480
  %1182 = vmatmul.mubr.bf16.gmra.mxu0 %v479
  %v1183 = vpop.f32.mrf.mxu0
  %v1184 = vadd.f32 %v1087, %v1183
  %v1185 = vpop.f32.mrf.mxu0
  %v1186 = vpop.f32.mrf.mxu0
  %v1187 = vadd.f32 %v1090, %v1186
  %v1188 = vpop.f32.mrf.mxu0
  %1189 = vmatprep.mubr.bf16.mxu0 %v489
  %1190 = vmatmul.mubr.bf16.gmra.mxu0 %v488
  %v1191 = vpop.f32.mrf.mxu0
  %v1192 = vadd.f32 %v1095, %v1191
  %v1193 = vpop.f32.mrf.mxu0
  %v1194 = vpop.f32.mrf.mxu0
  %v1195 = vadd.f32 %v1098, %v1194
  %v1196 = vpop.f32.mrf.mxu0
  %1197 = vmatprep.mubr.bf16.mxu0 %v498
  %1198 = vmatmul.mubr.bf16.gmra.mxu0 %v497
  %v1199 = vpop.f32.mrf.mxu0
  %v1200 = vadd.f32 %v1103, %v1199
  %v1201 = vpop.f32.mrf.mxu0
  %v1202 = vpop.f32.mrf.mxu0
  %v1203 = vadd.f32 %v1106, %v1202
  %v1204 = vpop.f32.mrf.mxu0
  %1205 = vmatprep.mubr.bf16.mxu0 %v507
  %1206 = vmatmul.mubr.bf16.gmra.mxu0 %v506
  %v1207 = vpop.f32.mrf.mxu0
  %v1208 = vadd.f32 %v1111, %v1207
  %v1209 = vpop.f32.mrf.mxu0
  %v1210 = vpop.f32.mrf.mxu0
  %v1211 = vadd.f32 %v1114, %v1210
  %v1212 = vpop.f32.mrf.mxu0
  %1213 = vmatprep.mubr.bf16.mxu0 %v516
  %1214 = vmatmul.mubr.bf16.gmra.mxu0 %v515
  %v1215 = vpop.f32.mrf.mxu0
  %v1216 = vadd.f32 %v1119, %v1215
  %v1217 = vpop.f32.mrf.mxu0
  %v1218 = vpop.f32.mrf.mxu0
  %v1219 = vadd.f32 %v1122, %v1218
  %v1220 = vpop.f32.mrf.mxu0
  %1221 = vmatprep.mubr.bf16.mxu0 %v525
  %1222 = vmatmul.mubr.bf16.gmra.mxu0 %v524
  %v1223 = vpop.f32.mrf.mxu0
  %v1224 = vadd.f32 %v1127, %v1223
  %v1225 = vpop.f32.mrf.mxu0
  %v1226 = vpop.f32.mrf.mxu0
  %v1227 = vadd.f32 %v1130, %v1226
  %v1228 = vpop.f32.mrf.mxu0
  %1229 = vmatprep.mubr.bf16.mxu0 %v534
  %1230 = vmatmul.mubr.bf16.gmra.mxu0 %v533
  %v1231 = vpop.f32.mrf.mxu0
  %v1232 = vadd.f32 %v1135, %v1231
  %v1233 = vpop.f32.mrf.mxu0
  %v1234 = vpop.f32.mrf.mxu0
  %v1235 = vadd.f32 %v1138, %v1234
  %v1236 = vpop.f32.mrf.mxu0
  %1237 = vdwg.mxu0
  %1238 = vmatprep.subr.bf16.mxu0 0
  %1239 = vmatpush1.bf16.msra.mxu0 %v939
  %1240 = vmatprep.subr.bf16.mxu0 0
  %1241 = vmatpush1.bf16.msra.mxu0 %v938
  %1242 = vmatprep.subr.bf16.mxu0 0
  %1243 = vmatpush1.bf16.msra.mxu0 %v937
  %1244 = vmatprep.subr.bf16.mxu0 0
  %1245 = vmatpush1.bf16.msra.mxu0 %v936
  %1246 = vmatprep.subr.bf16.mxu0 0
  %1247 = vmatpush1.bf16.msra.mxu0 %v935
  %1248 = vmatprep.subr.bf16.mxu0 0
  %1249 = vmatpush1.bf16.msra.mxu0 %v934
  %1250 = vmatprep.subr.bf16.mxu0 0
  %1251 = vmatpush1.bf16.msra.mxu0 %v933
  %1252 = vmatprep.subr.bf16.mxu0 0
  %1253 = vmatpush1.bf16.msra.mxu0 %v932
  %1254 = vmatprep.subr.bf16.mxu0 0
  %1255 = vmatpush2.bf16.msra.mxu0 %v947
  %1256 = vmatprep.subr.bf16.mxu0 0
  %1257 = vmatpush2.bf16.msra.mxu0 %v946
  %1258 = vmatprep.subr.bf16.mxu0 0
  %1259 = vmatpush2.bf16.msra.mxu0 %v945
  %1260 = vmatprep.subr.bf16.mxu0 0
  %1261 = vmatpush2.bf16.msra.mxu0 %v944
  %1262 = vmatprep.subr.bf16.mxu0 0
  %1263 = vmatpush2.bf16.msra.mxu0 %v943
  %1264 = vmatprep.subr.bf16.mxu0 0
  %1265 = vmatpush2.bf16.msra.mxu0 %v942
  %1266 = vmatprep.subr.bf16.mxu0 0
  %1267 = vmatpush2.bf16.msra.mxu0 %v941
  %1268 = vmatprep.subr.bf16.mxu0 0
  %1269 = vmatpush2.bf16.msra.mxu0 %v940
  %1270 = vmatprep.mubr.bf16.mxu0 %v473
  %1271 = vmatmul.mubr.bf16.gmra.mxu0 %v472
  %v1272 = vpop.f32.mrf.mxu0
  %v1273 = vadd.f32 %v1176, %v1272
  %v1274 = vpop.f32.mrf.mxu0
  %v1275 = vpop.f32.mrf.mxu0
  %v1276 = vadd.f32 %v1179, %v1275
  %v1277 = vpop.f32.mrf.mxu0
  %1278 = vmatprep.mubr.bf16.mxu0 %v482
  %1279 = vmatmul.mubr.bf16.gmra.mxu0 %v481
  %v1280 = vpop.f32.mrf.mxu0
  %v1281 = vadd.f32 %v1184, %v1280
  %v1282 = vpop.f32.mrf.mxu0
  %v1283 = vpop.f32.mrf.mxu0
  %v1284 = vadd.f32 %v1187, %v1283
  %v1285 = vpop.f32.mrf.mxu0
  %1286 = vmatprep.mubr.bf16.mxu0 %v491
  %1287 = vmatmul.mubr.bf16.gmra.mxu0 %v490
  %v1288 = vpop.f32.mrf.mxu0
  %v1289 = vadd.f32 %v1192, %v1288
  %v1290 = vpop.f32.mrf.mxu0
  %v1291 = vpop.f32.mrf.mxu0
  %v1292 = vadd.f32 %v1195, %v1291
  %v1293 = vpop.f32.mrf.mxu0
  %1294 = vmatprep.mubr.bf16.mxu0 %v500
  %1295 = vmatmul.mubr.bf16.gmra.mxu0 %v499
  %v1296 = vpop.f32.mrf.mxu0
  %v1297 = vadd.f32 %v1200, %v1296
  %v1298 = vpop.f32.mrf.mxu0
  %v1299 = vpop.f32.mrf.mxu0
  %v1300 = vadd.f32 %v1203, %v1299
  %v1301 = vpop.f32.mrf.mxu0
  %1302 = vmatprep.mubr.bf16.mxu0 %v509
  %1303 = vmatmul.mubr.bf16.gmra.mxu0 %v508
  %v1304 = vpop.f32.mrf.mxu0
  %v1305 = vadd.f32 %v1208, %v1304
  %v1306 = vpop.f32.mrf.mxu0
  %v1307 = vpop.f32.mrf.mxu0
  %v1308 = vadd.f32 %v1211, %v1307
  %v1309 = vpop.f32.mrf.mxu0
  %1310 = vmatprep.mubr.bf16.mxu0 %v518
  %1311 = vmatmul.mubr.bf16.gmra.mxu0 %v517
  %v1312 = vpop.f32.mrf.mxu0
  %v1313 = vadd.f32 %v1216, %v1312
  %v1314 = vpop.f32.mrf.mxu0
  %v1315 = vpop.f32.mrf.mxu0
  %v1316 = vadd.f32 %v1219, %v1315
  %v1317 = vpop.f32.mrf.mxu0
  %1318 = vmatprep.mubr.bf16.mxu0 %v527
  %1319 = vmatmul.mubr.bf16.gmra.mxu0 %v526
  %v1320 = vpop.f32.mrf.mxu0
  %v1321 = vadd.f32 %v1224, %v1320
  %v1322 = vpop.f32.mrf.mxu0
  %v1323 = vpop.f32.mrf.mxu0
  %v1324 = vadd.f32 %v1227, %v1323
  %v1325 = vpop.f32.mrf.mxu0
  %1326 = vmatprep.mubr.bf16.mxu0 %v536
  %1327 = vmatmul.mubr.bf16.gmra.mxu0 %v535
  %v1328 = vpop.f32.mrf.mxu0
  %v1329 = vadd.f32 %v1232, %v1328
  %v1330 = vpop.f32.mrf.mxu0
  %v1331 = vpop.f32.mrf.mxu0
  %v1332 = vadd.f32 %v1235, %v1331
  %v1333 = vpop.f32.mrf.mxu0
  %1334 = vdwg.mxu0
  %1335 = vmatprep.subr.bf16.mxu0 0
  %1336 = vmatpush1.bf16.msra.mxu0 %v955
  %1337 = vmatprep.subr.bf16.mxu0 0
  %1338 = vmatpush1.bf16.msra.mxu0 %v954
  %1339 = vmatprep.subr.bf16.mxu0 0
  %1340 = vmatpush1.bf16.msra.mxu0 %v953
  %1341 = vmatprep.subr.bf16.mxu0 0
  %1342 = vmatpush1.bf16.msra.mxu0 %v952
  %1343 = vmatprep.subr.bf16.mxu0 0
  %1344 = vmatpush1.bf16.msra.mxu0 %v951
  %1345 = vmatprep.subr.bf16.mxu0 0
  %1346 = vmatpush1.bf16.msra.mxu0 %v950
  %1347 = vmatprep.subr.bf16.mxu0 0
  %1348 = vmatpush1.bf16.msra.mxu0 %v949
  %1349 = vmatprep.subr.bf16.mxu0 0
  %1350 = vmatpush1.bf16.msra.mxu0 %v948
  %1351 = vmatprep.subr.bf16.mxu0 0
  %1352 = vmatpush2.bf16.msra.mxu0 %v963
  %1353 = vmatprep.subr.bf16.mxu0 0
  %1354 = vmatpush2.bf16.msra.mxu0 %v962
  %1355 = vmatprep.subr.bf16.mxu0 0
  %1356 = vmatpush2.bf16.msra.mxu0 %v961
  %1357 = vmatprep.subr.bf16.mxu0 0
  %1358 = vmatpush2.bf16.msra.mxu0 %v960
  %1359 = vmatprep.subr.bf16.mxu0 0
  %1360 = vmatpush2.bf16.msra.mxu0 %v959
  %1361 = vmatprep.subr.bf16.mxu0 0
  %1362 = vmatpush2.bf16.msra.mxu0 %v958
  %1363 = vmatprep.subr.bf16.mxu0 0
  %1364 = vmatpush2.bf16.msra.mxu0 %v957
  %1365 = vmatprep.subr.bf16.mxu0 0
  %1366 = vmatpush2.bf16.msra.mxu0 %v956
  %1367 = vmatprep.mubr.bf16.mxu0 %v475
  %1368 = vmatmul.mubr.bf16.gmra.mxu0 %v474
  %v1369 = vpop.f32.mrf.mxu0
  %v1370 = vadd.f32 %v1273, %v1369
  %v1371 = vpop.f32.mrf.mxu0
  %v1372 = vpop.f32.mrf.mxu0
  %v1373 = vadd.f32 %v1276, %v1372
  %v1374 = vpop.f32.mrf.mxu0
  %1375 = vmatprep.mubr.bf16.mxu0 %v484
  %1376 = vmatmul.mubr.bf16.gmra.mxu0 %v483
  %v1377 = vpop.f32.mrf.mxu0
  %v1378 = vadd.f32 %v1281, %v1377
  %v1379 = vpop.f32.mrf.mxu0
  %v1380 = vpop.f32.mrf.mxu0
  %v1381 = vadd.f32 %v1284, %v1380
  %v1382 = vpop.f32.mrf.mxu0
  %1383 = vmatprep.mubr.bf16.mxu0 %v493
  %1384 = vmatmul.mubr.bf16.gmra.mxu0 %v492
  %v1385 = vpop.f32.mrf.mxu0
  %v1386 = vadd.f32 %v1289, %v1385
  %v1387 = vpop.f32.mrf.mxu0
  %v1388 = vpop.f32.mrf.mxu0
  %v1389 = vadd.f32 %v1292, %v1388
  %v1390 = vpop.f32.mrf.mxu0
  %1391 = vmatprep.mubr.bf16.mxu0 %v502
  %1392 = vmatmul.mubr.bf16.gmra.mxu0 %v501
  %v1393 = vpop.f32.mrf.mxu0
  %v1394 = vadd.f32 %v1297, %v1393
  %v1395 = vpop.f32.mrf.mxu0
  %v1396 = vpop.f32.mrf.mxu0
  %v1397 = vadd.f32 %v1300, %v1396
  %v1398 = vpop.f32.mrf.mxu0
  %1399 = vmatprep.mubr.bf16.mxu0 %v511
  %1400 = vmatmul.mubr.bf16.gmra.mxu0 %v510
  %v1401 = vpop.f32.mrf.mxu0
  %v1402 = vadd.f32 %v1305, %v1401
  %v1403 = vpop.f32.mrf.mxu0
  %v1404 = vpop.f32.mrf.mxu0
  %v1405 = vadd.f32 %v1308, %v1404
  %v1406 = vpop.f32.mrf.mxu0
  %1407 = vmatprep.mubr.bf16.mxu0 %v520
  %1408 = vmatmul.mubr.bf16.gmra.mxu0 %v519
  %v1409 = vpop.f32.mrf.mxu0
  %v1410 = vadd.f32 %v1313, %v1409
  %v1411 = vpop.f32.mrf.mxu0
  %v1412 = vpop.f32.mrf.mxu0
  %v1413 = vadd.f32 %v1316, %v1412
  %v1414 = vpop.f32.mrf.mxu0
  %1415 = vmatprep.mubr.bf16.mxu0 %v529
  %1416 = vmatmul.mubr.bf16.gmra.mxu0 %v528
  %v1417 = vpop.f32.mrf.mxu0
  %v1418 = vadd.f32 %v1321, %v1417
  %v1419 = vpop.f32.mrf.mxu0
  %v1420 = vpop.f32.mrf.mxu0
  %v1421 = vadd.f32 %v1324, %v1420
  %v1422 = vpop.f32.mrf.mxu0
  %1423 = vmatprep.mubr.bf16.mxu0 %v538
  %1424 = vmatmul.mubr.bf16.gmra.mxu0 %v537
  %v1425 = vpop.f32.mrf.mxu0
  %v1426 = vadd.f32 %v1329, %v1425
  %v1427 = vpop.f32.mrf.mxu0
  %v1428 = vpop.f32.mrf.mxu0
  %v1429 = vadd.f32 %v1332, %v1428
  %v1430 = vpop.f32.mrf.mxu0
  %1431 = vdwg.mxu0
  %1432 = vmatprep.subr.bf16.mxu0 0
  %1433 = vmatpush1.bf16.msra.mxu0 %v971
  %1434 = vmatprep.subr.bf16.mxu0 0
  %1435 = vmatpush1.bf16.msra.mxu0 %v970
  %1436 = vmatprep.subr.bf16.mxu0 0
  %1437 = vmatpush1.bf16.msra.mxu0 %v969
  %1438 = vmatprep.subr.bf16.mxu0 0
  %1439 = vmatpush1.bf16.msra.mxu0 %v968
  %1440 = vmatprep.subr.bf16.mxu0 0
  %1441 = vmatpush1.bf16.msra.mxu0 %v967
  %1442 = vmatprep.subr.bf16.mxu0 0
  %1443 = vmatpush1.bf16.msra.mxu0 %v966
  %1444 = vmatprep.subr.bf16.mxu0 0
  %1445 = vmatpush1.bf16.msra.mxu0 %v965
  %1446 = vmatprep.subr.bf16.mxu0 0
  %1447 = vmatpush1.bf16.msra.mxu0 %v964
  %1448 = vmatprep.subr.bf16.mxu0 0
  %1449 = vmatpush2.bf16.msra.mxu0 0
  %1450 = vmatprep.subr.bf16.mxu0 0
  %1451 = vmatpush2.bf16.msra.mxu0 0
  %1452 = vmatprep.subr.bf16.mxu0 0
  %1453 = vmatpush2.bf16.msra.mxu0 0
  %1454 = vmatprep.subr.bf16.mxu0 0
  %1455 = vmatpush2.bf16.msra.mxu0 0
  %1456 = vmatprep.subr.bf16.mxu0 0
  %1457 = vmatpush2.bf16.msra.mxu0 0
  %1458 = vmatprep.subr.bf16.mxu0 0
  %1459 = vmatpush2.bf16.msra.mxu0 0
  %1460 = vmatprep.subr.bf16.mxu0 0
  %1461 = vmatpush2.bf16.msra.mxu0 0
  %1462 = vmatprep.subr.bf16.mxu0 0
  %1463 = vmatpush2.bf16.msra.mxu0 0
  %1464 = vmatprep.mubr.bf16.mxu0 0
  %1465 = vmatmul.mubr.bf16.gmra.mxu0 %v476
  %v1466 = vpop.f32.mrf.mxu0
  %v1467 = vadd.f32 %v1370, %v1466
  %v1468 = vpop.f32.mrf.mxu0
  %v1469 = vpop.f32.mrf.mxu0
  %v1470 = vadd.f32 %v1373, %v1469
  %v1471 = vpop.f32.mrf.mxu0
  %1472 = vmatprep.mubr.bf16.mxu0 0
  %1473 = vmatmul.mubr.bf16.gmra.mxu0 %v485
  %v1474 = vpop.f32.mrf.mxu0
  %v1475 = vadd.f32 %v1378, %v1474
  %v1476 = vpop.f32.mrf.mxu0
  %v1477 = vpop.f32.mrf.mxu0
  %v1478 = vadd.f32 %v1381, %v1477
  %v1479 = vpop.f32.mrf.mxu0
  %1480 = vmatprep.mubr.bf16.mxu0 0
  %1481 = vmatmul.mubr.bf16.gmra.mxu0 %v494
  %v1482 = vpop.f32.mrf.mxu0
  %v1483 = vadd.f32 %v1386, %v1482
  %v1484 = vpop.f32.mrf.mxu0
  %v1485 = vpop.f32.mrf.mxu0
  %v1486 = vadd.f32 %v1389, %v1485
  %v1487 = vpop.f32.mrf.mxu0
  %1488 = vmatprep.mubr.bf16.mxu0 0
  %1489 = vmatmul.mubr.bf16.gmra.mxu0 %v503
  %v1490 = vpop.f32.mrf.mxu0
  %v1491 = vadd.f32 %v1394, %v1490
  %v1492 = vpop.f32.mrf.mxu0
  %v1493 = vpop.f32.mrf.mxu0
  %v1494 = vadd.f32 %v1397, %v1493
  %v1495 = vpop.f32.mrf.mxu0
  %1496 = vmatprep.mubr.bf16.mxu0 0
  %1497 = vmatmul.mubr.bf16.gmra.mxu0 %v512
  %v1498 = vpop.f32.mrf.mxu0
  %v1499 = vadd.f32 %v1402, %v1498
  %v1500 = vpop.f32.mrf.mxu0
  %v1501 = vpop.f32.mrf.mxu0
  %v1502 = vadd.f32 %v1405, %v1501
  %v1503 = vpop.f32.mrf.mxu0
  %1504 = vmatprep.mubr.bf16.mxu0 0
  %1505 = vmatmul.mubr.bf16.gmra.mxu0 %v521
  %v1506 = vpop.f32.mrf.mxu0
  %v1507 = vadd.f32 %v1410, %v1506
  %v1508 = vpop.f32.mrf.mxu0
  %v1509 = vpop.f32.mrf.mxu0
  %v1510 = vadd.f32 %v1413, %v1509
  %v1511 = vpop.f32.mrf.mxu0
  %1512 = vmatprep.mubr.bf16.mxu0 0
  %1513 = vmatmul.mubr.bf16.gmra.mxu0 %v530
  %v1514 = vpop.f32.mrf.mxu0
  %v1515 = vadd.f32 %v1418, %v1514
  %v1516 = vpop.f32.mrf.mxu0
  %v1517 = vpop.f32.mrf.mxu0
  %v1518 = vadd.f32 %v1421, %v1517
  %v1519 = vpop.f32.mrf.mxu0
  %1520 = vmatprep.mubr.bf16.mxu0 0
  %1521 = vmatmul.mubr.bf16.gmra.mxu0 %v539
  %v1522 = vpop.f32.mrf.mxu0
  %v1523 = vadd.f32 %v1426, %v1522
  %v1524 = vpop.f32.mrf.mxu0
  %v1525 = vpop.f32.mrf.mxu0
  %v1526 = vadd.f32 %v1429, %v1525
  %v1527 = vpop.f32.mrf.mxu0
  %1528 = vdwg.mxu0
  %v1529 = vpack.c.bf16 %v1470, %v1467
  %v1530 = vpack.c.bf16 %v1478, %v1475
  %v1531 = vpack.c.bf16 %v1486, %v1483
  %v1532 = vpack.c.bf16 %v1494, %v1491
  %v1533 = vpack.c.bf16 %v1502, %v1499
  %v1534 = vpack.c.bf16 %v1510, %v1507
  %v1535 = vpack.c.bf16 %v1518, %v1515
  %v1536 = vpack.c.bf16 %v1526, %v1523
  %v1545 = vunpack.c.l.b16 %v1529
  %v1546 = vunpack.c.h.b16 %v1529
  %v1547 = vunpack.c.l.b16 %v1530
  %v1548 = vunpack.c.h.b16 %v1530
  %v1549 = vunpack.c.l.b16 %v1531
  %v1550 = vunpack.c.h.b16 %v1531
  %v1551 = vunpack.c.l.b16 %v1532
  %v1552 = vunpack.c.h.b16 %v1532
  %v1553 = vunpack.c.l.b16 %v1533
  %v1554 = vunpack.c.h.b16 %v1533
  %v1555 = vunpack.c.l.b16 %v1534
  %v1556 = vunpack.c.h.b16 %v1534
  %v1557 = vunpack.c.l.b16 %v1535
  %v1558 = vunpack.c.h.b16 %v1535
  %v1559 = vunpack.c.l.b16 %v1536
  %v1560 = vunpack.c.h.b16 %v1536
  %v1561 = vpack.c.b16 %v1545, %v1545
  %v1562 = vpack.c.b16 %v1546, %v1546
  %v1563 = vpack.c.b16 %v1547, %v1547
  %v1564 = vpack.c.b16 %v1548, %v1548
  %v1565 = vpack.c.b16 %v1549, %v1549
  %v1566 = vpack.c.b16 %v1550, %v1550
  %v1567 = vpack.c.b16 %v1551, %v1551
  %v1568 = vpack.c.b16 %v1552, %v1552
  %v1569 = vpack.c.b16 %v1553, %v1553
  %v1570 = vpack.c.b16 %v1554, %v1554
  %v1571 = vpack.c.b16 %v1555, %v1555
  %v1572 = vpack.c.b16 %v1556, %v1556
  %v1573 = vpack.c.b16 %v1557, %v1557
  %v1574 = vpack.c.b16 %v1558, %v1558
  %v1575 = vpack.c.b16 %v1559, %v1559
  %v1576 = vpack.c.b16 %v1560, %v1560
  %1593 = vst [vmem:[%s4] sm:$0xf] %v1561
  %1594 = vst [vmem:[%s4 + $0x4] sm:$0xf] %v1562
  %1595 = vst [vmem:[%s4 + $0x8] sm:$0xf] %v1563
  %1596 = vst [vmem:[%s4 + $0xc] sm:$0xf] %v1564
  %1597 = vst [vmem:[%s4 + $0x10] sm:$0xf] %v1565
  %1598 = vst [vmem:[%s4 + $0x14] sm:$0xf] %v1566
  %1599 = vst [vmem:[%s4 + $0x18] sm:$0xf] %v1567
  %1600 = vst [vmem:[%s4 + $0x1c] sm:$0xf] %v1568
  %1601 = vst [vmem:[%s4 + $0x20] sm:$0xf] %v1569
  %1602 = vst [vmem:[%s4 + $0x24] sm:$0xf] %v1570
  %1603 = vst [vmem:[%s4 + $0x28] sm:$0xf] %v1571
  %1604 = vst [vmem:[%s4 + $0x2c] sm:$0xf] %v1572
  %1605 = vst [vmem:[%s4 + $0x30] sm:$0xf] %v1573
  %1606 = vst [vmem:[%s4 + $0x34] sm:$0xf] %v1574
  %1607 = vst [vmem:[%s4 + $0x38] sm:$0xf] %v1575
  %1608 = vst [vmem:[%s4 + $0x3c] sm:$0xf] %v1576
  %v1609 = vadd.f32 %v1467, %v1470
  %v1610 = vadd.f32 %v1609, %v1475
  %v1611 = vadd.f32 %v1610, %v1478
  %v1612 = vadd.f32 %v1611, %v1483
  %v1613 = vadd.f32 %v1612, %v1486
  %v1614 = vadd.f32 %v1613, %v1491
  %v1615 = vadd.f32 %v1614, %v1494
  %v1616 = vadd.f32 %v1615, %v1499
  %v1617 = vadd.f32 %v1616, %v1502
  %v1618 = vadd.f32 %v1617, %v1507
  %v1619 = vadd.f32 %v1618, %v1510
  %v1620 = vadd.f32 %v1619, %v1515
  %v1621 = vadd.f32 %v1620, %v1518
  %v1622 = vadd.f32 %v1621, %v1523
  %v1623 = vadd.f32 %v1622, %v1526
  %v1624 = vrot.slane %v1623, 4
  %v1625 = vadd.f32 %v1623, %v1624
  %v1626 = vrot.slane %v1625, 2
  %v1627 = vadd.f32 %v1625, %v1626
  %v1628 = vrot.slane %v1627, 1
  %v1629 = vadd.f32 %v1627, %v1628
  %v1630 = vmul.f32 %v1467, %v1467
  %v1631 = vmul.f32 %v1470, %v1470
  %v1632 = vmul.f32 %v1475, %v1475
  %v1633 = vmul.f32 %v1478, %v1478
  %v1634 = vmul.f32 %v1483, %v1483
  %v1635 = vmul.f32 %v1486, %v1486
  %v1636 = vmul.f32 %v1491, %v1491
  %v1637 = vmul.f32 %v1494, %v1494
  %v1638 = vmul.f32 %v1499, %v1499
  %v1639 = vmul.f32 %v1502, %v1502
  %v1640 = vmul.f32 %v1507, %v1507
  %v1641 = vmul.f32 %v1510, %v1510
  %v1642 = vmul.f32 %v1515, %v1515
  %v1643 = vmul.f32 %v1518, %v1518
  %v1644 = vmul.f32 %v1523, %v1523
  %v1645 = vmul.f32 %v1526, %v1526
  %v1646 = vadd.f32 %v1630, %v1631
  %v1647 = vadd.f32 %v1646, %v1632
  %v1648 = vadd.f32 %v1647, %v1633
  %v1649 = vadd.f32 %v1648, %v1634
  %v1650 = vadd.f32 %v1649, %v1635
  %v1651 = vadd.f32 %v1650, %v1636
  %v1652 = vadd.f32 %v1651, %v1637
  %v1653 = vadd.f32 %v1652, %v1638
  %v1654 = vadd.f32 %v1653, %v1639
  %v1655 = vadd.f32 %v1654, %v1640
  %v1656 = vadd.f32 %v1655, %v1641
  %v1657 = vadd.f32 %v1656, %v1642
  %v1658 = vadd.f32 %v1657, %v1643
  %v1659 = vadd.f32 %v1658, %v1644
  %v1660 = vadd.f32 %v1659, %v1645
  %v1661 = vrot.slane %v1660, 4
  %v1662 = vadd.f32 %v1660, %v1661
  %v1663 = vrot.slane %v1662, 2
  %v1664 = vadd.f32 %v1662, %v1663
  %v1665 = vrot.slane %v1664, 1
  %v1666 = vadd.f32 %v1664, %v1665
  %vm1667 = vcmask 1040384
  %v1668 = vsel %vm1667, %v1629, %v1666
  %vm1669 = vcmask 1041408
  %v1670 = vsel %vm1669, %v1668, 0.0
  %1671 = vst [vmem:[%s5] sm:$0xff] %v1670
  // Predicated region
  $region18: #{bottleneck_forward.6} parent=0 // pred_check
    _
  $region19: #{bottleneck_forward.6} parent=0 // pred_check_branch
    %1673 = sbr.rel (0) target = $region21
  $region20: #{bottleneck_forward.6} parent=0 // pred_region
    _
  $region21: #{bottleneck_forward.6} parent=0 // pred_fallthru
    _
  // Predicated region
  $region22: #{bottleneck_forward.6} parent=0 // pred_check
    _
  $region23: #{bottleneck_forward.6} parent=0 // pred_check_branch
    %1675 = sbr.rel (0) target = $region25
  $region24: #{bottleneck_forward.6} parent=0 // pred_region
    _
  $region25: #{bottleneck_forward.6} parent=0 // pred_fallthru
    _
  // Predicated region
  $region26: #{bottleneck_forward.6} parent=0 // pred_check
    _
  $region27: #{bottleneck_forward.6} parent=0 // pred_check_branch
    %1677 = sbr.rel (0) target = $region29
  $region28: #{bottleneck_forward.6} parent=0 // pred_region
    _
  $region29: #{bottleneck_forward.6} parent=0 // pred_fallthru
    _
  // Predicated region
  $region30: #{bottleneck_forward.6} parent=0 // pred_check
    _
  $region31: #{bottleneck_forward.6} parent=0 // pred_check_branch
    %1679 = sbr.rel (0) target = $region33
  $region32: #{bottleneck_forward.6} parent=0 // pred_region
    _
  $region33: #{bottleneck_forward.6} parent=0 // pred_fallthru
    _

</llo_original>
